<compile_context>
chip_gen: v7x
topology: tpu7x:2x2x1
jax: 0.10.0
libtpu: 0.0.40
codegen_flags: <defaults>
</compile_context>

<pallas_src>
import functools

import jax
import jax.numpy as jnp
from jax.experimental import pallas as pl
from jax.experimental.pallas import tpu as pltpu


# --------------------------------------------------------------------------
# generation-aware budgets
# --------------------------------------------------------------------------
@functools.lru_cache(maxsize=None)
def _tpu_budget():
    """(vmem_limit_bytes, row_tile) sized per TPU generation."""
    vmem = 64 * 1024 * 1024
    try:
        info = pltpu.get_tpu_info()
        vmem = int(getattr(info, "vmem_capacity_bytes", vmem))
    except Exception:
        pass
    if vmem >= 96 * 1024 * 1024:          # v5e / v6e: 128 MiB VMEM
        return 96 * 1024 * 1024, 32
    return 44 * 1024 * 1024, 16           # v7x: 64 MiB per core


# --------------------------------------------------------------------------
# small helpers
# --------------------------------------------------------------------------
def _space_to_depth(xp, s):
    """(N,Hp,Wp,C) -> (N,ceil(Hp/s),ceil(Wp/s),s*s*C); channel order (p,q,c)."""
    n, hp, wp, c = xp.shape
    hq = -(-hp // s) * s
    wq = -(-wp // s) * s
    if (hq, wq) != (hp, wp):
        xp = jnp.pad(xp, ((0, 0), (0, hq - hp), (0, wq - wp), (0, 0)))
    x = xp.reshape(n, hq // s, s, wq // s, s, c)
    x = jnp.transpose(x, (0, 1, 3, 2, 4, 5))
    return x.reshape(n, hq // s, wq // s, s * s * c)


def _repack_strided_weight(w, s, keff):
    """(9,Cin,Cout) 3x3 taps -> (keff*keff, s*s*Cin, Cout) taps acting on the
    space-to-depth input: tap (a,b) holds the original (dh,dw) tap with
    dh//s==a, dw//s==b at parity-channel slot (dh%s)*s + (dw%s); unused slots
    stay zero."""
    _, cin, cout = w.shape
    we = jnp.zeros((keff * keff, s * s * cin, cout), w.dtype)
    for dh in range(3):
        for dw in range(3):
            a, p = divmod(dh, s)
            b, q = divmod(dw, s)
            par = p * s + q
            we = we.at[a * keff + b, par * cin:(par + 1) * cin, :].set(
                w[3 * dh + dw])
    return we


def _pad_axis(x, axis, target):
    pad = target - x.shape[axis]
    if pad <= 0:
        return x
    cfg = [(0, 0)] * x.ndim
    cfg[axis] = (0, pad)
    return jnp.pad(x, cfg)


# --------------------------------------------------------------------------
# Pallas kernels
# --------------------------------------------------------------------------
def _conv_bn_relu_kernel(*refs, keff):
    """Fused KxK 'valid' conv (stride 1) + folded BN + ReLU on one row tile,
    expressed as im2col + one MXU matmul.

    refs = (x_main, halo_0..halo_{keff-2}, w, scale, bias, out, win, col)
      x_main : (1, tH, We, Ce)            rows [i*tH, (i+1)*tH) of the input
      halo_r : (1, 1, We, Ce)             row (i+1)*tH + r
      w      : (keff*keff*Ce, Cout)       flattened taps, row-major (dh, dw, c)
      scale  : (1, Cout)                  gamma / sqrt(var + eps)
      bias   : (1, Cout)                  beta - mean * scale
      out    : (1, tH, Wo, Cout)
      win    : VMEM (tH+keff-1, We, Ce)   assembled window (main + halo rows)
      col    : VMEM (tH*Wo, keff*keff*Ce) im2col tile (single fat-K matmul)
    """
    nhalo = keff - 1
    x_ref = refs[0]
    halo_refs = refs[1:1 + nhalo]
    w_ref, s_ref, b_ref, o_ref, win_ref, col_ref = refs[1 + nhalo:]

    th = x_ref.shape[1]
    ce = x_ref.shape[-1]
    wo, cout = o_ref.shape[2], o_ref.shape[3]

    # Assemble the halo'd window in VMEM (contiguous, unit-stride copies only).
    win_ref[0:th] = x_ref[0]
    for r in range(nhalo):
        win_ref[th + r] = halo_refs[r][0, 0]

    # im2col: every tap contributes a Ce-wide column block.
    for dh in range(keff):
        for dw in range(keff):
            tap = dh * keff + dw
            col_ref[:, tap * ce:(tap + 1) * ce] = (
                win_ref[dh:dh + th, dw:dw + wo, :].reshape(th * wo, ce))

    # Single matmul with K = keff*keff*Ce; f32 accumulation on the MXU.
    y = jnp.dot(col_ref[...], w_ref[...], preferred_element_type=jnp.float32)
    y = jnp.maximum(y * s_ref[...] + b_ref[...], 0.0)
    o_ref[...] = y.reshape(1, th, wo, cout).astype(o_ref.dtype)


def _deconv_bn_relu_kernel(x_ref, w_ref, s_ref, b_ref, o_ref):
    """Per-pixel matmul upsample head + folded BN + ReLU.

    x_ref : (1, tH, W, Cin)
    w_ref : (s, Cin, s*Cout)      [ph, cin, pw*Cout + co]
    s_ref : (1, s*Cout)
    b_ref : (1, s*Cout)
    o_ref : (1, tH, s, W, s*Cout) phase-separated layout (free reshape outside)
    """
    _, th, wdim, cin = x_ref.shape
    s_up = w_ref.shape[0]
    k = w_ref.shape[-1]
    xm = x_ref[0].reshape(th * wdim, cin)
    for ph in range(s_up):
        y = jnp.dot(xm, w_ref[ph], preferred_element_type=jnp.float32)
        y = jnp.maximum(y * s_ref[...] + b_ref[...], 0.0)
        o_ref[0, :, ph, :, :] = y.reshape(th, wdim, k).astype(o_ref.dtype)


# --------------------------------------------------------------------------
# pallas_call wrappers
# --------------------------------------------------------------------------
def conv3x3_bn_relu(x, w, scale, bias, stride, *, row_tile=None):
    """ZeroPad2d(1) + Conv2d(3x3, stride, bias=False) + BN + ReLU.  NHWC in/out."""
    n, h, wdim, cin = x.shape
    cout = w.shape[-1]
    s = int(stride)
    ho = (h - 1) // s + 1
    wo = (wdim - 1) // s + 1

    vmem_limit, default_tile = _tpu_budget()
    if row_tile is None:
        row_tile = default_tile
    th = max(1, min(row_tile, ho))
    nh = pl.cdiv(ho, th)
    ho_pad = nh * th                       # divisor-robust: pad H, slice output

    xp = jnp.pad(x, ((0, 0), (1, 1), (1, 1), (0, 0)))      # ZeroPad2d(1)
    if s == 1:
        keff = 3
        xe, we = xp, w
    else:
        # space-to-depth: stride-s 3x3 conv -> stride-1 keff x keff conv with
        # s*s*Cin input channels (contiguous taps, fatter MXU contraction).
        keff = 2 // s + 1
        xe = _space_to_depth(xp, s)
        we = _repack_strided_weight(w, s, keff)

    ce = xe.shape[-1]
    ktot = keff * keff
    # Extra zero rows/cols so every tile (incl. its halo) stays in bounds.
    xe = _pad_axis(xe, 1, ho_pad + keff - 1)
    xe = _pad_axis(xe, 2, wo + keff - 1)
    wE = xe.shape[2]
    w_flat = we.reshape(ktot * ce, cout)

    in_specs = [pl.BlockSpec((1, th, wE, ce), lambda b, i: (b, i, 0, 0))]
    for r in range(keff - 1):
        in_specs.append(
            pl.BlockSpec((1, 1, wE, ce),
                         lambda b, i, r=r, th=th: (b, (i + 1) * th + r, 0, 0)))
    in_specs += [
        pl.BlockSpec((ktot * ce, cout), lambda b, i: (0, 0)),
        pl.BlockSpec((1, cout), lambda b, i: (0, 0)),
        pl.BlockSpec((1, cout), lambda b, i: (0, 0)),
    ]

    kern = functools.partial(_conv_bn_relu_kernel, keff=keff)
    out = pl.pallas_call(
        kern,
        out_shape=jax.ShapeDtypeStruct((n, ho_pad, wo, cout), x.dtype),
        grid=(n, nh),
        in_specs=in_specs,
        out_specs=pl.BlockSpec((1, th, wo, cout), lambda b, i: (b, i, 0, 0)),
        scratch_shapes=[
            pltpu.VMEM((th + keff - 1, wE, ce), x.dtype),   # halo'd window
            pltpu.VMEM((th * wo, ktot * ce), x.dtype),      # im2col tile
        ],
        compiler_params=pltpu.CompilerParams(
            dimension_semantics=("parallel", "parallel"),
            vmem_limit_bytes=vmem_limit),
    )(xe, *([xe] * (keff - 1)), w_flat,
      scale.reshape(1, cout).astype(jnp.float32),
      bias.reshape(1, cout).astype(jnp.float32))
    if ho_pad != ho:
        out = out[:, :ho]
    return out


def deconv_bn_relu(x, w_ct, scale, bias, stride, *, row_tile=None):
    """ConvTranspose2d(Cin,Cout,k=s,stride=s,bias=False) + BN + ReLU (s >= 1).

    x    : (N,H,W,Cin) NHWC
    w_ct : (Cin, s, s, Cout) == PyTorch ConvTranspose2d weight (Cin,Cout,kh,kw)
           permuted to (Cin, kh, kw, Cout).
    """
    n, h, wdim, cin = x.shape
    s = int(stride)
    cout = w_ct.shape[-1]
    k = s * cout

    vmem_limit, default_tile = _tpu_budget()
    if row_tile is None:
        row_tile = default_tile
    th = max(1, min(row_tile, h))
    nh = pl.cdiv(h, th)
    h_pad = nh * th
    xq = _pad_axis(x, 1, h_pad)

    w_eff = jnp.transpose(w_ct, (1, 0, 2, 3)).reshape(s, cin, k)
    scale_k = jnp.tile(scale.astype(jnp.float32), s).reshape(1, k)
    bias_k = jnp.tile(bias.astype(jnp.float32), s).reshape(1, k)

    out = pl.pallas_call(
        _deconv_bn_relu_kernel,
        out_shape=jax.ShapeDtypeStruct((n, h_pad, s, wdim, k), x.dtype),
        grid=(n, nh),
        in_specs=[
            pl.BlockSpec((1, th, wdim, cin), lambda b, i: (b, i, 0, 0)),
            pl.BlockSpec((s, cin, k), lambda b, i: (0, 0, 0)),
            pl.BlockSpec((1, k), lambda b, i: (0, 0)),
            pl.BlockSpec((1, k), lambda b, i: (0, 0)),
        ],
        out_specs=pl.BlockSpec((1, th, s, wdim, k),
                               lambda b, i: (b, i, 0, 0, 0)),
        compiler_params=pltpu.CompilerParams(
            dimension_semantics=("parallel", "parallel"),
            vmem_limit_bytes=vmem_limit),
    )(xq, w_eff, scale_k, bias_k)
    # Pixel shuffle is a free contiguous reshape (no XLA transpose).
    y = out.reshape(n, h_pad * s, wdim * s, cout)
    if h_pad != h:
        y = y[:, :h * s]
    return y


# --------------------------------------------------------------------------
# Parameter construction (deterministic, synthetic; BN folded in eval mode)
# --------------------------------------------------------------------------
def _fold_bn(gamma, beta, mean, var, eps=1e-3):   # eps matches BatchNorm2d(0.001)
    scale = gamma / jnp.sqrt(var + eps)
    return scale, beta - mean * scale


def init_params(key, in_ch, layer_nums, layer_strides, layer_out_channels,
                upsample_strides, upsample_channels):
    params = {"down": [], "up": []}
    layer_in_channels = [in_ch, *layer_out_channels[:-1]]
    for idx in range(len(layer_nums)):
        convs = []
        cin = layer_in_channels[idx]
        cout = layer_out_channels[idx]
        for k in range(layer_nums[idx] + 1):   # head conv + LAYER_NUMS body convs
            key, kw, kg, kb = jax.random.split(key, 4)
            w = (0.1 * jax.random.normal(kw, (9, cin, cout), jnp.float32)
                 ).astype(jnp.bfloat16)
            gamma = 1.0 + 0.1 * jax.random.normal(kg, (cout,), jnp.float32)
            beta = 0.1 * jax.random.normal(kb, (cout,), jnp.float32)
            scale, bias = _fold_bn(gamma, beta, jnp.zeros((cout,)),
                                   jnp.ones((cout,)))
            convs.append({"w": w, "scale": scale, "bias": bias,
                          "stride": int(layer_strides[idx]) if k == 0 else 1})
            cin = cout
        params["down"].append(convs)
        if len(upsample_strides) > 0:
            us = upsample_strides[idx]
            ucout = upsample_channels[idx]
            key, kw, kg, kb = jax.random.split(key, 4)
            if us >= 1:
                us = int(us)
                w = (0.1 * jax.random.normal(kw, (cout, us, us, ucout),
                                             jnp.float32)).astype(jnp.bfloat16)
            else:
                # TODO(synk): UPSAMPLE_STRIDES < 1 branch (strided Conv2d
                # downsample head) is not used by this config; not implemented.
                raise NotImplementedError("upsample stride < 1 not implemented")
            gamma = 1.0 + 0.1 * jax.random.normal(kg, (ucout,), jnp.float32)
            beta = 0.1 * jax.random.normal(kb, (ucout,), jnp.float32)
            scale, bias = _fold_bn(gamma, beta, jnp.zeros((ucout,)),
                                   jnp.ones((ucout,)))
            params["up"].append({"w": w, "scale": scale, "bias": bias,
                                 "stride": us})
    if len(upsample_strides) > len(layer_nums):
        c_in = int(sum(upsample_channels))
        us = int(upsample_strides[-1])
        key, kw, kg, kb = jax.random.split(key, 4)
        w = (0.1 * jax.random.normal(kw, (c_in, us, us, c_in), jnp.float32)
             ).astype(jnp.bfloat16)
        gamma = 1.0 + 0.1 * jax.random.normal(kg, (c_in,), jnp.float32)
        beta = 0.1 * jax.random.normal(kb, (c_in,), jnp.float32)
        scale, bias = _fold_bn(gamma, beta, jnp.zeros((c_in,)), jnp.ones((c_in,)))
        params["extra_up"] = {"w": w, "scale": scale, "bias": bias, "stride": us}
    return params


# --------------------------------------------------------------------------
# Forward (mirrors BaseBEVBackbone.forward)
# --------------------------------------------------------------------------
def base_bev_backbone_forward(params, data_dict):
    spatial_features = data_dict["spatial_features"]          # NCHW like PyTorch
    x = jnp.transpose(spatial_features, (0, 2, 3, 1)).astype(jnp.bfloat16)
    h_in = spatial_features.shape[2]
    ups = []
    ret = dict(data_dict)
    for i, convs in enumerate(params["down"]):
        for layer in convs:
            x = conv3x3_bn_relu(x, layer["w"], layer["scale"],
                                layer["bias"], layer["stride"])
        stride = int(h_in // x.shape[1])
        ret["spatial_features_%dx" % stride] = (
            jnp.transpose(x, (0, 3, 1, 2)).astype(jnp.float32))
        if len(params["up"]) > 0:
            up = params["up"][i]
            ups.append(deconv_bn_relu(x, up["w"], up["scale"],
                                      up["bias"], up["stride"]))
        else:
            ups.append(x)
    if len(ups) > 1:
        x = jnp.concatenate(ups, axis=-1)                      # channel concat
    elif len(ups) == 1:
        x = ups[0]
    if "extra_up" in params:
        eu = params["extra_up"]
        x = deconv_bn_relu(x, eu["w"], eu["scale"], eu["bias"], eu["stride"])
    ret["dense_feat_2d"] = jnp.transpose(x, (0, 3, 1, 2)).astype(jnp.float32)
    return ret


# --------------------------------------------------------------------------
# Pure-JAX f32 reference (for numerical verification of the Pallas path)
# --------------------------------------------------------------------------
def _reference_forward(params, spatial_features):
    x = jnp.transpose(spatial_features, (0, 2, 3, 1)).astype(jnp.float32)
    ups = []

    def up_ref(x, up):
        s = int(up["stride"])
        wct = up["w"].astype(jnp.float32)           # (Cin, s, s, Cout)
        n, h, wdt, _ = x.shape
        cout = wct.shape[-1]
        y = jnp.einsum("nhwc,cpqk->nhpwqk", x, wct)
        y = jnp.maximum(y * up["scale"] + up["bias"], 0.0)
        return y.reshape(n, h * s, wdt * s, cout)

    for i, convs in enumerate(params["down"]):
        for layer in convs:
            cout = layer["w"].shape[-1]
            w = layer["w"].astype(jnp.float32).reshape(3, 3, -1, cout)
            st = int(layer["stride"])
            y = jax.lax.conv_general_dilated(
                x, w, (st, st), ((1, 1), (1, 1)),
                dimension_numbers=("NHWC", "HWIO", "NHWC"))
            x = jnp.maximum(y * layer["scale"] + layer["bias"], 0.0)
        if len(params["up"]) > 0:
            ups.append(up_ref(x, params["up"][i]))
        else:
            ups.append(x)
    x = jnp.concatenate(ups, axis=-1) if len(ups) > 1 else ups[0]
    if "extra_up" in params:
        x = up_ref(x, params["extra_up"])
    return jnp.transpose(x, (0, 3, 1, 2))


# --------------------------------------------------------------------------
if __name__ == "__main__":
    # Small synthetic config consistent with the module's __init__.
    N, C, H, W = 2, 4, 16, 16
    LAYER_NUMS = [1, 1]
    LAYER_STRIDES = [1, 2]
    LAYER_OUT_CHANNELS = [8, 16]
    UPSAMPLE_STRIDES = [1, 2]
    UPSAMPLE_CHANNELS = [8, 8]

    key = jax.random.PRNGKey(0)
    key, kx = jax.random.split(key)
    spatial_features = jax.random.normal(kx, (N, C, H, W), jnp.float32)

    params = init_params(key, C, LAYER_NUMS, LAYER_STRIDES, LAYER_OUT_CHANNELS,
                         UPSAMPLE_STRIDES, UPSAMPLE_CHANNELS)

    out = base_bev_backbone_forward(params, {"spatial_features": spatial_features})
    dense = jax.block_until_ready(out["dense_feat_2d"])

    assert dense.shape == (N, sum(UPSAMPLE_CHANNELS), H, W), dense.shape
    assert out["spatial_features_1x"].shape == (N, LAYER_OUT_CHANNELS[0], H, W)
    assert out["spatial_features_2x"].shape == (N, LAYER_OUT_CHANNELS[1],
                                                H // 2, W // 2)
    assert bool(jnp.all(jnp.isfinite(dense)))

    # Numerical check against a pure-JAX f32 reference (bf16 kernel tolerance).
    ref = _reference_forward(params, spatial_features)
    max_err = float(jnp.max(jnp.abs(ref - dense)))
    assert bool(jnp.allclose(ref, dense, rtol=0.08, atol=0.08)), max_err

    # Ragged-tile path check: ho=12 with an 8-row tile -> H padded to 16 in HBM
    # and the output sliced back (exercises the divisor-robust tiling).
    key, kr1, kr2 = jax.random.split(key, 3)
    xr = jax.random.normal(kr1, (1, 12, 16, 8), jnp.float32)
    wr = 0.1 * jax.random.normal(kr2, (9, 8, 8), jnp.float32)
    got = conv3x3_bn_relu(xr.astype(jnp.bfloat16), wr.astype(jnp.bfloat16),
                          jnp.ones((8,), jnp.float32),
                          jnp.zeros((8,), jnp.float32), 1, row_tile=8)
    got = jax.block_until_ready(got)
    ref_r = jnp.maximum(jax.lax.conv_general_dilated(
        xr, wr.reshape(3, 3, 8, 8), (1, 1), ((1, 1), (1, 1)),
        dimension_numbers=("NHWC", "HWIO", "NHWC")), 0.0)
    assert got.shape == (1, 12, 16, 8), got.shape
    err_r = float(jnp.max(jnp.abs(ref_r - got.astype(jnp.float32))))
    assert bool(jnp.allclose(ref_r, got.astype(jnp.float32),
                             rtol=0.05, atol=0.05)), err_r

    print("KERNEL_OK")
</pallas_src>

<mosaic_0001>
module attributes {stable_mosaic.version = 11 : i64} {
  func.func @_conv_bn_relu_kernel(%arg0: i32, %arg1: i32, %arg2: memref<1x16x18x4xbf16, #tpu.memory_space<vmem>>, %arg3: memref<1x1x18x4xbf16, #tpu.memory_space<vmem>>, %arg4: memref<1x1x18x4xbf16, #tpu.memory_space<vmem>>, %arg5: memref<36x8xbf16, #tpu.memory_space<vmem>>, %arg6: memref<1x8xf32, #tpu.memory_space<vmem>>, %arg7: memref<1x8xf32, #tpu.memory_space<vmem>>, %arg8: memref<1x16x16x8xbf16, #tpu.memory_space<vmem>>, %arg9: memref<18x18x4xbf16, #tpu.memory_space<vmem>>, %arg10: memref<256x36xbf16, #tpu.memory_space<vmem>>) attributes {dimension_semantics = [#tpu.dimension_semantics<parallel>, #tpu.dimension_semantics<parallel>], iteration_bounds = array<i64: 2, 1>, scalar_prefetch = 0 : i64, scratch_operands = 2 : i64, tpu.core_type = #tpu.core_type<tc>, window_params = [{transform_indices = @transform_0, window_bounds = array<i64: 1, 16, 18, 4>}, {transform_indices = @transform_1, window_bounds = array<i64: 1, 1, 18, 4>}, {transform_indices = @transform_2, window_bounds = array<i64: 1, 1, 18, 4>}, {pipeline_mode = #tpu.pipeline_mode<synchronous>, transform_indices = @transform_3, window_bounds = array<i64: 36, 8>}, {pipeline_mode = #tpu.pipeline_mode<synchronous>, transform_indices = @transform_4, window_bounds = array<i64: 1, 8>}, {pipeline_mode = #tpu.pipeline_mode<synchronous>, transform_indices = @transform_5, window_bounds = array<i64: 1, 8>}, {transform_indices = @transform_6, window_bounds = array<i64: 1, 16, 16, 8>}]} {
    %c0 = arith.constant 0 : index
    %c0_0 = arith.constant 0 : index
    %c0_1 = arith.constant 0 : index
    %c0_2 = arith.constant 0 : index
    %0 = vector.load %arg2[%c0, %c0_0, %c0_1, %c0_2] : memref<1x16x18x4xbf16, #tpu.memory_space<vmem>>, vector<1x16x18x4xbf16>
    %1 = vector.shape_cast %0 : vector<1x16x18x4xbf16> to vector<16x18x4xbf16>
    %c0_3 = arith.constant 0 : index
    %c0_4 = arith.constant 0 : index
    %c0_5 = arith.constant 0 : index
    %2 = vector.load %arg9[%c0_3, %c0_4, %c0_5] : memref<18x18x4xbf16, #tpu.memory_space<vmem>>, vector<16x18x4xbf16>
    tpu.vector_store %arg9[%c0_3, %c0_4, %c0_5], %1 {strides = array<i32>} : memref<18x18x4xbf16, #tpu.memory_space<vmem>>, vector<16x18x4xbf16>,
    %c0_6 = arith.constant 0 : index
    %c0_7 = arith.constant 0 : index
    %c0_8 = arith.constant 0 : index
    %c0_9 = arith.constant 0 : index
    %3 = vector.load %arg3[%c0_6, %c0_7, %c0_8, %c0_9] : memref<1x1x18x4xbf16, #tpu.memory_space<vmem>>, vector<1x1x18x4xbf16>
    %4 = vector.shape_cast %3 : vector<1x1x18x4xbf16> to vector<18x4xbf16>
    %c16 = arith.constant 16 : index
    %c0_10 = arith.constant 0 : index
    %c0_11 = arith.constant 0 : index
    %5 = vector.load %arg9[%c16, %c0_10, %c0_11] : memref<18x18x4xbf16, #tpu.memory_space<vmem>>, vector<1x18x4xbf16>
    %6 = vector.shape_cast %5 : vector<1x18x4xbf16> to vector<18x4xbf16>
    %7 = vector.shape_cast %4 : vector<18x4xbf16> to vector<1x18x4xbf16>
    tpu.vector_store %arg9[%c16, %c0_10, %c0_11], %7 {strides = array<i32>} : memref<18x18x4xbf16, #tpu.memory_space<vmem>>, vector<1x18x4xbf16>,
    %c0_12 = arith.constant 0 : index
    %c0_13 = arith.constant 0 : index
    %c0_14 = arith.constant 0 : index
    %c0_15 = arith.constant 0 : index
    %8 = vector.load %arg4[%c0_12, %c0_13, %c0_14, %c0_15] : memref<1x1x18x4xbf16, #tpu.memory_space<vmem>>, vector<1x1x18x4xbf16>
    %9 = vector.shape_cast %8 : vector<1x1x18x4xbf16> to vector<18x4xbf16>
    %c17 = arith.constant 17 : index
    %c0_16 = arith.constant 0 : index
    %c0_17 = arith.constant 0 : index
    %10 = vector.load %arg9[%c17, %c0_16, %c0_17] : memref<18x18x4xbf16, #tpu.memory_space<vmem>>, vector<1x18x4xbf16>
    %11 = vector.shape_cast %10 : vector<1x18x4xbf16> to vector<18x4xbf16>
    %12 = vector.shape_cast %9 : vector<18x4xbf16> to vector<1x18x4xbf16>
    tpu.vector_store %arg9[%c17, %c0_16, %c0_17], %12 {strides = array<i32>} : memref<18x18x4xbf16, #tpu.memory_space<vmem>>, vector<1x18x4xbf16>,
    %c0_18 = arith.constant 0 : index
    %c0_19 = arith.constant 0 : index
    %c0_20 = arith.constant 0 : index
    %13 = vector.load %arg9[%c0_18, %c0_19, %c0_20] : memref<18x18x4xbf16, #tpu.memory_space<vmem>>, vector<16x16x4xbf16>
    %14 = vector.shape_cast %13 : vector<16x16x4xbf16> to vector<256x4xbf16>
    %c0_21 = arith.constant 0 : index
    %c0_22 = arith.constant 0 : index
    %15 = vector.load %arg10[%c0_21, %c0_22] : memref<256x36xbf16, #tpu.memory_space<vmem>>, vector<256x4xbf16>
    tpu.vector_store %arg10[%c0_21, %c0_22], %14 {strides = array<i32>} : memref<256x36xbf16, #tpu.memory_space<vmem>>, vector<256x4xbf16>,
    %c0_23 = arith.constant 0 : index
    %c1 = arith.constant 1 : index
    %c0_24 = arith.constant 0 : index
    %16 = vector.load %arg9[%c0_23, %c1, %c0_24] : memref<18x18x4xbf16, #tpu.memory_space<vmem>>, vector<16x16x4xbf16>
    %17 = vector.shape_cast %16 : vector<16x16x4xbf16> to vector<256x4xbf16>
    %c0_25 = arith.constant 0 : index
    %c4 = arith.constant 4 : index
    %18 = vector.load %arg10[%c0_25, %c4] : memref<256x36xbf16, #tpu.memory_space<vmem>>, vector<256x4xbf16>
    tpu.vector_store %arg10[%c0_25, %c4], %17 {strides = array<i32>} : memref<256x36xbf16, #tpu.memory_space<vmem>>, vector<256x4xbf16>,
    %c0_26 = arith.constant 0 : index
    %c2 = arith.constant 2 : index
    %c0_27 = arith.constant 0 : index
    %19 = vector.load %arg9[%c0_26, %c2, %c0_27] : memref<18x18x4xbf16, #tpu.memory_space<vmem>>, vector<16x16x4xbf16>
    %20 = vector.shape_cast %19 : vector<16x16x4xbf16> to vector<256x4xbf16>
    %c0_28 = arith.constant 0 : index
    %c8 = arith.constant 8 : index
    %21 = vector.load %arg10[%c0_28, %c8] : memref<256x36xbf16, #tpu.memory_space<vmem>>, vector<256x4xbf16>
    tpu.vector_store %arg10[%c0_28, %c8], %20 {strides = array<i32>} : memref<256x36xbf16, #tpu.memory_space<vmem>>, vector<256x4xbf16>,
    %c1_29 = arith.constant 1 : index
    %c0_30 = arith.constant 0 : index
    %c0_31 = arith.constant 0 : index
    %22 = vector.load %arg9[%c1_29, %c0_30, %c0_31] : memref<18x18x4xbf16, #tpu.memory_space<vmem>>, vector<16x16x4xbf16>
    %23 = vector.shape_cast %22 : vector<16x16x4xbf16> to vector<256x4xbf16>
    %c0_32 = arith.constant 0 : index
    %c12 = arith.constant 12 : index
    %24 = vector.load %arg10[%c0_32, %c12] : memref<256x36xbf16, #tpu.memory_space<vmem>>, vector<256x4xbf16>
    tpu.vector_store %arg10[%c0_32, %c12], %23 {strides = array<i32>} : memref<256x36xbf16, #tpu.memory_space<vmem>>, vector<256x4xbf16>,
    %c1_33 = arith.constant 1 : index
    %c1_34 = arith.constant 1 : index
    %c0_35 = arith.constant 0 : index
    %25 = vector.load %arg9[%c1_33, %c1_34, %c0_35] : memref<18x18x4xbf16, #tpu.memory_space<vmem>>, vector<16x16x4xbf16>
    %26 = vector.shape_cast %25 : vector<16x16x4xbf16> to vector<256x4xbf16>
    %c0_36 = arith.constant 0 : index
    %c16_37 = arith.constant 16 : index
    %27 = vector.load %arg10[%c0_36, %c16_37] : memref<256x36xbf16, #tpu.memory_space<vmem>>, vector<256x4xbf16>
    tpu.vector_store %arg10[%c0_36, %c16_37], %26 {strides = array<i32>} : memref<256x36xbf16, #tpu.memory_space<vmem>>, vector<256x4xbf16>,
    %c1_38 = arith.constant 1 : index
    %c2_39 = arith.constant 2 : index
    %c0_40 = arith.constant 0 : index
    %28 = vector.load %arg9[%c1_38, %c2_39, %c0_40] : memref<18x18x4xbf16, #tpu.memory_space<vmem>>, vector<16x16x4xbf16>
    %29 = vector.shape_cast %28 : vector<16x16x4xbf16> to vector<256x4xbf16>
    %c0_41 = arith.constant 0 : index
    %c20 = arith.constant 20 : index
    %30 = vector.load %arg10[%c0_41, %c20] : memref<256x36xbf16, #tpu.memory_space<vmem>>, vector<256x4xbf16>
    tpu.vector_store %arg10[%c0_41, %c20], %29 {strides = array<i32>} : memref<256x36xbf16, #tpu.memory_space<vmem>>, vector<256x4xbf16>,
    %c2_42 = arith.constant 2 : index
    %c0_43 = arith.constant 0 : index
    %c0_44 = arith.constant 0 : index
    %31 = vector.load %arg9[%c2_42, %c0_43, %c0_44] : memref<18x18x4xbf16, #tpu.memory_space<vmem>>, vector<16x16x4xbf16>
    %32 = vector.shape_cast %31 : vector<16x16x4xbf16> to vector<256x4xbf16>
    %c0_45 = arith.constant 0 : index
    %c24 = arith.constant 24 : index
    %33 = vector.load %arg10[%c0_45, %c24] : memref<256x36xbf16, #tpu.memory_space<vmem>>, vector<256x4xbf16>
    tpu.vector_store %arg10[%c0_45, %c24], %32 {strides = array<i32>} : memref<256x36xbf16, #tpu.memory_space<vmem>>, vector<256x4xbf16>,
    %c2_46 = arith.constant 2 : index
    %c1_47 = arith.constant 1 : index
    %c0_48 = arith.constant 0 : index
    %34 = vector.load %arg9[%c2_46, %c1_47, %c0_48] : memref<18x18x4xbf16, #tpu.memory_space<vmem>>, vector<16x16x4xbf16>
    %35 = vector.shape_cast %34 : vector<16x16x4xbf16> to vector<256x4xbf16>
    %c0_49 = arith.constant 0 : index
    %c28 = arith.constant 28 : index
    %36 = vector.load %arg10[%c0_49, %c28] : memref<256x36xbf16, #tpu.memory_space<vmem>>, vector<256x4xbf16>
    tpu.vector_store %arg10[%c0_49, %c28], %35 {strides = array<i32>} : memref<256x36xbf16, #tpu.memory_space<vmem>>, vector<256x4xbf16>,
    %c2_50 = arith.constant 2 : index
    %c2_51 = arith.constant 2 : index
    %c0_52 = arith.constant 0 : index
    %37 = vector.load %arg9[%c2_50, %c2_51, %c0_52] : memref<18x18x4xbf16, #tpu.memory_space<vmem>>, vector<16x16x4xbf16>
    %38 = vector.shape_cast %37 : vector<16x16x4xbf16> to vector<256x4xbf16>
    %c0_53 = arith.constant 0 : index
    %c32 = arith.constant 32 : index
    %39 = vector.load %arg10[%c0_53, %c32] : memref<256x36xbf16, #tpu.memory_space<vmem>>, vector<256x4xbf16>
    tpu.vector_store %arg10[%c0_53, %c32], %38 {strides = array<i32>} : memref<256x36xbf16, #tpu.memory_space<vmem>>, vector<256x4xbf16>,
    %c0_54 = arith.constant 0 : index
    %c0_55 = arith.constant 0 : index
    %40 = vector.load %arg10[%c0_54, %c0_55] : memref<256x36xbf16, #tpu.memory_space<vmem>>, vector<256x36xbf16>
    %c0_56 = arith.constant 0 : index
    %c0_57 = arith.constant 0 : index
    %41 = vector.load %arg5[%c0_56, %c0_57] : memref<36x8xbf16, #tpu.memory_space<vmem>>, vector<36x8xbf16>
    %cst = arith.constant dense<0.000000e+00> : vector<256x8xf32>
    %42 = tpu.matmul %40, %41, %cst {dimension_numbers = #tpu.dot_dimension_numbers<[1], [0], [0], [1], [0, 0, 1, 1], [], []>} : vector<256x36xbf16>, vector<36x8xbf16>, vector<256x8xf32> -> vector<256x8xf32>
    %c0_58 = arith.constant 0 : index
    %c0_59 = arith.constant 0 : index
    %43 = vector.load %arg6[%c0_58, %c0_59] : memref<1x8xf32, #tpu.memory_space<vmem>>, vector<1x8xf32>
    %44 = vector.broadcast %43 : vector<1x8xf32> to vector<256x8xf32>
    %45 = arith.mulf %42, %44 : vector<256x8xf32>
    %c0_60 = arith.constant 0 : index
    %c0_61 = arith.constant 0 : index
    %46 = vector.load %arg7[%c0_60, %c0_61] : memref<1x8xf32, #tpu.memory_space<vmem>>, vector<1x8xf32>
    %47 = vector.broadcast %46 : vector<1x8xf32> to vector<256x8xf32>
    %48 = arith.addf %45, %47 : vector<256x8xf32>
    %cst_62 = arith.constant 0.000000e+00 : f32
    %49 = vector.broadcast %cst_62 : f32 to vector<256x8xf32>
    %50 = arith.maximumf %48, %49 : vector<256x8xf32>
    %51 = vector.shape_cast %50 : vector<256x8xf32> to vector<1x16x16x8xf32>
    %52 = arith.truncf %51 : vector<1x16x16x8xf32> to vector<1x16x16x8xbf16>
    %c0_63 = arith.constant 0 : index
    %c0_64 = arith.constant 0 : index
    %c0_65 = arith.constant 0 : index
    %c0_66 = arith.constant 0 : index
    %53 = vector.load %arg8[%c0_63, %c0_64, %c0_65, %c0_66] : memref<1x16x16x8xbf16, #tpu.memory_space<vmem>>, vector<1x16x16x8xbf16>
    tpu.vector_store %arg8[%c0_63, %c0_64, %c0_65, %c0_66], %52 {strides = array<i32>} : memref<1x16x16x8xbf16, #tpu.memory_space<vmem>>, vector<1x16x16x8xbf16>,
    return
  }
  func.func @transform_0(%arg0: i32, %arg1: i32) -> (i32, i32, i32, i32) {
    %c0_i32 = arith.constant 0 : i32
    %c0_i32_0 = arith.constant 0 : i32
    %c0_i32_1 = arith.constant 0 : i32
    return %arg0, %arg1, %c0_i32, %c0_i32_0 : i32, i32, i32, i32
  }
  func.func @transform_1(%arg0: i32, %arg1: i32) -> (i32, i32, i32, i32) {
    %c1_i32 = arith.constant 1 : i32
    %0 = arith.addi %arg1, %c1_i32 : i32
    %c16_i32 = arith.constant 16 : i32
    %1 = arith.muli %0, %c16_i32 : i32
    %c0_i32 = arith.constant 0 : i32
    %2 = arith.addi %1, %c0_i32 : i32
    %c0_i32_0 = arith.constant 0 : i32
    %c0_i32_1 = arith.constant 0 : i32
    %c0_i32_2 = arith.constant 0 : i32
    return %arg0, %2, %c0_i32_0, %c0_i32_1 : i32, i32, i32, i32
  }
  func.func @transform_2(%arg0: i32, %arg1: i32) -> (i32, i32, i32, i32) {
    %c1_i32 = arith.constant 1 : i32
    %0 = arith.addi %arg1, %c1_i32 : i32
    %c16_i32 = arith.constant 16 : i32
    %1 = arith.muli %0, %c16_i32 : i32
    %c1_i32_0 = arith.constant 1 : i32
    %2 = arith.addi %1, %c1_i32_0 : i32
    %c0_i32 = arith.constant 0 : i32
    %c0_i32_1 = arith.constant 0 : i32
    %c0_i32_2 = arith.constant 0 : i32
    return %arg0, %2, %c0_i32, %c0_i32_1 : i32, i32, i32, i32
  }
  func.func @transform_3(%arg0: i32, %arg1: i32) -> (i32, i32) {
    %c0_i32 = arith.constant 0 : i32
    %c0_i32_0 = arith.constant 0 : i32
    %c0_i32_1 = arith.constant 0 : i32
    return %c0_i32, %c0_i32_0 : i32, i32
  }
  func.func @transform_4(%arg0: i32, %arg1: i32) -> (i32, i32) {
    %c0_i32 = arith.constant 0 : i32
    %c0_i32_0 = arith.constant 0 : i32
    %c0_i32_1 = arith.constant 0 : i32
    return %c0_i32, %c0_i32_0 : i32, i32
  }
  func.func @transform_5(%arg0: i32, %arg1: i32) -> (i32, i32) {
    %c0_i32 = arith.constant 0 : i32
    %c0_i32_0 = arith.constant 0 : i32
    %c0_i32_1 = arith.constant 0 : i32
    return %c0_i32, %c0_i32_0 : i32, i32
  }
  func.func @transform_6(%arg0: i32, %arg1: i32) -> (i32, i32, i32, i32) {
    %c0_i32 = arith.constant 0 : i32
    %c0_i32_0 = arith.constant 0 : i32
    %c0_i32_1 = arith.constant 0 : i32
    return %arg0, %arg1, %c0_i32, %c0_i32_0 : i32, i32, i32, i32
  }
}

</mosaic_0001>

<llo_original>
// kernel: tpu_custom_call.1
$region0: #{tpu_custom_call.1}
  #allocation0 [shape = 'u32[]', space=smem, size = 0x4, offset = 0x4, fixed_abs, tag = 'smem constant byte address 0x4 - core index']
  #allocation1 [shape = 'u32[144,128]{1,0:T(1,128)}', space=vmem, size = 0x12000, scoped, tag = 'internal scratch']
  #allocation2 [shape = 'bf16[18,18,4]{2,1,0:T(8,128)(2,1)}', space=vmem, size = 0x1b000, scoped, tag = 'scratch operand']
  #allocation3 [shape = 'bf16[256,36]{1,0:T(16,128)(2,1)}', space=vmem, size = 0x10000, scoped, tag = 'scratch operand']
  %s0 = inlined_call_operand.vmem [shape: bf16[2,18,18,4], index: 0, kind: input, shape index: {}]
  %s1 = inlined_call_operand.vmem [shape: bf16[2,18,18,4], index: 1, kind: input, shape index: {}]
  %s2 = inlined_call_operand.vmem [shape: bf16[2,18,18,4], index: 2, kind: input, shape index: {}]
  %s3 = inlined_call_operand.vmem [shape: bf16[36,8], index: 3, kind: input, shape index: {}]
  %s4 = inlined_call_operand.vmem [shape: f32[1,8], index: 4, kind: input, shape index: {}]
  %s5 = inlined_call_operand.vmem [shape: f32[1,8], index: 5, kind: input, shape index: {}]
  %s6 = inlined_call_operand.vmem [shape: bf16[2,16,16,8], index: 6, kind: output, shape index: {}]
  %s7 = sld [smem:[#allocation0]]
  $region57: #{tpu_custom_call.1} parent=0
    _
  %s9 = ssub.s32 1, %s7
  %s10 = scalar_select 0, %s9, %s7
  loop: start=0, step=1, limit=4
  $region2: #{tpu_custom_call.1} parent=0 // loop_pre_header
    _
  $region3: #{tpu_custom_call.1} parent=0 // loop_header
    %s12 = sphi 0, %s16
    %p13 = scmp.ge.s32.totalorder %s12, 4
    %s19 = sphi 0, %s31
    %s20 = sphi 0, %s27
    %s21 = sphi 0, %s19
    %s22 = sphi 0, %s20
    %s23 = sphi 0, %s21
    %s24 = sphi 0, %s22
    %s36 = sphi 0, %s38
    %s39 = sphi 0, %s36
    %s40 = sphi 0, %s39
    %s56 = sphi 0, %s40
    %s68 = sphi 0, %s70
    %s71 = sphi 0, %s68
    %s72 = sphi 0, %s71
    %s88 = sphi 0, %s72
    %s102 = sphi 0, %s104
    %s105 = sphi 0, %s102
    %s106 = sphi 0, %s105
    %s122 = sphi 0, %s106
    %s126 = sphi 0, %s126
    %s128 = sphi 0, %s126
    %s129 = sphi 0, %s128
    %s143 = sphi 0, %s129
    %s147 = sphi 0, %s147
    %s149 = sphi 0, %s147
    %s150 = sphi 0, %s149
    %s164 = sphi 0, %s150
    %s168 = sphi 0, %s168
    %s170 = sphi 0, %s168
    %s171 = sphi 0, %s170
    %s185 = sphi 0, %s171
    %s193 = sphi 0, %s195
    %s196 = sphi 0, %s193
    %s197 = sphi 0, %s196
    %s213 = sphi 0, %s197
  $region4: #{tpu_custom_call.1} parent=0 // loop_header_branch
    %15 = sbr.rel (%p13) target = $region8
  $region5: #{tpu_custom_call.1} parent=0 // loop_body
    %s17 = ssub.s32 %s12, 1
    %s18 = ssub.s32 %s12, 2
    %s25 = sadd.s32 1, %s20
    %p26 = scmp.ge.s32.totalorder %s25, 1
    %s27 = scalar_select %p26, 0, %s25
    %s28 = sadd.s32 1, %s19
    %s29 = scalar_select %p26, %s28, %s19
    %p30 = scmp.ge.s32.totalorder %s29, 2
    %s31 = scalar_select %p30, 0, %s29
    %s32 = ssub.s32 %s19, %s31
    %s33 = ssub.s32 %s20, %s27
    %s34 = sor.u32 %s32, %s33
    %p35 = scmp.eq.s32.totalorder %s34, 0
    %s37 = sadd.s32 %s36, 1
    %s38 = scalar_select %p35, %s36, %s37
    %p41 = pneg %p35
    %p42 = scmp.eq.s32.totalorder %s12, 1
    %p43 = por %p41, %p42
    %p44 = scmp.ne.s32.totalorder %s36, %s39
    %p45 = scmp.eq.s32.totalorder %s12, 0
    %p46 = por %p44, %p45
    %p47 = scmp.ne.s32.totalorder %s36, %s39
    %p48 = scmp.eq.s32.totalorder %s17, 1
    %p49 = por %p47, %p48
    %p50 = scmp.ne.s32.totalorder %s39, %s40
    %p51 = scmp.eq.s32.totalorder %s17, 0
    %p52 = por %p50, %p51
    %p53 = scmp.ne.s32.totalorder %s39, %s40
    %p54 = scmp.eq.s32.totalorder %s18, 1
    %p55 = por %p53, %p54
    %p57 = scmp.ne.s32.totalorder %s40, %s56
    %p58 = scmp.eq.s32.totalorder %s18, 0
    %p59 = por %p57, %p58
    %s60 = sadd.s32 %s20, 1
    %s61 = smul.u32 %s60, 16
    %s62 = sadd.s32 %s27, 1
    %s63 = smul.u32 %s62, 16
    %s64 = ssub.s32 %s19, %s31
    %s65 = ssub.s32 %s61, %s63
    %s66 = sor.u32 %s64, %s65
    %p67 = scmp.eq.s32.totalorder %s66, 0
    %s69 = sadd.s32 %s68, 1
    %s70 = scalar_select %p67, %s68, %s69
    %p73 = pneg %p67
    %p74 = scmp.eq.s32.totalorder %s12, 1
    %p75 = por %p73, %p74
    %p76 = scmp.ne.s32.totalorder %s68, %s71
    %p77 = scmp.eq.s32.totalorder %s12, 0
    %p78 = por %p76, %p77
    %p79 = scmp.ne.s32.totalorder %s68, %s71
    %p80 = scmp.eq.s32.totalorder %s17, 1
    %p81 = por %p79, %p80
    %p82 = scmp.ne.s32.totalorder %s71, %s72
    %p83 = scmp.eq.s32.totalorder %s17, 0
    %p84 = por %p82, %p83
    %p85 = scmp.ne.s32.totalorder %s71, %s72
    %p86 = scmp.eq.s32.totalorder %s18, 1
    %p87 = por %p85, %p86
    %p89 = scmp.ne.s32.totalorder %s72, %s88
    %p90 = scmp.eq.s32.totalorder %s18, 0
    %p91 = por %p89, %p90
    %s92 = sadd.s32 %s20, 1
    %s93 = smul.u32 %s92, 16
    %s94 = sadd.s32 %s93, 1
    %s95 = sadd.s32 %s27, 1
    %s96 = smul.u32 %s95, 16
    %s97 = sadd.s32 %s96, 1
    %s98 = ssub.s32 %s19, %s31
    %s99 = ssub.s32 %s94, %s97
    %s100 = sor.u32 %s98, %s99
    %p101 = scmp.eq.s32.totalorder %s100, 0
    %s103 = sadd.s32 %s102, 1
    %s104 = scalar_select %p101, %s102, %s103
    %p107 = pneg %p101
    %p108 = scmp.eq.s32.totalorder %s12, 1
    %p109 = por %p107, %p108
    %p110 = scmp.ne.s32.totalorder %s102, %s105
    %p111 = scmp.eq.s32.totalorder %s12, 0
    %p112 = por %p110, %p111
    %p113 = scmp.ne.s32.totalorder %s102, %s105
    %p114 = scmp.eq.s32.totalorder %s17, 1
    %p115 = por %p113, %p114
    %p116 = scmp.ne.s32.totalorder %s105, %s106
    %p117 = scmp.eq.s32.totalorder %s17, 0
    %p118 = por %p116, %p117
    %p119 = scmp.ne.s32.totalorder %s105, %s106
    %p120 = scmp.eq.s32.totalorder %s18, 1
    %p121 = por %p119, %p120
    %p123 = scmp.ne.s32.totalorder %s106, %s122
    %p124 = scmp.eq.s32.totalorder %s18, 0
    %p125 = por %p123, %p124
    %s127 = sadd.s32 %s126, 1
    %p130 = scmp.eq.s32.totalorder %s12, 1
    %p131 = scmp.ne.s32.totalorder %s126, %s128
    %p132 = scmp.eq.s32.totalorder %s12, 0
    %p133 = por %p131, %p132
    %p134 = scmp.ne.s32.totalorder %s126, %s128
    %p135 = scmp.eq.s32.totalorder %s17, 1
    %p136 = por %p134, %p135
    %p137 = scmp.ne.s32.totalorder %s128, %s129
    %p138 = scmp.eq.s32.totalorder %s17, 0
    %p139 = por %p137, %p138
    %p140 = scmp.ne.s32.totalorder %s128, %s129
    %p141 = scmp.eq.s32.totalorder %s18, 1
    %p142 = por %p140, %p141
    %p144 = scmp.ne.s32.totalorder %s129, %s143
    %p145 = scmp.eq.s32.totalorder %s18, 0
    %p146 = por %p144, %p145
    %s148 = sadd.s32 %s147, 1
    %p151 = scmp.eq.s32.totalorder %s12, 1
    %p152 = scmp.ne.s32.totalorder %s147, %s149
    %p153 = scmp.eq.s32.totalorder %s12, 0
    %p154 = por %p152, %p153
    %p155 = scmp.ne.s32.totalorder %s147, %s149
    %p156 = scmp.eq.s32.totalorder %s17, 1
    %p157 = por %p155, %p156
    %p158 = scmp.ne.s32.totalorder %s149, %s150
    %p159 = scmp.eq.s32.totalorder %s17, 0
    %p160 = por %p158, %p159
    %p161 = scmp.ne.s32.totalorder %s149, %s150
    %p162 = scmp.eq.s32.totalorder %s18, 1
    %p163 = por %p161, %p162
    %p165 = scmp.ne.s32.totalorder %s150, %s164
    %p166 = scmp.eq.s32.totalorder %s18, 0
    %p167 = por %p165, %p166
    %s169 = sadd.s32 %s168, 1
    %p172 = scmp.eq.s32.totalorder %s12, 1
    %p173 = scmp.ne.s32.totalorder %s168, %s170
    %p174 = scmp.eq.s32.totalorder %s12, 0
    %p175 = por %p173, %p174
    %p176 = scmp.ne.s32.totalorder %s168, %s170
    %p177 = scmp.eq.s32.totalorder %s17, 1
    %p178 = por %p176, %p177
    %p179 = scmp.ne.s32.totalorder %s170, %s171
    %p180 = scmp.eq.s32.totalorder %s17, 0
    %p181 = por %p179, %p180
    %p182 = scmp.ne.s32.totalorder %s170, %s171
    %p183 = scmp.eq.s32.totalorder %s18, 1
    %p184 = por %p182, %p183
    %p186 = scmp.ne.s32.totalorder %s171, %s185
    %p187 = scmp.eq.s32.totalorder %s18, 0
    %p188 = por %p186, %p187
    %s189 = ssub.s32 %s19, %s31
    %s190 = ssub.s32 %s20, %s27
    %s191 = sor.u32 %s189, %s190
    %p192 = scmp.eq.s32.totalorder %s191, 0
    %s194 = sadd.s32 %s193, 1
    %s195 = scalar_select %p192, %s193, %s194
    %p198 = pneg %p192
    %p199 = scmp.eq.s32.totalorder %s12, 1
    %p200 = por %p198, %p199
    %p201 = scmp.ne.s32.totalorder %s193, %s196
    %p202 = scmp.eq.s32.totalorder %s12, 0
    %p203 = por %p201, %p202
    %p204 = scmp.ne.s32.totalorder %s193, %s196
    %p205 = scmp.eq.s32.totalorder %s17, 1
    %p206 = por %p204, %p205
    %p207 = scmp.ne.s32.totalorder %s196, %s197
    %p208 = scmp.eq.s32.totalorder %s17, 0
    %p209 = por %p207, %p208
    %p210 = scmp.ne.s32.totalorder %s196, %s197
    %p211 = scmp.eq.s32.totalorder %s18, 1
    %p212 = por %p210, %p211
    %p214 = scmp.ne.s32.totalorder %s197, %s213
    %p215 = scmp.eq.s32.totalorder %s18, 0
    %p216 = por %p214, %p215
    %p217 = scmp.le.s32.totalorder 1, %s12
    %p218 = scmp.lt.s32.totalorder %s12, 3
    %p219 = pnand %p217, %p218
    %p220 = pneg %p219
    // Predicated region
    $region9: #{tpu_custom_call.1} parent=5 // pred_check
      _
    $region10: #{tpu_custom_call.1} parent=5 // pred_check_branch
      %222 = sbr.rel (%p219) target = $region12
    $region11: #{tpu_custom_call.1} parent=5 // pred_region
      %s223 = ssub.s32 %s12, 1
      // Predicated region
      $region13: #{tpu_custom_call.1} parent=11 // pred_check
        %p224 = pneg %p139
      $region14: #{tpu_custom_call.1} parent=11 // pred_check_branch
        %226 = sbr.rel (%p224) target = $region16
      $region15: #{tpu_custom_call.1} parent=11 // pred_region
        _
      $region16: #{tpu_custom_call.1} parent=11 // pred_fallthru
        _
      // Predicated region
      $region17: #{tpu_custom_call.1} parent=11 // pred_check
        %p227 = pneg %p160
      $region18: #{tpu_custom_call.1} parent=11 // pred_check_branch
        %229 = sbr.rel (%p227) target = $region20
      $region19: #{tpu_custom_call.1} parent=11 // pred_region
        _
      $region20: #{tpu_custom_call.1} parent=11 // pred_fallthru
        _
      // Predicated region
      $region21: #{tpu_custom_call.1} parent=11 // pred_check
        %p230 = pneg %p181
      $region22: #{tpu_custom_call.1} parent=11 // pred_check_branch
        %232 = sbr.rel (%p230) target = $region24
      $region23: #{tpu_custom_call.1} parent=11 // pred_region
        _
      $region24: #{tpu_custom_call.1} parent=11 // pred_fallthru
        _
    $region12: #{tpu_custom_call.1} parent=5 // pred_fallthru
      _
    %p233 = scmp.lt.s32.totalorder %s12, 2
    // Predicated region
    $region25: #{tpu_custom_call.1} parent=5 // pred_check
      %p234 = pneg %p233
    $region26: #{tpu_custom_call.1} parent=5 // pred_check_branch
      %236 = sbr.rel (%p234) target = $region28
    $region27: #{tpu_custom_call.1} parent=5 // pred_region
      // Predicated region
      $region29: #{tpu_custom_call.1} parent=27 // pred_check
        %p237 = pneg %p46
      $region30: #{tpu_custom_call.1} parent=27 // pred_check_branch
        %239 = sbr.rel (%p237) target = $region32
      $region31: #{tpu_custom_call.1} parent=27 // pred_region
        %s240 = smul.u32 16, %s20
        %s241 = ssub.s32 18, %s240
        %p242 = scmp.lt.s32.totalorder %s241, 16
        %s243 = scalar_select %p242, %s241, 16
        %s244 = smul.u32 64, %s243
        %s245 = smul.u32 %s244, 3
        %p246 = scmp.lt.s32.totalorder %s19, 1
        %s247 = scalar_select %p246, %s19, 1
        %p248 = scmp.lt.s32.totalorder %s240, 17
        %s249 = scalar_select %p248, %s240, 17
        %s250 = smul.addr %s249, 3
        %s251 = smul.addr %s247, 54
        %s252 = sadd.s32 %s250, %s251
        %s253 = smul.addr %s252, 4
        %s254 = scalar_lea.vmem %s0, %s253
        %s255 = smul.u32 16, %s20
        %s256 = ssub.s32 18, %s255
        %p257 = scmp.lt.s32.totalorder %s256, 16
        %s258 = scalar_select %p257, %s256, 16
        %s259 = smul.u32 64, %s258
        %s260 = smul.u32 %s259, 3
      $region32: #{tpu_custom_call.1} parent=27 // pred_fallthru
        _
      // Predicated region
      $region33: #{tpu_custom_call.1} parent=27 // pred_check
        %p261 = pneg %p78
      $region34: #{tpu_custom_call.1} parent=27 // pred_check_branch
        %263 = sbr.rel (%p261) target = $region36
      $region35: #{tpu_custom_call.1} parent=27 // pred_region
        %s264 = sadd.s32 %s20, 1
        %s265 = smul.u32 %s264, 16
        %p266 = scmp.lt.s32.totalorder %s19, 1
        %s267 = scalar_select %p266, %s19, 1
        %p268 = scmp.lt.s32.totalorder %s265, 17
        %s269 = scalar_select %p268, %s265, 17
        %s270 = smul.addr %s269, 3
        %s271 = smul.addr %s267, 54
        %s272 = sadd.s32 %s270, %s271
        %s273 = smul.addr %s272, 4
        %s274 = scalar_lea.vmem %s1, %s273
        %s275 = sadd.s32 %s20, 1
        %s276 = smul.u32 %s275, 16
      $region36: #{tpu_custom_call.1} parent=27 // pred_fallthru
        _
      // Predicated region
      $region37: #{tpu_custom_call.1} parent=27 // pred_check
        %p277 = pneg %p112
      $region38: #{tpu_custom_call.1} parent=27 // pred_check_branch
        %279 = sbr.rel (%p277) target = $region40
      $region39: #{tpu_custom_call.1} parent=27 // pred_region
        %s280 = sadd.s32 %s20, 1
        %s281 = smul.u32 %s280, 16
        %s282 = sadd.s32 %s281, 1
        %p283 = scmp.lt.s32.totalorder %s19, 1
        %s284 = scalar_select %p283, %s19, 1
        %p285 = scmp.lt.s32.totalorder %s282, 17
        %s286 = scalar_select %p285, %s282, 17
        %s287 = smul.addr %s286, 3
        %s288 = smul.addr %s284, 54
        %s289 = sadd.s32 %s287, %s288
        %s290 = smul.addr %s289, 4
        %s291 = scalar_lea.vmem %s2, %s290
        %s292 = sadd.s32 %s20, 1
        %s293 = smul.u32 %s292, 16
        %s294 = sadd.s32 %s293, 1
      $region40: #{tpu_custom_call.1} parent=27 // pred_fallthru
        _
    $region28: #{tpu_custom_call.1} parent=5 // pred_fallthru
      _
    %p295 = scmp.le.s32.totalorder 1, %s12
    %p296 = scmp.lt.s32.totalorder %s12, 3
    %p297 = pnand %p295, %p296
    %p298 = pneg %p297
    // Predicated region
    $region41: #{tpu_custom_call.1} parent=5 // pred_check
      _
    $region42: #{tpu_custom_call.1} parent=5 // pred_check_branch
      %300 = sbr.rel (%p297) target = $region44
    $region43: #{tpu_custom_call.1} parent=5 // pred_region
      %s301 = ssub.s32 %s12, 1
      %s302 = smul.u32 16, %s22
      %s303 = ssub.s32 18, %s302
      %p304 = scmp.lt.s32.totalorder %s303, 16
      %s305 = scalar_select %p304, %s303, 16
      %s306 = smul.u32 64, %s305
      %s307 = smul.u32 %s306, 3
      %p308 = scmp.lt.s32.totalorder %s21, 1
      %s309 = scalar_select %p308, %s21, 1
      %p310 = scmp.lt.s32.totalorder %s302, 17
      %s311 = scalar_select %p310, %s302, 17
      %s312 = smul.addr %s311, 3
      %s313 = smul.addr %s309, 54
      %s314 = sadd.s32 %s312, %s313
      %s315 = smul.addr %s314, 4
      %s316 = scalar_lea.vmem %s0, %s315
      %p317 = pneg %p52
      %p318 = pneg %p49
      %s319 = sadd.s32 %s22, 1
      %s320 = smul.u32 %s319, 16
      %p321 = scmp.lt.s32.totalorder %s21, 1
      %s322 = scalar_select %p321, %s21, 1
      %p323 = scmp.lt.s32.totalorder %s320, 17
      %s324 = scalar_select %p323, %s320, 17
      %s325 = smul.addr %s324, 3
      %s326 = smul.addr %s322, 54
      %s327 = sadd.s32 %s325, %s326
      %s328 = smul.addr %s327, 4
      %s329 = scalar_lea.vmem %s1, %s328
      %p330 = pneg %p84
      %p331 = pneg %p81
      %s332 = sadd.s32 %s22, 1
      %s333 = smul.u32 %s332, 16
      %s334 = sadd.s32 %s333, 1
      %p335 = scmp.lt.s32.totalorder %s21, 1
      %s336 = scalar_select %p335, %s21, 1
      %p337 = scmp.lt.s32.totalorder %s334, 17
      %s338 = scalar_select %p337, %s334, 17
      %s339 = smul.addr %s338, 3
      %s340 = smul.addr %s336, 54
      %s341 = sadd.s32 %s339, %s340
      %s342 = smul.addr %s341, 4
      %s343 = scalar_lea.vmem %s2, %s342
      %p344 = pneg %p118
      %p345 = pneg %p115
      %p346 = pneg %p139
      %p347 = pneg %p136
      %p348 = pneg %p160
      %p349 = pneg %p157
      %p350 = pneg %p181
      %p351 = pneg %p178
      %p352 = pneg %p209
      %p353 = pneg %p206
      %s354 = smul.u32 16, %s22
      %p355 = scmp.lt.s32.totalorder %s21, 1
      %s356 = scalar_select %p355, %s21, 1
      %p357 = scmp.lt.s32.totalorder %s354, 15
      %s358 = scalar_select %p357, %s354, 15
      %s359 = smul.addr %s358, 2
      %s360 = smul.addr %s356, 32
      %s361 = sadd.s32 %s359, %s360
      %s362 = smul.addr %s361, 4
      %s363 = scalar_lea.vmem %s6, %s362
      %s364 = smul.u32 16, %s22
      %s365 = ssub.s32 18, %s364
      %p366 = scmp.lt.s32.totalorder %s365, 16
      %s367 = scalar_select %p366, %s365, 16
      %s368 = smul.u32 64, %s367
      %s369 = smul.u32 %s368, 3
      %p370 = scmp.lt.s32.totalorder %s21, 1
      %s371 = scalar_select %p370, %s21, 1
      %p372 = scmp.lt.s32.totalorder %s364, 17
      %s373 = scalar_select %p372, %s364, 17
      %s374 = smul.addr %s373, 3
      %s375 = smul.addr %s371, 54
      %s376 = sadd.s32 %s374, %s375
      %s377 = smul.addr %s376, 4
      %s378 = scalar_lea.vmem %s0, %s377
      %s379 = smul.u32 16, %s22
      %s380 = ssub.s32 18, %s379
      %p381 = scmp.lt.s32.totalorder %s380, 16
      %s382 = scalar_select %p381, %s380, 16
      %s383 = smul.u32 64, %s382
      %s384 = smul.u32 %s383, 3
      %s385 = sadd.s32 %s22, 1
      %s386 = smul.u32 %s385, 16
      %p387 = scmp.lt.s32.totalorder %s21, 1
      %s388 = scalar_select %p387, %s21, 1
      %p389 = scmp.lt.s32.totalorder %s386, 17
      %s390 = scalar_select %p389, %s386, 17
      %s391 = smul.addr %s390, 3
      %s392 = smul.addr %s388, 54
      %s393 = sadd.s32 %s391, %s392
      %s394 = smul.addr %s393, 4
      %s395 = scalar_lea.vmem %s1, %s394
      %s396 = sadd.s32 %s22, 1
      %s397 = smul.u32 %s396, 16
      %s398 = sadd.s32 %s22, 1
      %s399 = smul.u32 %s398, 16
      %s400 = sadd.s32 %s399, 1
      %p401 = scmp.lt.s32.totalorder %s21, 1
      %s402 = scalar_select %p401, %s21, 1
      %p403 = scmp.lt.s32.totalorder %s400, 17
      %s404 = scalar_select %p403, %s400, 17
      %s405 = smul.addr %s404, 3
      %s406 = smul.addr %s402, 54
      %s407 = sadd.s32 %s405, %s406
      %s408 = smul.addr %s407, 4
      %s409 = scalar_lea.vmem %s2, %s408
      %s410 = sadd.s32 %s22, 1
      %s411 = smul.u32 %s410, 16
      %s412 = sadd.s32 %s411, 1
      %s413 = smul.u32 16, %s22
      %p414 = scmp.lt.s32.totalorder %s21, 1
      %s415 = scalar_select %p414, %s21, 1
      %p416 = scmp.lt.s32.totalorder %s413, 15
      %s417 = scalar_select %p416, %s413, 15
      %s418 = smul.addr %s417, 2
      %s419 = smul.addr %s415, 32
      %s420 = sadd.s32 %s418, %s419
      %s421 = smul.addr %s420, 4
      %s422 = scalar_lea.vmem %s6, %s421
      %s423 = smul.u32 16, %s22
      %v425 = vld [vmem:[%s378] sm:$0xf]
      %v426 = vld [vmem:[%s378 + $0x4] sm:$0xf]
      %v427 = vld [vmem:[%s378 + $0x8] sm:$0x1]
      %v428 = vld [vmem:[%s378 + $0xc] sm:$0xf]
      %v429 = vld [vmem:[%s378 + $0x10] sm:$0xf]
      %v430 = vld [vmem:[%s378 + $0x14] sm:$0x1]
      %v431 = vld [vmem:[%s378 + $0x18] sm:$0xf]
      %v432 = vld [vmem:[%s378 + $0x1c] sm:$0xf]
      %v433 = vld [vmem:[%s378 + $0x20] sm:$0x1]
      %v434 = vld [vmem:[%s378 + $0x24] sm:$0xf]
      %v435 = vld [vmem:[%s378 + $0x28] sm:$0xf]
      %v436 = vld [vmem:[%s378 + $0x2c] sm:$0x1]
      %v437 = vld [vmem:[%s378 + $0x30] sm:$0xf]
      %v438 = vld [vmem:[%s378 + $0x34] sm:$0xf]
      %v439 = vld [vmem:[%s378 + $0x38] sm:$0x1]
      %v440 = vld [vmem:[%s378 + $0x3c] sm:$0xf]
      %v441 = vld [vmem:[%s378 + $0x40] sm:$0xf]
      %v442 = vld [vmem:[%s378 + $0x44] sm:$0x1]
      %v443 = vld [vmem:[%s378 + $0x48] sm:$0xf]
      %v444 = vld [vmem:[%s378 + $0x4c] sm:$0xf]
      %v445 = vld [vmem:[%s378 + $0x50] sm:$0x1]
      %v446 = vld [vmem:[%s378 + $0x54] sm:$0xf]
      %v447 = vld [vmem:[%s378 + $0x58] sm:$0xf]
      %v448 = vld [vmem:[%s378 + $0x5c] sm:$0x1]
      %v449 = vld [vmem:[%s378 + $0x60] sm:$0xf]
      %v450 = vld [vmem:[%s378 + $0x64] sm:$0xf]
      %v451 = vld [vmem:[%s378 + $0x68] sm:$0x1]
      %v452 = vld [vmem:[%s378 + $0x6c] sm:$0xf]
      %v453 = vld [vmem:[%s378 + $0x70] sm:$0xf]
      %v454 = vld [vmem:[%s378 + $0x74] sm:$0x1]
      %v455 = vld [vmem:[%s378 + $0x78] sm:$0xf]
      %v456 = vld [vmem:[%s378 + $0x7c] sm:$0xf]
      %v457 = vld [vmem:[%s378 + $0x80] sm:$0x1]
      %v458 = vld [vmem:[%s378 + $0x84] sm:$0xf]
      %v459 = vld [vmem:[%s378 + $0x88] sm:$0xf]
      %v460 = vld [vmem:[%s378 + $0x8c] sm:$0x1]
      %v461 = vld [vmem:[%s378 + $0x90] sm:$0xf]
      %v462 = vld [vmem:[%s378 + $0x94] sm:$0xf]
      %v463 = vld [vmem:[%s378 + $0x98] sm:$0x1]
      %v464 = vld [vmem:[%s378 + $0x9c] sm:$0xf]
      %v465 = vld [vmem:[%s378 + $0xa0] sm:$0xf]
      %v466 = vld [vmem:[%s378 + $0xa4] sm:$0x1]
      %v467 = vld [vmem:[%s378 + $0xa8] sm:$0xf]
      %v468 = vld [vmem:[%s378 + $0xac] sm:$0xf]
      %v469 = vld [vmem:[%s378 + $0xb0] sm:$0x1]
      %v470 = vld [vmem:[%s378 + $0xb4] sm:$0xf]
      %v471 = vld [vmem:[%s378 + $0xb8] sm:$0xf]
      %v472 = vld [vmem:[%s378 + $0xbc] sm:$0x1]
      %vm473 = vcmask 27648
      %474 = vst.msk [vmem:[#allocation2] sm:$0xf] %vm473, %v425
      %475 = vst.msk [vmem:[#allocation2 + $0x4] sm:$0xf] %vm473, %v426
      %vm476 = vcmask 24576
      %477 = vst.msk [vmem:[#allocation2 + $0x8] sm:$0x1] %vm476, %v427
      %478 = vst.msk [vmem:[#allocation2 + $0xc] sm:$0xf] %vm473, %v428
      %479 = vst.msk [vmem:[#allocation2 + $0x10] sm:$0xf] %vm473, %v429
      %480 = vst.msk [vmem:[#allocation2 + $0x14] sm:$0x1] %vm476, %v430
      %481 = vst.msk [vmem:[#allocation2 + $0x18] sm:$0xf] %vm473, %v431
      %482 = vst.msk [vmem:[#allocation2 + $0x1c] sm:$0xf] %vm473, %v432
      %483 = vst.msk [vmem:[#allocation2 + $0x20] sm:$0x1] %vm476, %v433
      %484 = vst.msk [vmem:[#allocation2 + $0x24] sm:$0xf] %vm473, %v434
      %485 = vst.msk [vmem:[#allocation2 + $0x28] sm:$0xf] %vm473, %v435
      %486 = vst.msk [vmem:[#allocation2 + $0x2c] sm:$0x1] %vm476, %v436
      %487 = vst.msk [vmem:[#allocation2 + $0x30] sm:$0xf] %vm473, %v437
      %488 = vst.msk [vmem:[#allocation2 + $0x34] sm:$0xf] %vm473, %v438
      %489 = vst.msk [vmem:[#allocation2 + $0x38] sm:$0x1] %vm476, %v439
      %490 = vst.msk [vmem:[#allocation2 + $0x3c] sm:$0xf] %vm473, %v440
      %491 = vst.msk [vmem:[#allocation2 + $0x40] sm:$0xf] %vm473, %v441
      %492 = vst.msk [vmem:[#allocation2 + $0x44] sm:$0x1] %vm476, %v442
      %493 = vst.msk [vmem:[#allocation2 + $0x48] sm:$0xf] %vm473, %v443
      %494 = vst.msk [vmem:[#allocation2 + $0x4c] sm:$0xf] %vm473, %v444
      %495 = vst.msk [vmem:[#allocation2 + $0x50] sm:$0x1] %vm476, %v445
      %496 = vst.msk [vmem:[#allocation2 + $0x54] sm:$0xf] %vm473, %v446
      %497 = vst.msk [vmem:[#allocation2 + $0x58] sm:$0xf] %vm473, %v447
      %498 = vst.msk [vmem:[#allocation2 + $0x5c] sm:$0x1] %vm476, %v448
      %499 = vst.msk [vmem:[#allocation2 + $0x60] sm:$0xf] %vm473, %v449
      %500 = vst.msk [vmem:[#allocation2 + $0x64] sm:$0xf] %vm473, %v450
      %501 = vst.msk [vmem:[#allocation2 + $0x68] sm:$0x1] %vm476, %v451
      %502 = vst.msk [vmem:[#allocation2 + $0x6c] sm:$0xf] %vm473, %v452
      %503 = vst.msk [vmem:[#allocation2 + $0x70] sm:$0xf] %vm473, %v453
      %504 = vst.msk [vmem:[#allocation2 + $0x74] sm:$0x1] %vm476, %v454
      %505 = vst.msk [vmem:[#allocation2 + $0x78] sm:$0xf] %vm473, %v455
      %506 = vst.msk [vmem:[#allocation2 + $0x7c] sm:$0xf] %vm473, %v456
      %507 = vst.msk [vmem:[#allocation2 + $0x80] sm:$0x1] %vm476, %v457
      %508 = vst.msk [vmem:[#allocation2 + $0x84] sm:$0xf] %vm473, %v458
      %509 = vst.msk [vmem:[#allocation2 + $0x88] sm:$0xf] %vm473, %v459
      %510 = vst.msk [vmem:[#allocation2 + $0x8c] sm:$0x1] %vm476, %v460
      %511 = vst.msk [vmem:[#allocation2 + $0x90] sm:$0xf] %vm473, %v461
      %512 = vst.msk [vmem:[#allocation2 + $0x94] sm:$0xf] %vm473, %v462
      %513 = vst.msk [vmem:[#allocation2 + $0x98] sm:$0x1] %vm476, %v463
      %514 = vst.msk [vmem:[#allocation2 + $0x9c] sm:$0xf] %vm473, %v464
      %515 = vst.msk [vmem:[#allocation2 + $0xa0] sm:$0xf] %vm473, %v465
      %516 = vst.msk [vmem:[#allocation2 + $0xa4] sm:$0x1] %vm476, %v466
      %517 = vst.msk [vmem:[#allocation2 + $0xa8] sm:$0xf] %vm473, %v467
      %518 = vst.msk [vmem:[#allocation2 + $0xac] sm:$0xf] %vm473, %v468
      %519 = vst.msk [vmem:[#allocation2 + $0xb0] sm:$0x1] %vm476, %v469
      %520 = vst.msk [vmem:[#allocation2 + $0xb4] sm:$0xf] %vm473, %v470
      %521 = vst.msk [vmem:[#allocation2 + $0xb8] sm:$0xf] %vm473, %v471
      %522 = vst.msk [vmem:[#allocation2 + $0xbc] sm:$0x1] %vm476, %v472
      %v523 = vld [vmem:[%s395] sm:$0xf]
      %v524 = vld [vmem:[%s395 + $0x4] sm:$0xf]
      %v525 = vld [vmem:[%s395 + $0x8] sm:$0x1]
      %s526 = scalar_lea.vmem [#allocation2], 192
      %527 = vst.msk [vmem:[%s526] sm:$0xf] %vm473, %v523
      %528 = vst.msk [vmem:[%s526 + $0x4] sm:$0xf] %vm473, %v524
      %529 = vst.msk [vmem:[%s526 + $0x8] sm:$0x1] %vm476, %v525
      %v530 = vld [vmem:[%s409] sm:$0xf]
      %v531 = vld [vmem:[%s409 + $0x4] sm:$0xf]
      %v532 = vld [vmem:[%s409 + $0x8] sm:$0x1]
      %s533 = scalar_lea.vmem [#allocation2], 204
      %534 = vst.msk [vmem:[%s533] sm:$0xf] %vm473, %v530
      %535 = vst.msk [vmem:[%s533 + $0x4] sm:$0xf] %vm473, %v531
      %536 = vst.msk [vmem:[%s533 + $0x8] sm:$0x1] %vm476, %v532
      %v537 = vld [vmem:[#allocation2] sm:$0xf]
      %v538 = vld [vmem:[#allocation2 + $0x4] sm:$0xf]
      %v539 = vld [vmem:[#allocation2 + $0xc] sm:$0xf]
      %v540 = vld [vmem:[#allocation2 + $0x10] sm:$0xf]
      %v541 = vld [vmem:[#allocation2 + $0x18] sm:$0xf]
      %v542 = vld [vmem:[#allocation2 + $0x1c] sm:$0xf]
      %v543 = vld [vmem:[#allocation2 + $0x24] sm:$0xf]
      %v544 = vld [vmem:[#allocation2 + $0x28] sm:$0xf]
      %v545 = vld [vmem:[#allocation2 + $0x30] sm:$0xf]
      %v546 = vld [vmem:[#allocation2 + $0x34] sm:$0xf]
      %v547 = vld [vmem:[#allocation2 + $0x3c] sm:$0xf]
      %v548 = vld [vmem:[#allocation2 + $0x40] sm:$0xf]
      %v549 = vld [vmem:[#allocation2 + $0x48] sm:$0xf]
      %v550 = vld [vmem:[#allocation2 + $0x4c] sm:$0xf]
      %v551 = vld [vmem:[#allocation2 + $0x54] sm:$0xf]
      %v552 = vld [vmem:[#allocation2 + $0x58] sm:$0xf]
      %v553 = vld [vmem:[#allocation2 + $0x60] sm:$0xf]
      %v554 = vld [vmem:[#allocation2 + $0x64] sm:$0xf]
      %v555 = vld [vmem:[#allocation2 + $0x6c] sm:$0xf]
      %v556 = vld [vmem:[#allocation2 + $0x70] sm:$0xf]
      %v557 = vld [vmem:[#allocation2 + $0x78] sm:$0xf]
      %v558 = vld [vmem:[#allocation2 + $0x7c] sm:$0xf]
      %v559 = vld [vmem:[#allocation2 + $0x84] sm:$0xf]
      %v560 = vld [vmem:[#allocation2 + $0x88] sm:$0xf]
      %v561 = vld [vmem:[#allocation2 + $0x90] sm:$0xf]
      %v562 = vld [vmem:[#allocation2 + $0x94] sm:$0xf]
      %v563 = vld [vmem:[#allocation2 + $0x9c] sm:$0xf]
      %v564 = vld [vmem:[#allocation2 + $0xa0] sm:$0xf]
      %v565 = vld [vmem:[#allocation2 + $0xa8] sm:$0xf]
      %v566 = vld [vmem:[#allocation2 + $0xac] sm:$0xf]
      %v567 = vld [vmem:[#allocation2 + $0xb4] sm:$0xf]
      %v568 = vld [vmem:[#allocation2 + $0xb8] sm:$0xf]
      %v601 = vunpack.c.l.b16 %v537
      %v602 = vunpack.c.l.b16 %v538
      %v603 = vunpack.c.l.b16 %v539
      %v604 = vunpack.c.l.b16 %v540
      %v605 = vunpack.c.l.b16 %v541
      %v606 = vunpack.c.l.b16 %v542
      %v607 = vunpack.c.l.b16 %v543
      %v608 = vunpack.c.l.b16 %v544
      %v609 = vunpack.c.l.b16 %v545
      %v610 = vunpack.c.l.b16 %v546
      %v611 = vunpack.c.l.b16 %v547
      %v612 = vunpack.c.l.b16 %v548
      %v613 = vunpack.c.l.b16 %v549
      %v614 = vunpack.c.l.b16 %v550
      %v615 = vunpack.c.l.b16 %v551
      %v616 = vunpack.c.l.b16 %v552
      %v617 = vunpack.c.l.b16 %v553
      %v618 = vunpack.c.l.b16 %v554
      %v619 = vunpack.c.l.b16 %v555
      %v620 = vunpack.c.l.b16 %v556
      %v621 = vunpack.c.l.b16 %v557
      %v622 = vunpack.c.l.b16 %v558
      %v623 = vunpack.c.l.b16 %v559
      %v624 = vunpack.c.l.b16 %v560
      %v625 = vunpack.c.l.b16 %v561
      %v626 = vunpack.c.l.b16 %v562
      %v627 = vunpack.c.l.b16 %v563
      %v628 = vunpack.c.l.b16 %v564
      %v629 = vunpack.c.l.b16 %v565
      %v630 = vunpack.c.l.b16 %v566
      %v631 = vunpack.c.l.b16 %v567
      %v632 = vunpack.c.l.b16 %v568
      %v633 = vpack.c.b16 %v602, %v601
      %v634 = vpack.c.b16 %v604, %v603
      %v635 = vpack.c.b16 %v606, %v605
      %v636 = vpack.c.b16 %v608, %v607
      %v637 = vpack.c.b16 %v610, %v609
      %v638 = vpack.c.b16 %v612, %v611
      %v639 = vpack.c.b16 %v614, %v613
      %v640 = vpack.c.b16 %v616, %v615
      %v641 = vpack.c.b16 %v618, %v617
      %v642 = vpack.c.b16 %v620, %v619
      %v643 = vpack.c.b16 %v622, %v621
      %v644 = vpack.c.b16 %v624, %v623
      %v645 = vpack.c.b16 %v626, %v625
      %v646 = vpack.c.b16 %v628, %v627
      %v647 = vpack.c.b16 %v630, %v629
      %v648 = vpack.c.b16 %v632, %v631
      %vm665 = vcmask 31744
      %666 = vst.msk [vmem:[#allocation3] sm:$0xff] %vm665, %v633
      %667 = vst.msk [vmem:[#allocation3 + $0x8] sm:$0xff] %vm665, %v634
      %668 = vst.msk [vmem:[#allocation3 + $0x10] sm:$0xff] %vm665, %v635
      %669 = vst.msk [vmem:[#allocation3 + $0x18] sm:$0xff] %vm665, %v636
      %670 = vst.msk [vmem:[#allocation3 + $0x20] sm:$0xff] %vm665, %v637
      %671 = vst.msk [vmem:[#allocation3 + $0x28] sm:$0xff] %vm665, %v638
      %672 = vst.msk [vmem:[#allocation3 + $0x30] sm:$0xff] %vm665, %v639
      %673 = vst.msk [vmem:[#allocation3 + $0x38] sm:$0xff] %vm665, %v640
      %674 = vst.msk [vmem:[#allocation3 + $0x40] sm:$0xff] %vm665, %v641
      %675 = vst.msk [vmem:[#allocation3 + $0x48] sm:$0xff] %vm665, %v642
      %676 = vst.msk [vmem:[#allocation3 + $0x50] sm:$0xff] %vm665, %v643
      %677 = vst.msk [vmem:[#allocation3 + $0x58] sm:$0xff] %vm665, %v644
      %678 = vst.msk [vmem:[#allocation3 + $0x60] sm:$0xff] %vm665, %v645
      %679 = vst.msk [vmem:[#allocation3 + $0x68] sm:$0xff] %vm665, %v646
      %680 = vst.msk [vmem:[#allocation3 + $0x70] sm:$0xff] %vm665, %v647
      %681 = vst.msk [vmem:[#allocation3 + $0x78] sm:$0xff] %vm665, %v648
      %v682 = vld [vmem:[#allocation2] sm:$0xf]
      %v683 = vld [vmem:[#allocation2 + $0x4] sm:$0xf]
      %v684 = vld [vmem:[#allocation2 + $0x8] sm:$0x1]
      %v685 = vld [vmem:[#allocation2 + $0xc] sm:$0xf]
      %v686 = vld [vmem:[#allocation2 + $0x10] sm:$0xf]
      %v687 = vld [vmem:[#allocation2 + $0x14] sm:$0x1]
      %v688 = vld [vmem:[#allocation2 + $0x18] sm:$0xf]
      %v689 = vld [vmem:[#allocation2 + $0x1c] sm:$0xf]
      %v690 = vld [vmem:[#allocation2 + $0x20] sm:$0x1]
      %v691 = vld [vmem:[#allocation2 + $0x24] sm:$0xf]
      %v692 = vld [vmem:[#allocation2 + $0x28] sm:$0xf]
      %v693 = vld [vmem:[#allocation2 + $0x2c] sm:$0x1]
      %v694 = vld [vmem:[#allocation2 + $0x30] sm:$0xf]
      %v695 = vld [vmem:[#allocation2 + $0x34] sm:$0xf]
      %v696 = vld [vmem:[#allocation2 + $0x38] sm:$0x1]
      %v697 = vld [vmem:[#allocation2 + $0x3c] sm:$0xf]
      %v698 = vld [vmem:[#allocation2 + $0x40] sm:$0xf]
      %v699 = vld [vmem:[#allocation2 + $0x44] sm:$0x1]
      %v700 = vld [vmem:[#allocation2 + $0x48] sm:$0xf]
      %v701 = vld [vmem:[#allocation2 + $0x4c] sm:$0xf]
      %v702 = vld [vmem:[#allocation2 + $0x50] sm:$0x1]
      %v703 = vld [vmem:[#allocation2 + $0x54] sm:$0xf]
      %v704 = vld [vmem:[#allocation2 + $0x58] sm:$0xf]
      %v705 = vld [vmem:[#allocation2 + $0x5c] sm:$0x1]
      %v706 = vld [vmem:[#allocation2 + $0x60] sm:$0xf]
      %v707 = vld [vmem:[#allocation2 + $0x64] sm:$0xf]
      %v708 = vld [vmem:[#allocation2 + $0x68] sm:$0x1]
      %v709 = vld [vmem:[#allocation2 + $0x6c] sm:$0xf]
      %v710 = vld [vmem:[#allocation2 + $0x70] sm:$0xf]
      %v711 = vld [vmem:[#allocation2 + $0x74] sm:$0x1]
      %v712 = vld [vmem:[#allocation2 + $0x78] sm:$0xf]
      %v713 = vld [vmem:[#allocation2 + $0x7c] sm:$0xf]
      %v714 = vld [vmem:[#allocation2 + $0x80] sm:$0x1]
      %v715 = vld [vmem:[#allocation2 + $0x84] sm:$0xf]
      %v716 = vld [vmem:[#allocation2 + $0x88] sm:$0xf]
      %v717 = vld [vmem:[#allocation2 + $0x8c] sm:$0x1]
      %v718 = vld [vmem:[#allocation2 + $0x90] sm:$0xf]
      %v719 = vld [vmem:[#allocation2 + $0x94] sm:$0xf]
      %v720 = vld [vmem:[#allocation2 + $0x98] sm:$0x1]
      %v721 = vld [vmem:[#allocation2 + $0x9c] sm:$0xf]
      %v722 = vld [vmem:[#allocation2 + $0xa0] sm:$0xf]
      %v723 = vld [vmem:[#allocation2 + $0xa4] sm:$0x1]
      %v724 = vld [vmem:[#allocation2 + $0xa8] sm:$0xf]
      %v725 = vld [vmem:[#allocation2 + $0xac] sm:$0xf]
      %v726 = vld [vmem:[#allocation2 + $0xb0] sm:$0x1]
      %v727 = vld [vmem:[#allocation2 + $0xb4] sm:$0xf]
      %v728 = vld [vmem:[#allocation2 + $0xb8] sm:$0xf]
      %v729 = vld [vmem:[#allocation2 + $0xbc] sm:$0x1]
      %vm730 = vsmask.f32 3328
      %vm731 = vsmask.f32 7440
      %vm732 = vmor %vm730, %vm731
      %v734 = vshrl.u32 %v682, 16
      %v736 = vrot.slane %v734, 4
      %v737 = vshll.u32 %v682, 16
      %v739 = vrot.slane %v737, 5
      %v740 = vor.u32 %v736, %v739
      %v741 = vrot.slane %v740, 4
      %v743 = vshll.u32 %v683, 16
      %v745 = vrot.slane %v743, 5
      %v746 = vsel %vm732, %v741, %v745
      %v747 = vshrl.u32 %v683, 16
      %v749 = vrot.slane %v747, 4
      %v750 = vor.u32 %v749, %v745
      %v751 = vrot.slane %v750, 4
      %v753 = vshll.u32 %v684, 16
      %v755 = vrot.slane %v753, 5
      %v756 = vsel %vm732, %v751, %v755
      %v758 = vshrl.u32 %v685, 16
      %v760 = vrot.slane %v758, 4
      %v761 = vshll.u32 %v685, 16
      %v763 = vrot.slane %v761, 5
      %v764 = vor.u32 %v760, %v763
      %v765 = vrot.slane %v764, 4
      %v767 = vshll.u32 %v686, 16
      %v769 = vrot.slane %v767, 5
      %v770 = vsel %vm732, %v765, %v769
      %v771 = vshrl.u32 %v686, 16
      %v773 = vrot.slane %v771, 4
      %v774 = vor.u32 %v773, %v769
      %v775 = vrot.slane %v774, 4
      %v777 = vshll.u32 %v687, 16
      %v779 = vrot.slane %v777, 5
      %v780 = vsel %vm732, %v775, %v779
      %v782 = vshrl.u32 %v688, 16
      %v784 = vrot.slane %v782, 4
      %v785 = vshll.u32 %v688, 16
      %v787 = vrot.slane %v785, 5
      %v788 = vor.u32 %v784, %v787
      %v789 = vrot.slane %v788, 4
      %v791 = vshll.u32 %v689, 16
      %v793 = vrot.slane %v791, 5
      %v794 = vsel %vm732, %v789, %v793
      %v795 = vshrl.u32 %v689, 16
      %v797 = vrot.slane %v795, 4
      %v798 = vor.u32 %v797, %v793
      %v799 = vrot.slane %v798, 4
      %v801 = vshll.u32 %v690, 16
      %v803 = vrot.slane %v801, 5
      %v804 = vsel %vm732, %v799, %v803
      %v806 = vshrl.u32 %v691, 16
      %v808 = vrot.slane %v806, 4
      %v809 = vshll.u32 %v691, 16
      %v811 = vrot.slane %v809, 5
      %v812 = vor.u32 %v808, %v811
      %v813 = vrot.slane %v812, 4
      %v815 = vshll.u32 %v692, 16
      %v817 = vrot.slane %v815, 5
      %v818 = vsel %vm732, %v813, %v817
      %v819 = vshrl.u32 %v692, 16
      %v821 = vrot.slane %v819, 4
      %v822 = vor.u32 %v821, %v817
      %v823 = vrot.slane %v822, 4
      %v825 = vshll.u32 %v693, 16
      %v827 = vrot.slane %v825, 5
      %v828 = vsel %vm732, %v823, %v827
      %v830 = vshrl.u32 %v694, 16
      %v832 = vrot.slane %v830, 4
      %v833 = vshll.u32 %v694, 16
      %v835 = vrot.slane %v833, 5
      %v836 = vor.u32 %v832, %v835
      %v837 = vrot.slane %v836, 4
      %v839 = vshll.u32 %v695, 16
      %v841 = vrot.slane %v839, 5
      %v842 = vsel %vm732, %v837, %v841
      %v843 = vshrl.u32 %v695, 16
      %v845 = vrot.slane %v843, 4
      %v846 = vor.u32 %v845, %v841
      %v847 = vrot.slane %v846, 4
      %v849 = vshll.u32 %v696, 16
      %v851 = vrot.slane %v849, 5
      %v852 = vsel %vm732, %v847, %v851
      %v854 = vshrl.u32 %v697, 16
      %v856 = vrot.slane %v854, 4
      %v857 = vshll.u32 %v697, 16
      %v859 = vrot.slane %v857, 5
      %v860 = vor.u32 %v856, %v859
      %v861 = vrot.slane %v860, 4
      %v863 = vshll.u32 %v698, 16
      %v865 = vrot.slane %v863, 5
      %v866 = vsel %vm732, %v861, %v865
      %v867 = vshrl.u32 %v698, 16
      %v869 = vrot.slane %v867, 4
      %v870 = vor.u32 %v869, %v865
      %v871 = vrot.slane %v870, 4
      %v873 = vshll.u32 %v699, 16
      %v875 = vrot.slane %v873, 5
      %v876 = vsel %vm732, %v871, %v875
      %v878 = vshrl.u32 %v700, 16
      %v880 = vrot.slane %v878, 4
      %v881 = vshll.u32 %v700, 16
      %v883 = vrot.slane %v881, 5
      %v884 = vor.u32 %v880, %v883
      %v885 = vrot.slane %v884, 4
      %v887 = vshll.u32 %v701, 16
      %v889 = vrot.slane %v887, 5
      %v890 = vsel %vm732, %v885, %v889
      %v891 = vshrl.u32 %v701, 16
      %v893 = vrot.slane %v891, 4
      %v894 = vor.u32 %v893, %v889
      %v895 = vrot.slane %v894, 4
      %v897 = vshll.u32 %v702, 16
      %v899 = vrot.slane %v897, 5
      %v900 = vsel %vm732, %v895, %v899
      %v902 = vshrl.u32 %v703, 16
      %v904 = vrot.slane %v902, 4
      %v905 = vshll.u32 %v703, 16
      %v907 = vrot.slane %v905, 5
      %v908 = vor.u32 %v904, %v907
      %v909 = vrot.slane %v908, 4
      %v911 = vshll.u32 %v704, 16
      %v913 = vrot.slane %v911, 5
      %v914 = vsel %vm732, %v909, %v913
      %v915 = vshrl.u32 %v704, 16
      %v917 = vrot.slane %v915, 4
      %v918 = vor.u32 %v917, %v913
      %v919 = vrot.slane %v918, 4
      %v921 = vshll.u32 %v705, 16
      %v923 = vrot.slane %v921, 5
      %v924 = vsel %vm732, %v919, %v923
      %v926 = vshrl.u32 %v706, 16
      %v928 = vrot.slane %v926, 4
      %v929 = vshll.u32 %v706, 16
      %v931 = vrot.slane %v929, 5
      %v932 = vor.u32 %v928, %v931
      %v933 = vrot.slane %v932, 4
      %v935 = vshll.u32 %v707, 16
      %v937 = vrot.slane %v935, 5
      %v938 = vsel %vm732, %v933, %v937
      %v939 = vshrl.u32 %v707, 16
      %v941 = vrot.slane %v939, 4
      %v942 = vor.u32 %v941, %v937
      %v943 = vrot.slane %v942, 4
      %v945 = vshll.u32 %v708, 16
      %v947 = vrot.slane %v945, 5
      %v948 = vsel %vm732, %v943, %v947
      %v950 = vshrl.u32 %v709, 16
      %v952 = vrot.slane %v950, 4
      %v953 = vshll.u32 %v709, 16
      %v955 = vrot.slane %v953, 5
      %v956 = vor.u32 %v952, %v955
      %v957 = vrot.slane %v956, 4
      %v959 = vshll.u32 %v710, 16
      %v961 = vrot.slane %v959, 5
      %v962 = vsel %vm732, %v957, %v961
      %v963 = vshrl.u32 %v710, 16
      %v965 = vrot.slane %v963, 4
      %v966 = vor.u32 %v965, %v961
      %v967 = vrot.slane %v966, 4
      %v969 = vshll.u32 %v711, 16
      %v971 = vrot.slane %v969, 5
      %v972 = vsel %vm732, %v967, %v971
      %v974 = vshrl.u32 %v712, 16
      %v976 = vrot.slane %v974, 4
      %v977 = vshll.u32 %v712, 16
      %v979 = vrot.slane %v977, 5
      %v980 = vor.u32 %v976, %v979
      %v981 = vrot.slane %v980, 4
      %v983 = vshll.u32 %v713, 16
      %v985 = vrot.slane %v983, 5
      %v986 = vsel %vm732, %v981, %v985
      %v987 = vshrl.u32 %v713, 16
      %v989 = vrot.slane %v987, 4
      %v990 = vor.u32 %v989, %v985
      %v991 = vrot.slane %v990, 4
      %v993 = vshll.u32 %v714, 16
      %v995 = vrot.slane %v993, 5
      %v996 = vsel %vm732, %v991, %v995
      %v998 = vshrl.u32 %v715, 16
      %v1000 = vrot.slane %v998, 4
      %v1001 = vshll.u32 %v715, 16
      %v1003 = vrot.slane %v1001, 5
      %v1004 = vor.u32 %v1000, %v1003
      %v1005 = vrot.slane %v1004, 4
      %v1007 = vshll.u32 %v716, 16
      %v1009 = vrot.slane %v1007, 5
      %v1010 = vsel %vm732, %v1005, %v1009
      %v1011 = vshrl.u32 %v716, 16
      %v1013 = vrot.slane %v1011, 4
      %v1014 = vor.u32 %v1013, %v1009
      %v1015 = vrot.slane %v1014, 4
      %v1017 = vshll.u32 %v717, 16
      %v1019 = vrot.slane %v1017, 5
      %v1020 = vsel %vm732, %v1015, %v1019
      %v1022 = vshrl.u32 %v718, 16
      %v1024 = vrot.slane %v1022, 4
      %v1025 = vshll.u32 %v718, 16
      %v1027 = vrot.slane %v1025, 5
      %v1028 = vor.u32 %v1024, %v1027
      %v1029 = vrot.slane %v1028, 4
      %v1031 = vshll.u32 %v719, 16
      %v1033 = vrot.slane %v1031, 5
      %v1034 = vsel %vm732, %v1029, %v1033
      %v1035 = vshrl.u32 %v719, 16
      %v1037 = vrot.slane %v1035, 4
      %v1038 = vor.u32 %v1037, %v1033
      %v1039 = vrot.slane %v1038, 4
      %v1041 = vshll.u32 %v720, 16
      %v1043 = vrot.slane %v1041, 5
      %v1044 = vsel %vm732, %v1039, %v1043
      %v1046 = vshrl.u32 %v721, 16
      %v1048 = vrot.slane %v1046, 4
      %v1049 = vshll.u32 %v721, 16
      %v1051 = vrot.slane %v1049, 5
      %v1052 = vor.u32 %v1048, %v1051
      %v1053 = vrot.slane %v1052, 4
      %v1055 = vshll.u32 %v722, 16
      %v1057 = vrot.slane %v1055, 5
      %v1058 = vsel %vm732, %v1053, %v1057
      %v1059 = vshrl.u32 %v722, 16
      %v1061 = vrot.slane %v1059, 4
      %v1062 = vor.u32 %v1061, %v1057
      %v1063 = vrot.slane %v1062, 4
      %v1065 = vshll.u32 %v723, 16
      %v1067 = vrot.slane %v1065, 5
      %v1068 = vsel %vm732, %v1063, %v1067
      %v1070 = vshrl.u32 %v724, 16
      %v1072 = vrot.slane %v1070, 4
      %v1073 = vshll.u32 %v724, 16
      %v1075 = vrot.slane %v1073, 5
      %v1076 = vor.u32 %v1072, %v1075
      %v1077 = vrot.slane %v1076, 4
      %v1079 = vshll.u32 %v725, 16
      %v1081 = vrot.slane %v1079, 5
      %v1082 = vsel %vm732, %v1077, %v1081
      %v1083 = vshrl.u32 %v725, 16
      %v1085 = vrot.slane %v1083, 4
      %v1086 = vor.u32 %v1085, %v1081
      %v1087 = vrot.slane %v1086, 4
      %v1089 = vshll.u32 %v726, 16
      %v1091 = vrot.slane %v1089, 5
      %v1092 = vsel %vm732, %v1087, %v1091
      %v1094 = vshrl.u32 %v727, 16
      %v1096 = vrot.slane %v1094, 4
      %v1097 = vshll.u32 %v727, 16
      %v1099 = vrot.slane %v1097, 5
      %v1100 = vor.u32 %v1096, %v1099
      %v1101 = vrot.slane %v1100, 4
      %v1103 = vshll.u32 %v728, 16
      %v1105 = vrot.slane %v1103, 5
      %v1106 = vsel %vm732, %v1101, %v1105
      %v1107 = vshrl.u32 %v728, 16
      %v1109 = vrot.slane %v1107, 4
      %v1110 = vor.u32 %v1109, %v1105
      %v1111 = vrot.slane %v1110, 4
      %v1113 = vshll.u32 %v729, 16
      %v1115 = vrot.slane %v1113, 5
      %v1116 = vsel %vm732, %v1111, %v1115
      %v1117 = vunpack.c.l.b16 %v746
      %v1118 = vunpack.c.l.b16 %v756
      %v1119 = vunpack.c.l.b16 %v770
      %v1120 = vunpack.c.l.b16 %v780
      %v1121 = vunpack.c.l.b16 %v794
      %v1122 = vunpack.c.l.b16 %v804
      %v1123 = vunpack.c.l.b16 %v818
      %v1124 = vunpack.c.l.b16 %v828
      %v1125 = vunpack.c.l.b16 %v842
      %v1126 = vunpack.c.l.b16 %v852
      %v1127 = vunpack.c.l.b16 %v866
      %v1128 = vunpack.c.l.b16 %v876
      %v1129 = vunpack.c.l.b16 %v890
      %v1130 = vunpack.c.l.b16 %v900
      %v1131 = vunpack.c.l.b16 %v914
      %v1132 = vunpack.c.l.b16 %v924
      %v1133 = vunpack.c.l.b16 %v938
      %v1134 = vunpack.c.l.b16 %v948
      %v1135 = vunpack.c.l.b16 %v962
      %v1136 = vunpack.c.l.b16 %v972
      %v1137 = vunpack.c.l.b16 %v986
      %v1138 = vunpack.c.l.b16 %v996
      %v1139 = vunpack.c.l.b16 %v1010
      %v1140 = vunpack.c.l.b16 %v1020
      %v1141 = vunpack.c.l.b16 %v1034
      %v1142 = vunpack.c.l.b16 %v1044
      %v1143 = vunpack.c.l.b16 %v1058
      %v1144 = vunpack.c.l.b16 %v1068
      %v1145 = vunpack.c.l.b16 %v1082
      %v1146 = vunpack.c.l.b16 %v1092
      %v1147 = vunpack.c.l.b16 %v1106
      %v1148 = vunpack.c.l.b16 %v1116
      %v1149 = vpack.c.b16 %v1118, %v1117
      %v1150 = vpack.c.b16 %v1120, %v1119
      %v1151 = vpack.c.b16 %v1122, %v1121
      %v1152 = vpack.c.b16 %v1124, %v1123
      %v1153 = vpack.c.b16 %v1126, %v1125
      %v1154 = vpack.c.b16 %v1128, %v1127
      %v1155 = vpack.c.b16 %v1130, %v1129
      %v1156 = vpack.c.b16 %v1132, %v1131
      %v1157 = vpack.c.b16 %v1134, %v1133
      %v1158 = vpack.c.b16 %v1136, %v1135
      %v1159 = vpack.c.b16 %v1138, %v1137
      %v1160 = vpack.c.b16 %v1140, %v1139
      %v1161 = vpack.c.b16 %v1142, %v1141
      %v1162 = vpack.c.b16 %v1144, %v1143
      %v1163 = vpack.c.b16 %v1146, %v1145
      %v1164 = vpack.c.b16 %v1148, %v1147
      %1165 = vrot.lane.b32.xlu0 %v1149, 4
      %v1166 = vpop.permute.xlu0 %1165
      %1167 = vrot.lane.b32.xlu0 %v1150, 4
      %v1168 = vpop.permute.xlu0 %1167
      %1169 = vrot.lane.b32.xlu0 %v1151, 4
      %v1170 = vpop.permute.xlu0 %1169
      %1171 = vrot.lane.b32.xlu0 %v1152, 4
      %v1172 = vpop.permute.xlu0 %1171
      %1173 = vrot.lane.b32.xlu0 %v1153, 4
      %v1174 = vpop.permute.xlu0 %1173
      %1175 = vrot.lane.b32.xlu0 %v1154, 4
      %v1176 = vpop.permute.xlu0 %1175
      %1177 = vrot.lane.b32.xlu0 %v1155, 4
      %v1178 = vpop.permute.xlu0 %1177
      %1179 = vrot.lane.b32.xlu0 %v1156, 4
      %v1180 = vpop.permute.xlu0 %1179
      %1181 = vrot.lane.b32.xlu0 %v1157, 4
      %v1182 = vpop.permute.xlu0 %1181
      %1183 = vrot.lane.b32.xlu0 %v1158, 4
      %v1184 = vpop.permute.xlu0 %1183
      %1185 = vrot.lane.b32.xlu0 %v1159, 4
      %v1186 = vpop.permute.xlu0 %1185
      %1187 = vrot.lane.b32.xlu0 %v1160, 4
      %v1188 = vpop.permute.xlu0 %1187
      %1189 = vrot.lane.b32.xlu0 %v1161, 4
      %v1190 = vpop.permute.xlu0 %1189
      %1191 = vrot.lane.b32.xlu0 %v1162, 4
      %v1192 = vpop.permute.xlu0 %1191
      %1193 = vrot.lane.b32.xlu0 %v1163, 4
      %v1194 = vpop.permute.xlu0 %1193
      %1195 = vrot.lane.b32.xlu0 %v1164, 4
      %v1196 = vpop.permute.xlu0 %1195
      %vm1213 = vcmask 64544
      %1214 = vst.msk [vmem:[#allocation3] sm:$0xff] %vm1213, %v1166
      %1215 = vst.msk [vmem:[#allocation3 + $0x8] sm:$0xff] %vm1213, %v1168
      %1216 = vst.msk [vmem:[#allocation3 + $0x10] sm:$0xff] %vm1213, %v1170
      %1217 = vst.msk [vmem:[#allocation3 + $0x18] sm:$0xff] %vm1213, %v1172
      %1218 = vst.msk [vmem:[#allocation3 + $0x20] sm:$0xff] %vm1213, %v1174
      %1219 = vst.msk [vmem:[#allocation3 + $0x28] sm:$0xff] %vm1213, %v1176
      %1220 = vst.msk [vmem:[#allocation3 + $0x30] sm:$0xff] %vm1213, %v1178
      %1221 = vst.msk [vmem:[#allocation3 + $0x38] sm:$0xff] %vm1213, %v1180
      %1222 = vst.msk [vmem:[#allocation3 + $0x40] sm:$0xff] %vm1213, %v1182
      %1223 = vst.msk [vmem:[#allocation3 + $0x48] sm:$0xff] %vm1213, %v1184
      %1224 = vst.msk [vmem:[#allocation3 + $0x50] sm:$0xff] %vm1213, %v1186
      %1225 = vst.msk [vmem:[#allocation3 + $0x58] sm:$0xff] %vm1213, %v1188
      %1226 = vst.msk [vmem:[#allocation3 + $0x60] sm:$0xff] %vm1213, %v1190
      %1227 = vst.msk [vmem:[#allocation3 + $0x68] sm:$0xff] %vm1213, %v1192
      %1228 = vst.msk [vmem:[#allocation3 + $0x70] sm:$0xff] %vm1213, %v1194
      %1229 = vst.msk [vmem:[#allocation3 + $0x78] sm:$0xff] %vm1213, %v1196
      %v1230 = vld [vmem:[#allocation2] sm:$0xe]
      %v1231 = vld [vmem:[#allocation2 + $0x4] sm:$0xf]
      %v1232 = vld [vmem:[#allocation2 + $0x8] sm:$0x1]
      %v1233 = vld [vmem:[#allocation2 + $0xc] sm:$0xe]
      %v1234 = vld [vmem:[#allocation2 + $0x10] sm:$0xf]
      %v1235 = vld [vmem:[#allocation2 + $0x14] sm:$0x1]
      %v1236 = vld [vmem:[#allocation2 + $0x18] sm:$0xe]
      %v1237 = vld [vmem:[#allocation2 + $0x1c] sm:$0xf]
      %v1238 = vld [vmem:[#allocation2 + $0x20] sm:$0x1]
      %v1239 = vld [vmem:[#allocation2 + $0x24] sm:$0xe]
      %v1240 = vld [vmem:[#allocation2 + $0x28] sm:$0xf]
      %v1241 = vld [vmem:[#allocation2 + $0x2c] sm:$0x1]
      %v1242 = vld [vmem:[#allocation2 + $0x30] sm:$0xe]
      %v1243 = vld [vmem:[#allocation2 + $0x34] sm:$0xf]
      %v1244 = vld [vmem:[#allocation2 + $0x38] sm:$0x1]
      %v1245 = vld [vmem:[#allocation2 + $0x3c] sm:$0xe]
      %v1246 = vld [vmem:[#allocation2 + $0x40] sm:$0xf]
      %v1247 = vld [vmem:[#allocation2 + $0x44] sm:$0x1]
      %v1248 = vld [vmem:[#allocation2 + $0x48] sm:$0xe]
      %v1249 = vld [vmem:[#allocation2 + $0x4c] sm:$0xf]
      %v1250 = vld [vmem:[#allocation2 + $0x50] sm:$0x1]
      %v1251 = vld [vmem:[#allocation2 + $0x54] sm:$0xe]
      %v1252 = vld [vmem:[#allocation2 + $0x58] sm:$0xf]
      %v1253 = vld [vmem:[#allocation2 + $0x5c] sm:$0x1]
      %v1254 = vld [vmem:[#allocation2 + $0x60] sm:$0xe]
      %v1255 = vld [vmem:[#allocation2 + $0x64] sm:$0xf]
      %v1256 = vld [vmem:[#allocation2 + $0x68] sm:$0x1]
      %v1257 = vld [vmem:[#allocation2 + $0x6c] sm:$0xe]
      %v1258 = vld [vmem:[#allocation2 + $0x70] sm:$0xf]
      %v1259 = vld [vmem:[#allocation2 + $0x74] sm:$0x1]
      %v1260 = vld [vmem:[#allocation2 + $0x78] sm:$0xe]
      %v1261 = vld [vmem:[#allocation2 + $0x7c] sm:$0xf]
      %v1262 = vld [vmem:[#allocation2 + $0x80] sm:$0x1]
      %v1263 = vld [vmem:[#allocation2 + $0x84] sm:$0xe]
      %v1264 = vld [vmem:[#allocation2 + $0x88] sm:$0xf]
      %v1265 = vld [vmem:[#allocation2 + $0x8c] sm:$0x1]
      %v1266 = vld [vmem:[#allocation2 + $0x90] sm:$0xe]
      %v1267 = vld [vmem:[#allocation2 + $0x94] sm:$0xf]
      %v1268 = vld [vmem:[#allocation2 + $0x98] sm:$0x1]
      %v1269 = vld [vmem:[#allocation2 + $0x9c] sm:$0xe]
      %v1270 = vld [vmem:[#allocation2 + $0xa0] sm:$0xf]
      %v1271 = vld [vmem:[#allocation2 + $0xa4] sm:$0x1]
      %v1272 = vld [vmem:[#allocation2 + $0xa8] sm:$0xe]
      %v1273 = vld [vmem:[#allocation2 + $0xac] sm:$0xf]
      %v1274 = vld [vmem:[#allocation2 + $0xb0] sm:$0x1]
      %v1275 = vld [vmem:[#allocation2 + $0xb4] sm:$0xe]
      %v1276 = vld [vmem:[#allocation2 + $0xb8] sm:$0xf]
      %v1277 = vld [vmem:[#allocation2 + $0xbc] sm:$0x1]
      %vm1326 = vcmask 1042432
      %vm1327 = vcmask 1046532
      %vm1328 = vmor %vm1326, %vm1327
      %v1329 = vrot.slane %v1230, 5
      %v1330 = vrot.slane %v1329, 4
      %v1331 = vrot.slane %v1231, 5
      %v1332 = vsel %vm1328, %v1330, %v1331
      %v1333 = vrot.slane %v1331, 4
      %v1334 = vrot.slane %v1232, 5
      %v1335 = vsel %vm1328, %v1333, %v1334
      %v1336 = vrot.slane %v1233, 5
      %v1337 = vrot.slane %v1336, 4
      %v1338 = vrot.slane %v1234, 5
      %v1339 = vsel %vm1328, %v1337, %v1338
      %v1340 = vrot.slane %v1338, 4
      %v1341 = vrot.slane %v1235, 5
      %v1342 = vsel %vm1328, %v1340, %v1341
      %v1343 = vrot.slane %v1236, 5
      %v1344 = vrot.slane %v1343, 4
      %v1345 = vrot.slane %v1237, 5
      %v1346 = vsel %vm1328, %v1344, %v1345
      %v1347 = vrot.slane %v1345, 4
      %v1348 = vrot.slane %v1238, 5
      %v1349 = vsel %vm1328, %v1347, %v1348
      %v1350 = vrot.slane %v1239, 5
      %v1351 = vrot.slane %v1350, 4
      %v1352 = vrot.slane %v1240, 5
      %v1353 = vsel %vm1328, %v1351, %v1352
      %v1354 = vrot.slane %v1352, 4
      %v1355 = vrot.slane %v1241, 5
      %v1356 = vsel %vm1328, %v1354, %v1355
      %v1357 = vrot.slane %v1242, 5
      %v1358 = vrot.slane %v1357, 4
      %v1359 = vrot.slane %v1243, 5
      %v1360 = vsel %vm1328, %v1358, %v1359
      %v1361 = vrot.slane %v1359, 4
      %v1362 = vrot.slane %v1244, 5
      %v1363 = vsel %vm1328, %v1361, %v1362
      %v1364 = vrot.slane %v1245, 5
      %v1365 = vrot.slane %v1364, 4
      %v1366 = vrot.slane %v1246, 5
      %v1367 = vsel %vm1328, %v1365, %v1366
      %v1368 = vrot.slane %v1366, 4
      %v1369 = vrot.slane %v1247, 5
      %v1370 = vsel %vm1328, %v1368, %v1369
      %v1371 = vrot.slane %v1248, 5
      %v1372 = vrot.slane %v1371, 4
      %v1373 = vrot.slane %v1249, 5
      %v1374 = vsel %vm1328, %v1372, %v1373
      %v1375 = vrot.slane %v1373, 4
      %v1376 = vrot.slane %v1250, 5
      %v1377 = vsel %vm1328, %v1375, %v1376
      %v1378 = vrot.slane %v1251, 5
      %v1379 = vrot.slane %v1378, 4
      %v1380 = vrot.slane %v1252, 5
      %v1381 = vsel %vm1328, %v1379, %v1380
      %v1382 = vrot.slane %v1380, 4
      %v1383 = vrot.slane %v1253, 5
      %v1384 = vsel %vm1328, %v1382, %v1383
      %v1385 = vrot.slane %v1254, 5
      %v1386 = vrot.slane %v1385, 4
      %v1387 = vrot.slane %v1255, 5
      %v1388 = vsel %vm1328, %v1386, %v1387
      %v1389 = vrot.slane %v1387, 4
      %v1390 = vrot.slane %v1256, 5
      %v1391 = vsel %vm1328, %v1389, %v1390
      %v1392 = vrot.slane %v1257, 5
      %v1393 = vrot.slane %v1392, 4
      %v1394 = vrot.slane %v1258, 5
      %v1395 = vsel %vm1328, %v1393, %v1394
      %v1396 = vrot.slane %v1394, 4
      %v1397 = vrot.slane %v1259, 5
      %v1398 = vsel %vm1328, %v1396, %v1397
      %v1399 = vrot.slane %v1260, 5
      %v1400 = vrot.slane %v1399, 4
      %v1401 = vrot.slane %v1261, 5
      %v1402 = vsel %vm1328, %v1400, %v1401
      %v1403 = vrot.slane %v1401, 4
      %v1404 = vrot.slane %v1262, 5
      %v1405 = vsel %vm1328, %v1403, %v1404
      %v1406 = vrot.slane %v1263, 5
      %v1407 = vrot.slane %v1406, 4
      %v1408 = vrot.slane %v1264, 5
      %v1409 = vsel %vm1328, %v1407, %v1408
      %v1410 = vrot.slane %v1408, 4
      %v1411 = vrot.slane %v1265, 5
      %v1412 = vsel %vm1328, %v1410, %v1411
      %v1413 = vrot.slane %v1266, 5
      %v1414 = vrot.slane %v1413, 4
      %v1415 = vrot.slane %v1267, 5
      %v1416 = vsel %vm1328, %v1414, %v1415
      %v1417 = vrot.slane %v1415, 4
      %v1418 = vrot.slane %v1268, 5
      %v1419 = vsel %vm1328, %v1417, %v1418
      %v1420 = vrot.slane %v1269, 5
      %v1421 = vrot.slane %v1420, 4
      %v1422 = vrot.slane %v1270, 5
      %v1423 = vsel %vm1328, %v1421, %v1422
      %v1424 = vrot.slane %v1422, 4
      %v1425 = vrot.slane %v1271, 5
      %v1426 = vsel %vm1328, %v1424, %v1425
      %v1427 = vrot.slane %v1272, 5
      %v1428 = vrot.slane %v1427, 4
      %v1429 = vrot.slane %v1273, 5
      %v1430 = vsel %vm1328, %v1428, %v1429
      %v1431 = vrot.slane %v1429, 4
      %v1432 = vrot.slane %v1274, 5
      %v1433 = vsel %vm1328, %v1431, %v1432
      %v1434 = vrot.slane %v1275, 5
      %v1435 = vrot.slane %v1434, 4
      %v1436 = vrot.slane %v1276, 5
      %v1437 = vsel %vm1328, %v1435, %v1436
      %v1438 = vrot.slane %v1436, 4
      %v1439 = vrot.slane %v1277, 5
      %v1440 = vsel %vm1328, %v1438, %v1439
      %v1441 = vunpack.c.l.b16 %v1332
      %v1442 = vunpack.c.l.b16 %v1335
      %v1443 = vunpack.c.l.b16 %v1339
      %v1444 = vunpack.c.l.b16 %v1342
      %v1445 = vunpack.c.l.b16 %v1346
      %v1446 = vunpack.c.l.b16 %v1349
      %v1447 = vunpack.c.l.b16 %v1353
      %v1448 = vunpack.c.l.b16 %v1356
      %v1449 = vunpack.c.l.b16 %v1360
      %v1450 = vunpack.c.l.b16 %v1363
      %v1451 = vunpack.c.l.b16 %v1367
      %v1452 = vunpack.c.l.b16 %v1370
      %v1453 = vunpack.c.l.b16 %v1374
      %v1454 = vunpack.c.l.b16 %v1377
      %v1455 = vunpack.c.l.b16 %v1381
      %v1456 = vunpack.c.l.b16 %v1384
      %v1457 = vunpack.c.l.b16 %v1388
      %v1458 = vunpack.c.l.b16 %v1391
      %v1459 = vunpack.c.l.b16 %v1395
      %v1460 = vunpack.c.l.b16 %v1398
      %v1461 = vunpack.c.l.b16 %v1402
      %v1462 = vunpack.c.l.b16 %v1405
      %v1463 = vunpack.c.l.b16 %v1409
      %v1464 = vunpack.c.l.b16 %v1412
      %v1465 = vunpack.c.l.b16 %v1416
      %v1466 = vunpack.c.l.b16 %v1419
      %v1467 = vunpack.c.l.b16 %v1423
      %v1468 = vunpack.c.l.b16 %v1426
      %v1469 = vunpack.c.l.b16 %v1430
      %v1470 = vunpack.c.l.b16 %v1433
      %v1471 = vunpack.c.l.b16 %v1437
      %v1472 = vunpack.c.l.b16 %v1440
      %v1473 = vpack.c.b16 %v1442, %v1441
      %v1474 = vpack.c.b16 %v1444, %v1443
      %v1475 = vpack.c.b16 %v1446, %v1445
      %v1476 = vpack.c.b16 %v1448, %v1447
      %v1477 = vpack.c.b16 %v1450, %v1449
      %v1478 = vpack.c.b16 %v1452, %v1451
      %v1479 = vpack.c.b16 %v1454, %v1453
      %v1480 = vpack.c.b16 %v1456, %v1455
      %v1481 = vpack.c.b16 %v1458, %v1457
      %v1482 = vpack.c.b16 %v1460, %v1459
      %v1483 = vpack.c.b16 %v1462, %v1461
      %v1484 = vpack.c.b16 %v1464, %v1463
      %v1485 = vpack.c.b16 %v1466, %v1465
      %v1486 = vpack.c.b16 %v1468, %v1467
      %v1487 = vpack.c.b16 %v1470, %v1469
      %v1488 = vpack.c.b16 %v1472, %v1471
      %1489 = vrot.lane.b32.xlu0 %v1473, 8
      %v1490 = vpop.permute.xlu0 %1489
      %1491 = vrot.lane.b32.xlu0 %v1474, 8
      %v1492 = vpop.permute.xlu0 %1491
      %1493 = vrot.lane.b32.xlu0 %v1475, 8
      %v1494 = vpop.permute.xlu0 %1493
      %1495 = vrot.lane.b32.xlu0 %v1476, 8
      %v1496 = vpop.permute.xlu0 %1495
      %1497 = vrot.lane.b32.xlu0 %v1477, 8
      %v1498 = vpop.permute.xlu0 %1497
      %1499 = vrot.lane.b32.xlu0 %v1478, 8
      %v1500 = vpop.permute.xlu0 %1499
      %1501 = vrot.lane.b32.xlu0 %v1479, 8
      %v1502 = vpop.permute.xlu0 %1501
      %1503 = vrot.lane.b32.xlu0 %v1480, 8
      %v1504 = vpop.permute.xlu0 %1503
      %1505 = vrot.lane.b32.xlu0 %v1481, 8
      %v1506 = vpop.permute.xlu0 %1505
      %1507 = vrot.lane.b32.xlu0 %v1482, 8
      %v1508 = vpop.permute.xlu0 %1507
      %1509 = vrot.lane.b32.xlu0 %v1483, 8
      %v1510 = vpop.permute.xlu0 %1509
      %1511 = vrot.lane.b32.xlu0 %v1484, 8
      %v1512 = vpop.permute.xlu0 %1511
      %1513 = vrot.lane.b32.xlu0 %v1485, 8
      %v1514 = vpop.permute.xlu0 %1513
      %1515 = vrot.lane.b32.xlu0 %v1486, 8
      %v1516 = vpop.permute.xlu0 %1515
      %1517 = vrot.lane.b32.xlu0 %v1487, 8
      %v1518 = vpop.permute.xlu0 %1517
      %1519 = vrot.lane.b32.xlu0 %v1488, 8
      %v1520 = vpop.permute.xlu0 %1519
      %vm1537 = vcmask 97344
      %1538 = vst.msk [vmem:[#allocation3] sm:$0xff] %vm1537, %v1490
      %1539 = vst.msk [vmem:[#allocation3 + $0x8] sm:$0xff] %vm1537, %v1492
      %1540 = vst.msk [vmem:[#allocation3 + $0x10] sm:$0xff] %vm1537, %v1494
      %1541 = vst.msk [vmem:[#allocation3 + $0x18] sm:$0xff] %vm1537, %v1496
      %1542 = vst.msk [vmem:[#allocation3 + $0x20] sm:$0xff] %vm1537, %v1498
      %1543 = vst.msk [vmem:[#allocation3 + $0x28] sm:$0xff] %vm1537, %v1500
      %1544 = vst.msk [vmem:[#allocation3 + $0x30] sm:$0xff] %vm1537, %v1502
      %1545 = vst.msk [vmem:[#allocation3 + $0x38] sm:$0xff] %vm1537, %v1504
      %1546 = vst.msk [vmem:[#allocation3 + $0x40] sm:$0xff] %vm1537, %v1506
      %1547 = vst.msk [vmem:[#allocation3 + $0x48] sm:$0xff] %vm1537, %v1508
      %1548 = vst.msk [vmem:[#allocation3 + $0x50] sm:$0xff] %vm1537, %v1510
      %1549 = vst.msk [vmem:[#allocation3 + $0x58] sm:$0xff] %vm1537, %v1512
      %1550 = vst.msk [vmem:[#allocation3 + $0x60] sm:$0xff] %vm1537, %v1514
      %1551 = vst.msk [vmem:[#allocation3 + $0x68] sm:$0xff] %vm1537, %v1516
      %1552 = vst.msk [vmem:[#allocation3 + $0x70] sm:$0xff] %vm1537, %v1518
      %1553 = vst.msk [vmem:[#allocation3 + $0x78] sm:$0xff] %vm1537, %v1520
      %s1554 = scalar_lea.vmem [#allocation2], 12
      %v1555 = vld [vmem:[%s1554] sm:$0xf]
      %v1556 = vld [vmem:[%s1554 + $0x4] sm:$0xf]
      %v1557 = vld [vmem:[%s1554 + $0xc] sm:$0xf]
      %v1558 = vld [vmem:[%s1554 + $0x10] sm:$0xf]
      %v1559 = vld [vmem:[%s1554 + $0x18] sm:$0xf]
      %v1560 = vld [vmem:[%s1554 + $0x1c] sm:$0xf]
      %v1561 = vld [vmem:[%s1554 + $0x24] sm:$0xf]
      %v1562 = vld [vmem:[%s1554 + $0x28] sm:$0xf]
      %v1563 = vld [vmem:[%s1554 + $0x30] sm:$0xf]
      %v1564 = vld [vmem:[%s1554 + $0x34] sm:$0xf]
      %v1565 = vld [vmem:[%s1554 + $0x3c] sm:$0xf]
      %v1566 = vld [vmem:[%s1554 + $0x40] sm:$0xf]
      %v1567 = vld [vmem:[%s1554 + $0x48] sm:$0xf]
      %v1568 = vld [vmem:[%s1554 + $0x4c] sm:$0xf]
      %v1569 = vld [vmem:[%s1554 + $0x54] sm:$0xf]
      %v1570 = vld [vmem:[%s1554 + $0x58] sm:$0xf]
      %v1571 = vld [vmem:[%s1554 + $0x60] sm:$0xf]
      %v1572 = vld [vmem:[%s1554 + $0x64] sm:$0xf]
      %v1573 = vld [vmem:[%s1554 + $0x6c] sm:$0xf]
      %v1574 = vld [vmem:[%s1554 + $0x70] sm:$0xf]
      %v1575 = vld [vmem:[%s1554 + $0x78] sm:$0xf]
      %v1576 = vld [vmem:[%s1554 + $0x7c] sm:$0xf]
      %v1577 = vld [vmem:[%s1554 + $0x84] sm:$0xf]
      %v1578 = vld [vmem:[%s1554 + $0x88] sm:$0xf]
      %v1579 = vld [vmem:[%s1554 + $0x90] sm:$0xf]
      %v1580 = vld [vmem:[%s1554 + $0x94] sm:$0xf]
      %v1581 = vld [vmem:[%s1554 + $0x9c] sm:$0xf]
      %v1582 = vld [vmem:[%s1554 + $0xa0] sm:$0xf]
      %v1583 = vld [vmem:[%s1554 + $0xa8] sm:$0xf]
      %v1584 = vld [vmem:[%s1554 + $0xac] sm:$0xf]
      %v1585 = vld [vmem:[%s1554 + $0xb4] sm:$0xf]
      %v1586 = vld [vmem:[%s1554 + $0xb8] sm:$0xf]
      %v1619 = vunpack.c.l.b16 %v1555
      %v1620 = vunpack.c.l.b16 %v1556
      %v1621 = vunpack.c.l.b16 %v1557
      %v1622 = vunpack.c.l.b16 %v1558
      %v1623 = vunpack.c.l.b16 %v1559
      %v1624 = vunpack.c.l.b16 %v1560
      %v1625 = vunpack.c.l.b16 %v1561
      %v1626 = vunpack.c.l.b16 %v1562
      %v1627 = vunpack.c.l.b16 %v1563
      %v1628 = vunpack.c.l.b16 %v1564
      %v1629 = vunpack.c.l.b16 %v1565
      %v1630 = vunpack.c.l.b16 %v1566
      %v1631 = vunpack.c.l.b16 %v1567
      %v1632 = vunpack.c.l.b16 %v1568
      %v1633 = vunpack.c.l.b16 %v1569
      %v1634 = vunpack.c.l.b16 %v1570
      %v1635 = vunpack.c.l.b16 %v1571
      %v1636 = vunpack.c.l.b16 %v1572
      %v1637 = vunpack.c.l.b16 %v1573
      %v1638 = vunpack.c.l.b16 %v1574
      %v1639 = vunpack.c.l.b16 %v1575
      %v1640 = vunpack.c.l.b16 %v1576
      %v1641 = vunpack.c.l.b16 %v1577
      %v1642 = vunpack.c.l.b16 %v1578
      %v1643 = vunpack.c.l.b16 %v1579
      %v1644 = vunpack.c.l.b16 %v1580
      %v1645 = vunpack.c.l.b16 %v1581
      %v1646 = vunpack.c.l.b16 %v1582
      %v1647 = vunpack.c.l.b16 %v1583
      %v1648 = vunpack.c.l.b16 %v1584
      %v1649 = vunpack.c.l.b16 %v1585
      %v1650 = vunpack.c.l.b16 %v1586
      %v1651 = vpack.c.b16 %v1620, %v1619
      %v1652 = vpack.c.b16 %v1622, %v1621
      %v1653 = vpack.c.b16 %v1624, %v1623
      %v1654 = vpack.c.b16 %v1626, %v1625
      %v1655 = vpack.c.b16 %v1628, %v1627
      %v1656 = vpack.c.b16 %v1630, %v1629
      %v1657 = vpack.c.b16 %v1632, %v1631
      %v1658 = vpack.c.b16 %v1634, %v1633
      %v1659 = vpack.c.b16 %v1636, %v1635
      %v1660 = vpack.c.b16 %v1638, %v1637
      %v1661 = vpack.c.b16 %v1640, %v1639
      %v1662 = vpack.c.b16 %v1642, %v1641
      %v1663 = vpack.c.b16 %v1644, %v1643
      %v1664 = vpack.c.b16 %v1646, %v1645
      %v1665 = vpack.c.b16 %v1648, %v1647
      %v1666 = vpack.c.b16 %v1650, %v1649
      %1667 = vrot.lane.b32.xlu0 %v1651, 12
      %v1668 = vpop.permute.xlu0 %1667
      %1669 = vrot.lane.b32.xlu0 %v1652, 12
      %v1670 = vpop.permute.xlu0 %1669
      %1671 = vrot.lane.b32.xlu0 %v1653, 12
      %v1672 = vpop.permute.xlu0 %1671
      %1673 = vrot.lane.b32.xlu0 %v1654, 12
      %v1674 = vpop.permute.xlu0 %1673
      %1675 = vrot.lane.b32.xlu0 %v1655, 12
      %v1676 = vpop.permute.xlu0 %1675
      %1677 = vrot.lane.b32.xlu0 %v1656, 12
      %v1678 = vpop.permute.xlu0 %1677
      %1679 = vrot.lane.b32.xlu0 %v1657, 12
      %v1680 = vpop.permute.xlu0 %1679
      %1681 = vrot.lane.b32.xlu0 %v1658, 12
      %v1682 = vpop.permute.xlu0 %1681
      %1683 = vrot.lane.b32.xlu0 %v1659, 12
      %v1684 = vpop.permute.xlu0 %1683
      %1685 = vrot.lane.b32.xlu0 %v1660, 12
      %v1686 = vpop.permute.xlu0 %1685
      %1687 = vrot.lane.b32.xlu0 %v1661, 12
      %v1688 = vpop.permute.xlu0 %1687
      %1689 = vrot.lane.b32.xlu0 %v1662, 12
      %v1690 = vpop.permute.xlu0 %1689
      %1691 = vrot.lane.b32.xlu0 %v1663, 12
      %v1692 = vpop.permute.xlu0 %1691
      %1693 = vrot.lane.b32.xlu0 %v1664, 12
      %v1694 = vpop.permute.xlu0 %1693
      %1695 = vrot.lane.b32.xlu0 %v1665, 12
      %v1696 = vpop.permute.xlu0 %1695
      %1697 = vrot.lane.b32.xlu0 %v1666, 12
      %v1698 = vpop.permute.xlu0 %1697
      %vm1715 = vcmask 130144
      %1716 = vst.msk [vmem:[#allocation3] sm:$0xff] %vm1715, %v1668
      %1717 = vst.msk [vmem:[#allocation3 + $0x8] sm:$0xff] %vm1715, %v1670
      %1718 = vst.msk [vmem:[#allocation3 + $0x10] sm:$0xff] %vm1715, %v1672
      %1719 = vst.msk [vmem:[#allocation3 + $0x18] sm:$0xff] %vm1715, %v1674
      %1720 = vst.msk [vmem:[#allocation3 + $0x20] sm:$0xff] %vm1715, %v1676
      %1721 = vst.msk [vmem:[#allocation3 + $0x28] sm:$0xff] %vm1715, %v1678
      %1722 = vst.msk [vmem:[#allocation3 + $0x30] sm:$0xff] %vm1715, %v1680
      %1723 = vst.msk [vmem:[#allocation3 + $0x38] sm:$0xff] %vm1715, %v1682
      %1724 = vst.msk [vmem:[#allocation3 + $0x40] sm:$0xff] %vm1715, %v1684
      %1725 = vst.msk [vmem:[#allocation3 + $0x48] sm:$0xff] %vm1715, %v1686
      %1726 = vst.msk [vmem:[#allocation3 + $0x50] sm:$0xff] %vm1715, %v1688
      %1727 = vst.msk [vmem:[#allocation3 + $0x58] sm:$0xff] %vm1715, %v1690
      %1728 = vst.msk [vmem:[#allocation3 + $0x60] sm:$0xff] %vm1715, %v1692
      %1729 = vst.msk [vmem:[#allocation3 + $0x68] sm:$0xff] %vm1715, %v1694
      %1730 = vst.msk [vmem:[#allocation3 + $0x70] sm:$0xff] %vm1715, %v1696
      %1731 = vst.msk [vmem:[#allocation3 + $0x78] sm:$0xff] %vm1715, %v1698
      %v1732 = vld [vmem:[%s1554] sm:$0xf]
      %v1733 = vld [vmem:[%s1554 + $0x4] sm:$0xf]
      %v1734 = vld [vmem:[%s1554 + $0x8] sm:$0x1]
      %v1735 = vld [vmem:[%s1554 + $0xc] sm:$0xf]
      %v1736 = vld [vmem:[%s1554 + $0x10] sm:$0xf]
      %v1737 = vld [vmem:[%s1554 + $0x14] sm:$0x1]
      %v1738 = vld [vmem:[%s1554 + $0x18] sm:$0xf]
      %v1739 = vld [vmem:[%s1554 + $0x1c] sm:$0xf]
      %v1740 = vld [vmem:[%s1554 + $0x20] sm:$0x1]
      %v1741 = vld [vmem:[%s1554 + $0x24] sm:$0xf]
      %v1742 = vld [vmem:[%s1554 + $0x28] sm:$0xf]
      %v1743 = vld [vmem:[%s1554 + $0x2c] sm:$0x1]
      %v1744 = vld [vmem:[%s1554 + $0x30] sm:$0xf]
      %v1745 = vld [vmem:[%s1554 + $0x34] sm:$0xf]
      %v1746 = vld [vmem:[%s1554 + $0x38] sm:$0x1]
      %v1747 = vld [vmem:[%s1554 + $0x3c] sm:$0xf]
      %v1748 = vld [vmem:[%s1554 + $0x40] sm:$0xf]
      %v1749 = vld [vmem:[%s1554 + $0x44] sm:$0x1]
      %v1750 = vld [vmem:[%s1554 + $0x48] sm:$0xf]
      %v1751 = vld [vmem:[%s1554 + $0x4c] sm:$0xf]
      %v1752 = vld [vmem:[%s1554 + $0x50] sm:$0x1]
      %v1753 = vld [vmem:[%s1554 + $0x54] sm:$0xf]
      %v1754 = vld [vmem:[%s1554 + $0x58] sm:$0xf]
      %v1755 = vld [vmem:[%s1554 + $0x5c] sm:$0x1]
      %v1756 = vld [vmem:[%s1554 + $0x60] sm:$0xf]
      %v1757 = vld [vmem:[%s1554 + $0x64] sm:$0xf]
      %v1758 = vld [vmem:[%s1554 + $0x68] sm:$0x1]
      %v1759 = vld [vmem:[%s1554 + $0x6c] sm:$0xf]
      %v1760 = vld [vmem:[%s1554 + $0x70] sm:$0xf]
      %v1761 = vld [vmem:[%s1554 + $0x74] sm:$0x1]
      %v1762 = vld [vmem:[%s1554 + $0x78] sm:$0xf]
      %v1763 = vld [vmem:[%s1554 + $0x7c] sm:$0xf]
      %v1764 = vld [vmem:[%s1554 + $0x80] sm:$0x1]
      %v1765 = vld [vmem:[%s1554 + $0x84] sm:$0xf]
      %v1766 = vld [vmem:[%s1554 + $0x88] sm:$0xf]
      %v1767 = vld [vmem:[%s1554 + $0x8c] sm:$0x1]
      %v1768 = vld [vmem:[%s1554 + $0x90] sm:$0xf]
      %v1769 = vld [vmem:[%s1554 + $0x94] sm:$0xf]
      %v1770 = vld [vmem:[%s1554 + $0x98] sm:$0x1]
      %v1771 = vld [vmem:[%s1554 + $0x9c] sm:$0xf]
      %v1772 = vld [vmem:[%s1554 + $0xa0] sm:$0xf]
      %v1773 = vld [vmem:[%s1554 + $0xa4] sm:$0x1]
      %v1774 = vld [vmem:[%s1554 + $0xa8] sm:$0xf]
      %v1775 = vld [vmem:[%s1554 + $0xac] sm:$0xf]
      %v1776 = vld [vmem:[%s1554 + $0xb0] sm:$0x1]
      %v1777 = vld [vmem:[%s1554 + $0xb4] sm:$0xf]
      %v1778 = vld [vmem:[%s1554 + $0xb8] sm:$0xf]
      %v1779 = vld [vmem:[%s1554 + $0xbc] sm:$0x1]
      %v1781 = vshrl.u32 %v1732, 16
      %v1783 = vrot.slane %v1781, 4
      %v1784 = vshll.u32 %v1732, 16
      %v1786 = vrot.slane %v1784, 5
      %v1787 = vor.u32 %v1783, %v1786
      %v1788 = vrot.slane %v1787, 4
      %v1790 = vshll.u32 %v1733, 16
      %v1792 = vrot.slane %v1790, 5
      %v1793 = vsel %vm732, %v1788, %v1792
      %v1794 = vshrl.u32 %v1733, 16
      %v1796 = vrot.slane %v1794, 4
      %v1797 = vor.u32 %v1796, %v1792
      %v1798 = vrot.slane %v1797, 4
      %v1800 = vshll.u32 %v1734, 16
      %v1802 = vrot.slane %v1800, 5
      %v1803 = vsel %vm732, %v1798, %v1802
      %v1805 = vshrl.u32 %v1735, 16
      %v1807 = vrot.slane %v1805, 4
      %v1808 = vshll.u32 %v1735, 16
      %v1810 = vrot.slane %v1808, 5
      %v1811 = vor.u32 %v1807, %v1810
      %v1812 = vrot.slane %v1811, 4
      %v1814 = vshll.u32 %v1736, 16
      %v1816 = vrot.slane %v1814, 5
      %v1817 = vsel %vm732, %v1812, %v1816
      %v1818 = vshrl.u32 %v1736, 16
      %v1820 = vrot.slane %v1818, 4
      %v1821 = vor.u32 %v1820, %v1816
      %v1822 = vrot.slane %v1821, 4
      %v1824 = vshll.u32 %v1737, 16
      %v1826 = vrot.slane %v1824, 5
      %v1827 = vsel %vm732, %v1822, %v1826
      %v1829 = vshrl.u32 %v1738, 16
      %v1831 = vrot.slane %v1829, 4
      %v1832 = vshll.u32 %v1738, 16
      %v1834 = vrot.slane %v1832, 5
      %v1835 = vor.u32 %v1831, %v1834
      %v1836 = vrot.slane %v1835, 4
      %v1838 = vshll.u32 %v1739, 16
      %v1840 = vrot.slane %v1838, 5
      %v1841 = vsel %vm732, %v1836, %v1840
      %v1842 = vshrl.u32 %v1739, 16
      %v1844 = vrot.slane %v1842, 4
      %v1845 = vor.u32 %v1844, %v1840
      %v1846 = vrot.slane %v1845, 4
      %v1848 = vshll.u32 %v1740, 16
      %v1850 = vrot.slane %v1848, 5
      %v1851 = vsel %vm732, %v1846, %v1850
      %v1853 = vshrl.u32 %v1741, 16
      %v1855 = vrot.slane %v1853, 4
      %v1856 = vshll.u32 %v1741, 16
      %v1858 = vrot.slane %v1856, 5
      %v1859 = vor.u32 %v1855, %v1858
      %v1860 = vrot.slane %v1859, 4
      %v1862 = vshll.u32 %v1742, 16
      %v1864 = vrot.slane %v1862, 5
      %v1865 = vsel %vm732, %v1860, %v1864
      %v1866 = vshrl.u32 %v1742, 16
      %v1868 = vrot.slane %v1866, 4
      %v1869 = vor.u32 %v1868, %v1864
      %v1870 = vrot.slane %v1869, 4
      %v1872 = vshll.u32 %v1743, 16
      %v1874 = vrot.slane %v1872, 5
      %v1875 = vsel %vm732, %v1870, %v1874
      %v1877 = vshrl.u32 %v1744, 16
      %v1879 = vrot.slane %v1877, 4
      %v1880 = vshll.u32 %v1744, 16
      %v1882 = vrot.slane %v1880, 5
      %v1883 = vor.u32 %v1879, %v1882
      %v1884 = vrot.slane %v1883, 4
      %v1886 = vshll.u32 %v1745, 16
      %v1888 = vrot.slane %v1886, 5
      %v1889 = vsel %vm732, %v1884, %v1888
      %v1890 = vshrl.u32 %v1745, 16
      %v1892 = vrot.slane %v1890, 4
      %v1893 = vor.u32 %v1892, %v1888
      %v1894 = vrot.slane %v1893, 4
      %v1896 = vshll.u32 %v1746, 16
      %v1898 = vrot.slane %v1896, 5
      %v1899 = vsel %vm732, %v1894, %v1898
      %v1901 = vshrl.u32 %v1747, 16
      %v1903 = vrot.slane %v1901, 4
      %v1904 = vshll.u32 %v1747, 16
      %v1906 = vrot.slane %v1904, 5
      %v1907 = vor.u32 %v1903, %v1906
      %v1908 = vrot.slane %v1907, 4
      %v1910 = vshll.u32 %v1748, 16
      %v1912 = vrot.slane %v1910, 5
      %v1913 = vsel %vm732, %v1908, %v1912
      %v1914 = vshrl.u32 %v1748, 16
      %v1916 = vrot.slane %v1914, 4
      %v1917 = vor.u32 %v1916, %v1912
      %v1918 = vrot.slane %v1917, 4
      %v1920 = vshll.u32 %v1749, 16
      %v1922 = vrot.slane %v1920, 5
      %v1923 = vsel %vm732, %v1918, %v1922
      %v1925 = vshrl.u32 %v1750, 16
      %v1927 = vrot.slane %v1925, 4
      %v1928 = vshll.u32 %v1750, 16
      %v1930 = vrot.slane %v1928, 5
      %v1931 = vor.u32 %v1927, %v1930
      %v1932 = vrot.slane %v1931, 4
      %v1934 = vshll.u32 %v1751, 16
      %v1936 = vrot.slane %v1934, 5
      %v1937 = vsel %vm732, %v1932, %v1936
      %v1938 = vshrl.u32 %v1751, 16
      %v1940 = vrot.slane %v1938, 4
      %v1941 = vor.u32 %v1940, %v1936
      %v1942 = vrot.slane %v1941, 4
      %v1944 = vshll.u32 %v1752, 16
      %v1946 = vrot.slane %v1944, 5
      %v1947 = vsel %vm732, %v1942, %v1946
      %v1949 = vshrl.u32 %v1753, 16
      %v1951 = vrot.slane %v1949, 4
      %v1952 = vshll.u32 %v1753, 16
      %v1954 = vrot.slane %v1952, 5
      %v1955 = vor.u32 %v1951, %v1954
      %v1956 = vrot.slane %v1955, 4
      %v1958 = vshll.u32 %v1754, 16
      %v1960 = vrot.slane %v1958, 5
      %v1961 = vsel %vm732, %v1956, %v1960
      %v1962 = vshrl.u32 %v1754, 16
      %v1964 = vrot.slane %v1962, 4
      %v1965 = vor.u32 %v1964, %v1960
      %v1966 = vrot.slane %v1965, 4
      %v1968 = vshll.u32 %v1755, 16
      %v1970 = vrot.slane %v1968, 5
      %v1971 = vsel %vm732, %v1966, %v1970
      %v1973 = vshrl.u32 %v1756, 16
      %v1975 = vrot.slane %v1973, 4
      %v1976 = vshll.u32 %v1756, 16
      %v1978 = vrot.slane %v1976, 5
      %v1979 = vor.u32 %v1975, %v1978
      %v1980 = vrot.slane %v1979, 4
      %v1982 = vshll.u32 %v1757, 16
      %v1984 = vrot.slane %v1982, 5
      %v1985 = vsel %vm732, %v1980, %v1984
      %v1986 = vshrl.u32 %v1757, 16
      %v1988 = vrot.slane %v1986, 4
      %v1989 = vor.u32 %v1988, %v1984
      %v1990 = vrot.slane %v1989, 4
      %v1992 = vshll.u32 %v1758, 16
      %v1994 = vrot.slane %v1992, 5
      %v1995 = vsel %vm732, %v1990, %v1994
      %v1997 = vshrl.u32 %v1759, 16
      %v1999 = vrot.slane %v1997, 4
      %v2000 = vshll.u32 %v1759, 16
      %v2002 = vrot.slane %v2000, 5
      %v2003 = vor.u32 %v1999, %v2002
      %v2004 = vrot.slane %v2003, 4
      %v2006 = vshll.u32 %v1760, 16
      %v2008 = vrot.slane %v2006, 5
      %v2009 = vsel %vm732, %v2004, %v2008
      %v2010 = vshrl.u32 %v1760, 16
      %v2012 = vrot.slane %v2010, 4
      %v2013 = vor.u32 %v2012, %v2008
      %v2014 = vrot.slane %v2013, 4
      %v2016 = vshll.u32 %v1761, 16
      %v2018 = vrot.slane %v2016, 5
      %v2019 = vsel %vm732, %v2014, %v2018
      %v2021 = vshrl.u32 %v1762, 16
      %v2023 = vrot.slane %v2021, 4
      %v2024 = vshll.u32 %v1762, 16
      %v2026 = vrot.slane %v2024, 5
      %v2027 = vor.u32 %v2023, %v2026
      %v2028 = vrot.slane %v2027, 4
      %v2030 = vshll.u32 %v1763, 16
      %v2032 = vrot.slane %v2030, 5
      %v2033 = vsel %vm732, %v2028, %v2032
      %v2034 = vshrl.u32 %v1763, 16
      %v2036 = vrot.slane %v2034, 4
      %v2037 = vor.u32 %v2036, %v2032
      %v2038 = vrot.slane %v2037, 4
      %v2040 = vshll.u32 %v1764, 16
      %v2042 = vrot.slane %v2040, 5
      %v2043 = vsel %vm732, %v2038, %v2042
      %v2045 = vshrl.u32 %v1765, 16
      %v2047 = vrot.slane %v2045, 4
      %v2048 = vshll.u32 %v1765, 16
      %v2050 = vrot.slane %v2048, 5
      %v2051 = vor.u32 %v2047, %v2050
      %v2052 = vrot.slane %v2051, 4
      %v2054 = vshll.u32 %v1766, 16
      %v2056 = vrot.slane %v2054, 5
      %v2057 = vsel %vm732, %v2052, %v2056
      %v2058 = vshrl.u32 %v1766, 16
      %v2060 = vrot.slane %v2058, 4
      %v2061 = vor.u32 %v2060, %v2056
      %v2062 = vrot.slane %v2061, 4
      %v2064 = vshll.u32 %v1767, 16
      %v2066 = vrot.slane %v2064, 5
      %v2067 = vsel %vm732, %v2062, %v2066
      %v2069 = vshrl.u32 %v1768, 16
      %v2071 = vrot.slane %v2069, 4
      %v2072 = vshll.u32 %v1768, 16
      %v2074 = vrot.slane %v2072, 5
      %v2075 = vor.u32 %v2071, %v2074
      %v2076 = vrot.slane %v2075, 4
      %v2078 = vshll.u32 %v1769, 16
      %v2080 = vrot.slane %v2078, 5
      %v2081 = vsel %vm732, %v2076, %v2080
      %v2082 = vshrl.u32 %v1769, 16
      %v2084 = vrot.slane %v2082, 4
      %v2085 = vor.u32 %v2084, %v2080
      %v2086 = vrot.slane %v2085, 4
      %v2088 = vshll.u32 %v1770, 16
      %v2090 = vrot.slane %v2088, 5
      %v2091 = vsel %vm732, %v2086, %v2090
      %v2093 = vshrl.u32 %v1771, 16
      %v2095 = vrot.slane %v2093, 4
      %v2096 = vshll.u32 %v1771, 16
      %v2098 = vrot.slane %v2096, 5
      %v2099 = vor.u32 %v2095, %v2098
      %v2100 = vrot.slane %v2099, 4
      %v2102 = vshll.u32 %v1772, 16
      %v2104 = vrot.slane %v2102, 5
      %v2105 = vsel %vm732, %v2100, %v2104
      %v2106 = vshrl.u32 %v1772, 16
      %v2108 = vrot.slane %v2106, 4
      %v2109 = vor.u32 %v2108, %v2104
      %v2110 = vrot.slane %v2109, 4
      %v2112 = vshll.u32 %v1773, 16
      %v2114 = vrot.slane %v2112, 5
      %v2115 = vsel %vm732, %v2110, %v2114
      %v2117 = vshrl.u32 %v1774, 16
      %v2119 = vrot.slane %v2117, 4
      %v2120 = vshll.u32 %v1774, 16
      %v2122 = vrot.slane %v2120, 5
      %v2123 = vor.u32 %v2119, %v2122
      %v2124 = vrot.slane %v2123, 4
      %v2126 = vshll.u32 %v1775, 16
      %v2128 = vrot.slane %v2126, 5
      %v2129 = vsel %vm732, %v2124, %v2128
      %v2130 = vshrl.u32 %v1775, 16
      %v2132 = vrot.slane %v2130, 4
      %v2133 = vor.u32 %v2132, %v2128
      %v2134 = vrot.slane %v2133, 4
      %v2136 = vshll.u32 %v1776, 16
      %v2138 = vrot.slane %v2136, 5
      %v2139 = vsel %vm732, %v2134, %v2138
      %v2141 = vshrl.u32 %v1777, 16
      %v2143 = vrot.slane %v2141, 4
      %v2144 = vshll.u32 %v1777, 16
      %v2146 = vrot.slane %v2144, 5
      %v2147 = vor.u32 %v2143, %v2146
      %v2148 = vrot.slane %v2147, 4
      %v2150 = vshll.u32 %v1778, 16
      %v2152 = vrot.slane %v2150, 5
      %v2153 = vsel %vm732, %v2148, %v2152
      %v2154 = vshrl.u32 %v1778, 16
      %v2156 = vrot.slane %v2154, 4
      %v2157 = vor.u32 %v2156, %v2152
      %v2158 = vrot.slane %v2157, 4
      %v2160 = vshll.u32 %v1779, 16
      %v2162 = vrot.slane %v2160, 5
      %v2163 = vsel %vm732, %v2158, %v2162
      %v2164 = vunpack.c.l.b16 %v1793
      %v2165 = vunpack.c.l.b16 %v1803
      %v2166 = vunpack.c.l.b16 %v1817
      %v2167 = vunpack.c.l.b16 %v1827
      %v2168 = vunpack.c.l.b16 %v1841
      %v2169 = vunpack.c.l.b16 %v1851
      %v2170 = vunpack.c.l.b16 %v1865
      %v2171 = vunpack.c.l.b16 %v1875
      %v2172 = vunpack.c.l.b16 %v1889
      %v2173 = vunpack.c.l.b16 %v1899
      %v2174 = vunpack.c.l.b16 %v1913
      %v2175 = vunpack.c.l.b16 %v1923
      %v2176 = vunpack.c.l.b16 %v1937
      %v2177 = vunpack.c.l.b16 %v1947
      %v2178 = vunpack.c.l.b16 %v1961
      %v2179 = vunpack.c.l.b16 %v1971
      %v2180 = vunpack.c.l.b16 %v1985
      %v2181 = vunpack.c.l.b16 %v1995
      %v2182 = vunpack.c.l.b16 %v2009
      %v2183 = vunpack.c.l.b16 %v2019
      %v2184 = vunpack.c.l.b16 %v2033
      %v2185 = vunpack.c.l.b16 %v2043
      %v2186 = vunpack.c.l.b16 %v2057
      %v2187 = vunpack.c.l.b16 %v2067
      %v2188 = vunpack.c.l.b16 %v2081
      %v2189 = vunpack.c.l.b16 %v2091
      %v2190 = vunpack.c.l.b16 %v2105
      %v2191 = vunpack.c.l.b16 %v2115
      %v2192 = vunpack.c.l.b16 %v2129
      %v2193 = vunpack.c.l.b16 %v2139
      %v2194 = vunpack.c.l.b16 %v2153
      %v2195 = vunpack.c.l.b16 %v2163
      %v2196 = vpack.c.b16 %v2165, %v2164
      %v2197 = vpack.c.b16 %v2167, %v2166
      %v2198 = vpack.c.b16 %v2169, %v2168
      %v2199 = vpack.c.b16 %v2171, %v2170
      %v2200 = vpack.c.b16 %v2173, %v2172
      %v2201 = vpack.c.b16 %v2175, %v2174
      %v2202 = vpack.c.b16 %v2177, %v2176
      %v2203 = vpack.c.b16 %v2179, %v2178
      %v2204 = vpack.c.b16 %v2181, %v2180
      %v2205 = vpack.c.b16 %v2183, %v2182
      %v2206 = vpack.c.b16 %v2185, %v2184
      %v2207 = vpack.c.b16 %v2187, %v2186
      %v2208 = vpack.c.b16 %v2189, %v2188
      %v2209 = vpack.c.b16 %v2191, %v2190
      %v2210 = vpack.c.b16 %v2193, %v2192
      %v2211 = vpack.c.b16 %v2195, %v2194
      %2212 = vrot.lane.b32.xlu0 %v2196, 16
      %v2213 = vpop.permute.xlu0 %2212
      %2214 = vrot.lane.b32.xlu0 %v2197, 16
      %v2215 = vpop.permute.xlu0 %2214
      %2216 = vrot.lane.b32.xlu0 %v2198, 16
      %v2217 = vpop.permute.xlu0 %2216
      %2218 = vrot.lane.b32.xlu0 %v2199, 16
      %v2219 = vpop.permute.xlu0 %2218
      %2220 = vrot.lane.b32.xlu0 %v2200, 16
      %v2221 = vpop.permute.xlu0 %2220
      %2222 = vrot.lane.b32.xlu0 %v2201, 16
      %v2223 = vpop.permute.xlu0 %2222
      %2224 = vrot.lane.b32.xlu0 %v2202, 16
      %v2225 = vpop.permute.xlu0 %2224
      %2226 = vrot.lane.b32.xlu0 %v2203, 16
      %v2227 = vpop.permute.xlu0 %2226
      %2228 = vrot.lane.b32.xlu0 %v2204, 16
      %v2229 = vpop.permute.xlu0 %2228
      %2230 = vrot.lane.b32.xlu0 %v2205, 16
      %v2231 = vpop.permute.xlu0 %2230
      %2232 = vrot.lane.b32.xlu0 %v2206, 16
      %v2233 = vpop.permute.xlu0 %2232
      %2234 = vrot.lane.b32.xlu0 %v2207, 16
      %v2235 = vpop.permute.xlu0 %2234
      %2236 = vrot.lane.b32.xlu0 %v2208, 16
      %v2237 = vpop.permute.xlu0 %2236
      %2238 = vrot.lane.b32.xlu0 %v2209, 16
      %v2239 = vpop.permute.xlu0 %2238
      %2240 = vrot.lane.b32.xlu0 %v2210, 16
      %v2241 = vpop.permute.xlu0 %2240
      %2242 = vrot.lane.b32.xlu0 %v2211, 16
      %v2243 = vpop.permute.xlu0 %2242
      %vm2260 = vcmask 162944
      %2261 = vst.msk [vmem:[#allocation3] sm:$0xff] %vm2260, %v2213
      %2262 = vst.msk [vmem:[#allocation3 + $0x8] sm:$0xff] %vm2260, %v2215
      %2263 = vst.msk [vmem:[#allocation3 + $0x10] sm:$0xff] %vm2260, %v2217
      %2264 = vst.msk [vmem:[#allocation3 + $0x18] sm:$0xff] %vm2260, %v2219
      %2265 = vst.msk [vmem:[#allocation3 + $0x20] sm:$0xff] %vm2260, %v2221
      %2266 = vst.msk [vmem:[#allocation3 + $0x28] sm:$0xff] %vm2260, %v2223
      %2267 = vst.msk [vmem:[#allocation3 + $0x30] sm:$0xff] %vm2260, %v2225
      %2268 = vst.msk [vmem:[#allocation3 + $0x38] sm:$0xff] %vm2260, %v2227
      %2269 = vst.msk [vmem:[#allocation3 + $0x40] sm:$0xff] %vm2260, %v2229
      %2270 = vst.msk [vmem:[#allocation3 + $0x48] sm:$0xff] %vm2260, %v2231
      %2271 = vst.msk [vmem:[#allocation3 + $0x50] sm:$0xff] %vm2260, %v2233
      %2272 = vst.msk [vmem:[#allocation3 + $0x58] sm:$0xff] %vm2260, %v2235
      %2273 = vst.msk [vmem:[#allocation3 + $0x60] sm:$0xff] %vm2260, %v2237
      %2274 = vst.msk [vmem:[#allocation3 + $0x68] sm:$0xff] %vm2260, %v2239
      %2275 = vst.msk [vmem:[#allocation3 + $0x70] sm:$0xff] %vm2260, %v2241
      %2276 = vst.msk [vmem:[#allocation3 + $0x78] sm:$0xff] %vm2260, %v2243
      %v2277 = vld [vmem:[%s1554] sm:$0xe]
      %v2278 = vld [vmem:[%s1554 + $0x4] sm:$0xf]
      %v2279 = vld [vmem:[%s1554 + $0x8] sm:$0x1]
      %v2280 = vld [vmem:[%s1554 + $0xc] sm:$0xe]
      %v2281 = vld [vmem:[%s1554 + $0x10] sm:$0xf]
      %v2282 = vld [vmem:[%s1554 + $0x14] sm:$0x1]
      %v2283 = vld [vmem:[%s1554 + $0x18] sm:$0xe]
      %v2284 = vld [vmem:[%s1554 + $0x1c] sm:$0xf]
      %v2285 = vld [vmem:[%s1554 + $0x20] sm:$0x1]
      %v2286 = vld [vmem:[%s1554 + $0x24] sm:$0xe]
      %v2287 = vld [vmem:[%s1554 + $0x28] sm:$0xf]
      %v2288 = vld [vmem:[%s1554 + $0x2c] sm:$0x1]
      %v2289 = vld [vmem:[%s1554 + $0x30] sm:$0xe]
      %v2290 = vld [vmem:[%s1554 + $0x34] sm:$0xf]
      %v2291 = vld [vmem:[%s1554 + $0x38] sm:$0x1]
      %v2292 = vld [vmem:[%s1554 + $0x3c] sm:$0xe]
      %v2293 = vld [vmem:[%s1554 + $0x40] sm:$0xf]
      %v2294 = vld [vmem:[%s1554 + $0x44] sm:$0x1]
      %v2295 = vld [vmem:[%s1554 + $0x48] sm:$0xe]
      %v2296 = vld [vmem:[%s1554 + $0x4c] sm:$0xf]
      %v2297 = vld [vmem:[%s1554 + $0x50] sm:$0x1]
      %v2298 = vld [vmem:[%s1554 + $0x54] sm:$0xe]
      %v2299 = vld [vmem:[%s1554 + $0x58] sm:$0xf]
      %v2300 = vld [vmem:[%s1554 + $0x5c] sm:$0x1]
      %v2301 = vld [vmem:[%s1554 + $0x60] sm:$0xe]
      %v2302 = vld [vmem:[%s1554 + $0x64] sm:$0xf]
      %v2303 = vld [vmem:[%s1554 + $0x68] sm:$0x1]
      %v2304 = vld [vmem:[%s1554 + $0x6c] sm:$0xe]
      %v2305 = vld [vmem:[%s1554 + $0x70] sm:$0xf]
      %v2306 = vld [vmem:[%s1554 + $0x74] sm:$0x1]
      %v2307 = vld [vmem:[%s1554 + $0x78] sm:$0xe]
      %v2308 = vld [vmem:[%s1554 + $0x7c] sm:$0xf]
      %v2309 = vld [vmem:[%s1554 + $0x80] sm:$0x1]
      %v2310 = vld [vmem:[%s1554 + $0x84] sm:$0xe]
      %v2311 = vld [vmem:[%s1554 + $0x88] sm:$0xf]
      %v2312 = vld [vmem:[%s1554 + $0x8c] sm:$0x1]
      %v2313 = vld [vmem:[%s1554 + $0x90] sm:$0xe]
      %v2314 = vld [vmem:[%s1554 + $0x94] sm:$0xf]
      %v2315 = vld [vmem:[%s1554 + $0x98] sm:$0x1]
      %v2316 = vld [vmem:[%s1554 + $0x9c] sm:$0xe]
      %v2317 = vld [vmem:[%s1554 + $0xa0] sm:$0xf]
      %v2318 = vld [vmem:[%s1554 + $0xa4] sm:$0x1]
      %v2319 = vld [vmem:[%s1554 + $0xa8] sm:$0xe]
      %v2320 = vld [vmem:[%s1554 + $0xac] sm:$0xf]
      %v2321 = vld [vmem:[%s1554 + $0xb0] sm:$0x1]
      %v2322 = vld [vmem:[%s1554 + $0xb4] sm:$0xe]
      %v2323 = vld [vmem:[%s1554 + $0xb8] sm:$0xf]
      %v2324 = vld [vmem:[%s1554 + $0xbc] sm:$0x1]
      %v2373 = vrot.slane %v2277, 5
      %v2374 = vrot.slane %v2373, 4
      %v2375 = vrot.slane %v2278, 5
      %v2376 = vsel %vm1328, %v2374, %v2375
      %v2377 = vrot.slane %v2375, 4
      %v2378 = vrot.slane %v2279, 5
      %v2379 = vsel %vm1328, %v2377, %v2378
      %v2380 = vrot.slane %v2280, 5
      %v2381 = vrot.slane %v2380, 4
      %v2382 = vrot.slane %v2281, 5
      %v2383 = vsel %vm1328, %v2381, %v2382
      %v2384 = vrot.slane %v2382, 4
      %v2385 = vrot.slane %v2282, 5
      %v2386 = vsel %vm1328, %v2384, %v2385
      %v2387 = vrot.slane %v2283, 5
      %v2388 = vrot.slane %v2387, 4
      %v2389 = vrot.slane %v2284, 5
      %v2390 = vsel %vm1328, %v2388, %v2389
      %v2391 = vrot.slane %v2389, 4
      %v2392 = vrot.slane %v2285, 5
      %v2393 = vsel %vm1328, %v2391, %v2392
      %v2394 = vrot.slane %v2286, 5
      %v2395 = vrot.slane %v2394, 4
      %v2396 = vrot.slane %v2287, 5
      %v2397 = vsel %vm1328, %v2395, %v2396
      %v2398 = vrot.slane %v2396, 4
      %v2399 = vrot.slane %v2288, 5
      %v2400 = vsel %vm1328, %v2398, %v2399
      %v2401 = vrot.slane %v2289, 5
      %v2402 = vrot.slane %v2401, 4
      %v2403 = vrot.slane %v2290, 5
      %v2404 = vsel %vm1328, %v2402, %v2403
      %v2405 = vrot.slane %v2403, 4
      %v2406 = vrot.slane %v2291, 5
      %v2407 = vsel %vm1328, %v2405, %v2406
      %v2408 = vrot.slane %v2292, 5
      %v2409 = vrot.slane %v2408, 4
      %v2410 = vrot.slane %v2293, 5
      %v2411 = vsel %vm1328, %v2409, %v2410
      %v2412 = vrot.slane %v2410, 4
      %v2413 = vrot.slane %v2294, 5
      %v2414 = vsel %vm1328, %v2412, %v2413
      %v2415 = vrot.slane %v2295, 5
      %v2416 = vrot.slane %v2415, 4
      %v2417 = vrot.slane %v2296, 5
      %v2418 = vsel %vm1328, %v2416, %v2417
      %v2419 = vrot.slane %v2417, 4
      %v2420 = vrot.slane %v2297, 5
      %v2421 = vsel %vm1328, %v2419, %v2420
      %v2422 = vrot.slane %v2298, 5
      %v2423 = vrot.slane %v2422, 4
      %v2424 = vrot.slane %v2299, 5
      %v2425 = vsel %vm1328, %v2423, %v2424
      %v2426 = vrot.slane %v2424, 4
      %v2427 = vrot.slane %v2300, 5
      %v2428 = vsel %vm1328, %v2426, %v2427
      %v2429 = vrot.slane %v2301, 5
      %v2430 = vrot.slane %v2429, 4
      %v2431 = vrot.slane %v2302, 5
      %v2432 = vsel %vm1328, %v2430, %v2431
      %v2433 = vrot.slane %v2431, 4
      %v2434 = vrot.slane %v2303, 5
      %v2435 = vsel %vm1328, %v2433, %v2434
      %v2436 = vrot.slane %v2304, 5
      %v2437 = vrot.slane %v2436, 4
      %v2438 = vrot.slane %v2305, 5
      %v2439 = vsel %vm1328, %v2437, %v2438
      %v2440 = vrot.slane %v2438, 4
      %v2441 = vrot.slane %v2306, 5
      %v2442 = vsel %vm1328, %v2440, %v2441
      %v2443 = vrot.slane %v2307, 5
      %v2444 = vrot.slane %v2443, 4
      %v2445 = vrot.slane %v2308, 5
      %v2446 = vsel %vm1328, %v2444, %v2445
      %v2447 = vrot.slane %v2445, 4
      %v2448 = vrot.slane %v2309, 5
      %v2449 = vsel %vm1328, %v2447, %v2448
      %v2450 = vrot.slane %v2310, 5
      %v2451 = vrot.slane %v2450, 4
      %v2452 = vrot.slane %v2311, 5
      %v2453 = vsel %vm1328, %v2451, %v2452
      %v2454 = vrot.slane %v2452, 4
      %v2455 = vrot.slane %v2312, 5
      %v2456 = vsel %vm1328, %v2454, %v2455
      %v2457 = vrot.slane %v2313, 5
      %v2458 = vrot.slane %v2457, 4
      %v2459 = vrot.slane %v2314, 5
      %v2460 = vsel %vm1328, %v2458, %v2459
      %v2461 = vrot.slane %v2459, 4
      %v2462 = vrot.slane %v2315, 5
      %v2463 = vsel %vm1328, %v2461, %v2462
      %v2464 = vrot.slane %v2316, 5
      %v2465 = vrot.slane %v2464, 4
      %v2466 = vrot.slane %v2317, 5
      %v2467 = vsel %vm1328, %v2465, %v2466
      %v2468 = vrot.slane %v2466, 4
      %v2469 = vrot.slane %v2318, 5
      %v2470 = vsel %vm1328, %v2468, %v2469
      %v2471 = vrot.slane %v2319, 5
      %v2472 = vrot.slane %v2471, 4
      %v2473 = vrot.slane %v2320, 5
      %v2474 = vsel %vm1328, %v2472, %v2473
      %v2475 = vrot.slane %v2473, 4
      %v2476 = vrot.slane %v2321, 5
      %v2477 = vsel %vm1328, %v2475, %v2476
      %v2478 = vrot.slane %v2322, 5
      %v2479 = vrot.slane %v2478, 4
      %v2480 = vrot.slane %v2323, 5
      %v2481 = vsel %vm1328, %v2479, %v2480
      %v2482 = vrot.slane %v2480, 4
      %v2483 = vrot.slane %v2324, 5
      %v2484 = vsel %vm1328, %v2482, %v2483
      %v2485 = vunpack.c.l.b16 %v2376
      %v2486 = vunpack.c.l.b16 %v2379
      %v2487 = vunpack.c.l.b16 %v2383
      %v2488 = vunpack.c.l.b16 %v2386
      %v2489 = vunpack.c.l.b16 %v2390
      %v2490 = vunpack.c.l.b16 %v2393
      %v2491 = vunpack.c.l.b16 %v2397
      %v2492 = vunpack.c.l.b16 %v2400
      %v2493 = vunpack.c.l.b16 %v2404
      %v2494 = vunpack.c.l.b16 %v2407
      %v2495 = vunpack.c.l.b16 %v2411
      %v2496 = vunpack.c.l.b16 %v2414
      %v2497 = vunpack.c.l.b16 %v2418
      %v2498 = vunpack.c.l.b16 %v2421
      %v2499 = vunpack.c.l.b16 %v2425
      %v2500 = vunpack.c.l.b16 %v2428
      %v2501 = vunpack.c.l.b16 %v2432
      %v2502 = vunpack.c.l.b16 %v2435
      %v2503 = vunpack.c.l.b16 %v2439
      %v2504 = vunpack.c.l.b16 %v2442
      %v2505 = vunpack.c.l.b16 %v2446
      %v2506 = vunpack.c.l.b16 %v2449
      %v2507 = vunpack.c.l.b16 %v2453
      %v2508 = vunpack.c.l.b16 %v2456
      %v2509 = vunpack.c.l.b16 %v2460
      %v2510 = vunpack.c.l.b16 %v2463
      %v2511 = vunpack.c.l.b16 %v2467
      %v2512 = vunpack.c.l.b16 %v2470
      %v2513 = vunpack.c.l.b16 %v2474
      %v2514 = vunpack.c.l.b16 %v2477
      %v2515 = vunpack.c.l.b16 %v2481
      %v2516 = vunpack.c.l.b16 %v2484
      %v2517 = vpack.c.b16 %v2486, %v2485
      %v2518 = vpack.c.b16 %v2488, %v2487
      %v2519 = vpack.c.b16 %v2490, %v2489
      %v2520 = vpack.c.b16 %v2492, %v2491
      %v2521 = vpack.c.b16 %v2494, %v2493
      %v2522 = vpack.c.b16 %v2496, %v2495
      %v2523 = vpack.c.b16 %v2498, %v2497
      %v2524 = vpack.c.b16 %v2500, %v2499
      %v2525 = vpack.c.b16 %v2502, %v2501
      %v2526 = vpack.c.b16 %v2504, %v2503
      %v2527 = vpack.c.b16 %v2506, %v2505
      %v2528 = vpack.c.b16 %v2508, %v2507
      %v2529 = vpack.c.b16 %v2510, %v2509
      %v2530 = vpack.c.b16 %v2512, %v2511
      %v2531 = vpack.c.b16 %v2514, %v2513
      %v2532 = vpack.c.b16 %v2516, %v2515
      %2533 = vrot.lane.b32.xlu0 %v2517, 20
      %v2534 = vpop.permute.xlu0 %2533
      %2535 = vrot.lane.b32.xlu0 %v2518, 20
      %v2536 = vpop.permute.xlu0 %2535
      %2537 = vrot.lane.b32.xlu0 %v2519, 20
      %v2538 = vpop.permute.xlu0 %2537
      %2539 = vrot.lane.b32.xlu0 %v2520, 20
      %v2540 = vpop.permute.xlu0 %2539
      %2541 = vrot.lane.b32.xlu0 %v2521, 20
      %v2542 = vpop.permute.xlu0 %2541
      %2543 = vrot.lane.b32.xlu0 %v2522, 20
      %v2544 = vpop.permute.xlu0 %2543
      %2545 = vrot.lane.b32.xlu0 %v2523, 20
      %v2546 = vpop.permute.xlu0 %2545
      %2547 = vrot.lane.b32.xlu0 %v2524, 20
      %v2548 = vpop.permute.xlu0 %2547
      %2549 = vrot.lane.b32.xlu0 %v2525, 20
      %v2550 = vpop.permute.xlu0 %2549
      %2551 = vrot.lane.b32.xlu0 %v2526, 20
      %v2552 = vpop.permute.xlu0 %2551
      %2553 = vrot.lane.b32.xlu0 %v2527, 20
      %v2554 = vpop.permute.xlu0 %2553
      %2555 = vrot.lane.b32.xlu0 %v2528, 20
      %v2556 = vpop.permute.xlu0 %2555
      %2557 = vrot.lane.b32.xlu0 %v2529, 20
      %v2558 = vpop.permute.xlu0 %2557
      %2559 = vrot.lane.b32.xlu0 %v2530, 20
      %v2560 = vpop.permute.xlu0 %2559
      %2561 = vrot.lane.b32.xlu0 %v2531, 20
      %v2562 = vpop.permute.xlu0 %2561
      %2563 = vrot.lane.b32.xlu0 %v2532, 20
      %v2564 = vpop.permute.xlu0 %2563
      %vm2581 = vcmask 195744
      %2582 = vst.msk [vmem:[#allocation3] sm:$0xff] %vm2581, %v2534
      %2583 = vst.msk [vmem:[#allocation3 + $0x8] sm:$0xff] %vm2581, %v2536
      %2584 = vst.msk [vmem:[#allocation3 + $0x10] sm:$0xff] %vm2581, %v2538
      %2585 = vst.msk [vmem:[#allocation3 + $0x18] sm:$0xff] %vm2581, %v2540
      %2586 = vst.msk [vmem:[#allocation3 + $0x20] sm:$0xff] %vm2581, %v2542
      %2587 = vst.msk [vmem:[#allocation3 + $0x28] sm:$0xff] %vm2581, %v2544
      %2588 = vst.msk [vmem:[#allocation3 + $0x30] sm:$0xff] %vm2581, %v2546
      %2589 = vst.msk [vmem:[#allocation3 + $0x38] sm:$0xff] %vm2581, %v2548
      %2590 = vst.msk [vmem:[#allocation3 + $0x40] sm:$0xff] %vm2581, %v2550
      %2591 = vst.msk [vmem:[#allocation3 + $0x48] sm:$0xff] %vm2581, %v2552
      %2592 = vst.msk [vmem:[#allocation3 + $0x50] sm:$0xff] %vm2581, %v2554
      %2593 = vst.msk [vmem:[#allocation3 + $0x58] sm:$0xff] %vm2581, %v2556
      %2594 = vst.msk [vmem:[#allocation3 + $0x60] sm:$0xff] %vm2581, %v2558
      %2595 = vst.msk [vmem:[#allocation3 + $0x68] sm:$0xff] %vm2581, %v2560
      %2596 = vst.msk [vmem:[#allocation3 + $0x70] sm:$0xff] %vm2581, %v2562
      %2597 = vst.msk [vmem:[#allocation3 + $0x78] sm:$0xff] %vm2581, %v2564
      %s2598 = scalar_lea.vmem [#allocation2], 24
      %v2599 = vld [vmem:[%s2598] sm:$0xf]
      %v2600 = vld [vmem:[%s2598 + $0x4] sm:$0xf]
      %v2601 = vld [vmem:[%s2598 + $0xc] sm:$0xf]
      %v2602 = vld [vmem:[%s2598 + $0x10] sm:$0xf]
      %v2603 = vld [vmem:[%s2598 + $0x18] sm:$0xf]
      %v2604 = vld [vmem:[%s2598 + $0x1c] sm:$0xf]
      %v2605 = vld [vmem:[%s2598 + $0x24] sm:$0xf]
      %v2606 = vld [vmem:[%s2598 + $0x28] sm:$0xf]
      %v2607 = vld [vmem:[%s2598 + $0x30] sm:$0xf]
      %v2608 = vld [vmem:[%s2598 + $0x34] sm:$0xf]
      %v2609 = vld [vmem:[%s2598 + $0x3c] sm:$0xf]
      %v2610 = vld [vmem:[%s2598 + $0x40] sm:$0xf]
      %v2611 = vld [vmem:[%s2598 + $0x48] sm:$0xf]
      %v2612 = vld [vmem:[%s2598 + $0x4c] sm:$0xf]
      %v2613 = vld [vmem:[%s2598 + $0x54] sm:$0xf]
      %v2614 = vld [vmem:[%s2598 + $0x58] sm:$0xf]
      %v2615 = vld [vmem:[%s2598 + $0x60] sm:$0xf]
      %v2616 = vld [vmem:[%s2598 + $0x64] sm:$0xf]
      %v2617 = vld [vmem:[%s2598 + $0x6c] sm:$0xf]
      %v2618 = vld [vmem:[%s2598 + $0x70] sm:$0xf]
      %v2619 = vld [vmem:[%s2598 + $0x78] sm:$0xf]
      %v2620 = vld [vmem:[%s2598 + $0x7c] sm:$0xf]
      %v2621 = vld [vmem:[%s2598 + $0x84] sm:$0xf]
      %v2622 = vld [vmem:[%s2598 + $0x88] sm:$0xf]
      %v2623 = vld [vmem:[%s2598 + $0x90] sm:$0xf]
      %v2624 = vld [vmem:[%s2598 + $0x94] sm:$0xf]
      %v2625 = vld [vmem:[%s2598 + $0x9c] sm:$0xf]
      %v2626 = vld [vmem:[%s2598 + $0xa0] sm:$0xf]
      %v2627 = vld [vmem:[%s2598 + $0xa8] sm:$0xf]
      %v2628 = vld [vmem:[%s2598 + $0xac] sm:$0xf]
      %v2629 = vld [vmem:[%s2598 + $0xb4] sm:$0xf]
      %v2630 = vld [vmem:[%s2598 + $0xb8] sm:$0xf]
      %v2663 = vunpack.c.l.b16 %v2599
      %v2664 = vunpack.c.l.b16 %v2600
      %v2665 = vunpack.c.l.b16 %v2601
      %v2666 = vunpack.c.l.b16 %v2602
      %v2667 = vunpack.c.l.b16 %v2603
      %v2668 = vunpack.c.l.b16 %v2604
      %v2669 = vunpack.c.l.b16 %v2605
      %v2670 = vunpack.c.l.b16 %v2606
      %v2671 = vunpack.c.l.b16 %v2607
      %v2672 = vunpack.c.l.b16 %v2608
      %v2673 = vunpack.c.l.b16 %v2609
      %v2674 = vunpack.c.l.b16 %v2610
      %v2675 = vunpack.c.l.b16 %v2611
      %v2676 = vunpack.c.l.b16 %v2612
      %v2677 = vunpack.c.l.b16 %v2613
      %v2678 = vunpack.c.l.b16 %v2614
      %v2679 = vunpack.c.l.b16 %v2615
      %v2680 = vunpack.c.l.b16 %v2616
      %v2681 = vunpack.c.l.b16 %v2617
      %v2682 = vunpack.c.l.b16 %v2618
      %v2683 = vunpack.c.l.b16 %v2619
      %v2684 = vunpack.c.l.b16 %v2620
      %v2685 = vunpack.c.l.b16 %v2621
      %v2686 = vunpack.c.l.b16 %v2622
      %v2687 = vunpack.c.l.b16 %v2623
      %v2688 = vunpack.c.l.b16 %v2624
      %v2689 = vunpack.c.l.b16 %v2625
      %v2690 = vunpack.c.l.b16 %v2626
      %v2691 = vunpack.c.l.b16 %v2627
      %v2692 = vunpack.c.l.b16 %v2628
      %v2693 = vunpack.c.l.b16 %v2629
      %v2694 = vunpack.c.l.b16 %v2630
      %v2695 = vpack.c.b16 %v2664, %v2663
      %v2696 = vpack.c.b16 %v2666, %v2665
      %v2697 = vpack.c.b16 %v2668, %v2667
      %v2698 = vpack.c.b16 %v2670, %v2669
      %v2699 = vpack.c.b16 %v2672, %v2671
      %v2700 = vpack.c.b16 %v2674, %v2673
      %v2701 = vpack.c.b16 %v2676, %v2675
      %v2702 = vpack.c.b16 %v2678, %v2677
      %v2703 = vpack.c.b16 %v2680, %v2679
      %v2704 = vpack.c.b16 %v2682, %v2681
      %v2705 = vpack.c.b16 %v2684, %v2683
      %v2706 = vpack.c.b16 %v2686, %v2685
      %v2707 = vpack.c.b16 %v2688, %v2687
      %v2708 = vpack.c.b16 %v2690, %v2689
      %v2709 = vpack.c.b16 %v2692, %v2691
      %v2710 = vpack.c.b16 %v2694, %v2693
      %2711 = vrot.lane.b32.xlu0 %v2695, 24
      %v2712 = vpop.permute.xlu0 %2711
      %2713 = vrot.lane.b32.xlu0 %v2696, 24
      %v2714 = vpop.permute.xlu0 %2713
      %2715 = vrot.lane.b32.xlu0 %v2697, 24
      %v2716 = vpop.permute.xlu0 %2715
      %2717 = vrot.lane.b32.xlu0 %v2698, 24
      %v2718 = vpop.permute.xlu0 %2717
      %2719 = vrot.lane.b32.xlu0 %v2699, 24
      %v2720 = vpop.permute.xlu0 %2719
      %2721 = vrot.lane.b32.xlu0 %v2700, 24
      %v2722 = vpop.permute.xlu0 %2721
      %2723 = vrot.lane.b32.xlu0 %v2701, 24
      %v2724 = vpop.permute.xlu0 %2723
      %2725 = vrot.lane.b32.xlu0 %v2702, 24
      %v2726 = vpop.permute.xlu0 %2725
      %2727 = vrot.lane.b32.xlu0 %v2703, 24
      %v2728 = vpop.permute.xlu0 %2727
      %2729 = vrot.lane.b32.xlu0 %v2704, 24
      %v2730 = vpop.permute.xlu0 %2729
      %2731 = vrot.lane.b32.xlu0 %v2705, 24
      %v2732 = vpop.permute.xlu0 %2731
      %2733 = vrot.lane.b32.xlu0 %v2706, 24
      %v2734 = vpop.permute.xlu0 %2733
      %2735 = vrot.lane.b32.xlu0 %v2707, 24
      %v2736 = vpop.permute.xlu0 %2735
      %2737 = vrot.lane.b32.xlu0 %v2708, 24
      %v2738 = vpop.permute.xlu0 %2737
      %2739 = vrot.lane.b32.xlu0 %v2709, 24
      %v2740 = vpop.permute.xlu0 %2739
      %2741 = vrot.lane.b32.xlu0 %v2710, 24
      %v2742 = vpop.permute.xlu0 %2741
      %vm2759 = vcmask 228544
      %2760 = vst.msk [vmem:[#allocation3] sm:$0xff] %vm2759, %v2712
      %2761 = vst.msk [vmem:[#allocation3 + $0x8] sm:$0xff] %vm2759, %v2714
      %2762 = vst.msk [vmem:[#allocation3 + $0x10] sm:$0xff] %vm2759, %v2716
      %2763 = vst.msk [vmem:[#allocation3 + $0x18] sm:$0xff] %vm2759, %v2718
      %2764 = vst.msk [vmem:[#allocation3 + $0x20] sm:$0xff] %vm2759, %v2720
      %2765 = vst.msk [vmem:[#allocation3 + $0x28] sm:$0xff] %vm2759, %v2722
      %2766 = vst.msk [vmem:[#allocation3 + $0x30] sm:$0xff] %vm2759, %v2724
      %2767 = vst.msk [vmem:[#allocation3 + $0x38] sm:$0xff] %vm2759, %v2726
      %2768 = vst.msk [vmem:[#allocation3 + $0x40] sm:$0xff] %vm2759, %v2728
      %2769 = vst.msk [vmem:[#allocation3 + $0x48] sm:$0xff] %vm2759, %v2730
      %2770 = vst.msk [vmem:[#allocation3 + $0x50] sm:$0xff] %vm2759, %v2732
      %2771 = vst.msk [vmem:[#allocation3 + $0x58] sm:$0xff] %vm2759, %v2734
      %2772 = vst.msk [vmem:[#allocation3 + $0x60] sm:$0xff] %vm2759, %v2736
      %2773 = vst.msk [vmem:[#allocation3 + $0x68] sm:$0xff] %vm2759, %v2738
      %2774 = vst.msk [vmem:[#allocation3 + $0x70] sm:$0xff] %vm2759, %v2740
      %2775 = vst.msk [vmem:[#allocation3 + $0x78] sm:$0xff] %vm2759, %v2742
      %v2776 = vld [vmem:[%s2598] sm:$0xf]
      %v2777 = vld [vmem:[%s2598 + $0x4] sm:$0xf]
      %v2778 = vld [vmem:[%s2598 + $0x8] sm:$0x1]
      %v2779 = vld [vmem:[%s2598 + $0xc] sm:$0xf]
      %v2780 = vld [vmem:[%s2598 + $0x10] sm:$0xf]
      %v2781 = vld [vmem:[%s2598 + $0x14] sm:$0x1]
      %v2782 = vld [vmem:[%s2598 + $0x18] sm:$0xf]
      %v2783 = vld [vmem:[%s2598 + $0x1c] sm:$0xf]
      %v2784 = vld [vmem:[%s2598 + $0x20] sm:$0x1]
      %v2785 = vld [vmem:[%s2598 + $0x24] sm:$0xf]
      %v2786 = vld [vmem:[%s2598 + $0x28] sm:$0xf]
      %v2787 = vld [vmem:[%s2598 + $0x2c] sm:$0x1]
      %v2788 = vld [vmem:[%s2598 + $0x30] sm:$0xf]
      %v2789 = vld [vmem:[%s2598 + $0x34] sm:$0xf]
      %v2790 = vld [vmem:[%s2598 + $0x38] sm:$0x1]
      %v2791 = vld [vmem:[%s2598 + $0x3c] sm:$0xf]
      %v2792 = vld [vmem:[%s2598 + $0x40] sm:$0xf]
      %v2793 = vld [vmem:[%s2598 + $0x44] sm:$0x1]
      %v2794 = vld [vmem:[%s2598 + $0x48] sm:$0xf]
      %v2795 = vld [vmem:[%s2598 + $0x4c] sm:$0xf]
      %v2796 = vld [vmem:[%s2598 + $0x50] sm:$0x1]
      %v2797 = vld [vmem:[%s2598 + $0x54] sm:$0xf]
      %v2798 = vld [vmem:[%s2598 + $0x58] sm:$0xf]
      %v2799 = vld [vmem:[%s2598 + $0x5c] sm:$0x1]
      %v2800 = vld [vmem:[%s2598 + $0x60] sm:$0xf]
      %v2801 = vld [vmem:[%s2598 + $0x64] sm:$0xf]
      %v2802 = vld [vmem:[%s2598 + $0x68] sm:$0x1]
      %v2803 = vld [vmem:[%s2598 + $0x6c] sm:$0xf]
      %v2804 = vld [vmem:[%s2598 + $0x70] sm:$0xf]
      %v2805 = vld [vmem:[%s2598 + $0x74] sm:$0x1]
      %v2806 = vld [vmem:[%s2598 + $0x78] sm:$0xf]
      %v2807 = vld [vmem:[%s2598 + $0x7c] sm:$0xf]
      %v2808 = vld [vmem:[%s2598 + $0x80] sm:$0x1]
      %v2809 = vld [vmem:[%s2598 + $0x84] sm:$0xf]
      %v2810 = vld [vmem:[%s2598 + $0x88] sm:$0xf]
      %v2811 = vld [vmem:[%s2598 + $0x8c] sm:$0x1]
      %v2812 = vld [vmem:[%s2598 + $0x90] sm:$0xf]
      %v2813 = vld [vmem:[%s2598 + $0x94] sm:$0xf]
      %v2814 = vld [vmem:[%s2598 + $0x98] sm:$0x1]
      %v2815 = vld [vmem:[%s2598 + $0x9c] sm:$0xf]
      %v2816 = vld [vmem:[%s2598 + $0xa0] sm:$0xf]
      %v2817 = vld [vmem:[%s2598 + $0xa4] sm:$0x1]
      %v2818 = vld [vmem:[%s2598 + $0xa8] sm:$0xf]
      %v2819 = vld [vmem:[%s2598 + $0xac] sm:$0xf]
      %v2820 = vld [vmem:[%s2598 + $0xb0] sm:$0x1]
      %v2821 = vld [vmem:[%s2598 + $0xb4] sm:$0xf]
      %v2822 = vld [vmem:[%s2598 + $0xb8] sm:$0xf]
      %v2823 = vld [vmem:[%s2598 + $0xbc] sm:$0x1]
      %v2825 = vshrl.u32 %v2776, 16
      %v2827 = vrot.slane %v2825, 4
      %v2828 = vshll.u32 %v2776, 16
      %v2830 = vrot.slane %v2828, 5
      %v2831 = vor.u32 %v2827, %v2830
      %v2832 = vrot.slane %v2831, 4
      %v2834 = vshll.u32 %v2777, 16
      %v2836 = vrot.slane %v2834, 5
      %v2837 = vsel %vm732, %v2832, %v2836
      %v2838 = vshrl.u32 %v2777, 16
      %v2840 = vrot.slane %v2838, 4
      %v2841 = vor.u32 %v2840, %v2836
      %v2842 = vrot.slane %v2841, 4
      %v2844 = vshll.u32 %v2778, 16
      %v2846 = vrot.slane %v2844, 5
      %v2847 = vsel %vm732, %v2842, %v2846
      %v2849 = vshrl.u32 %v2779, 16
      %v2851 = vrot.slane %v2849, 4
      %v2852 = vshll.u32 %v2779, 16
      %v2854 = vrot.slane %v2852, 5
      %v2855 = vor.u32 %v2851, %v2854
      %v2856 = vrot.slane %v2855, 4
      %v2858 = vshll.u32 %v2780, 16
      %v2860 = vrot.slane %v2858, 5
      %v2861 = vsel %vm732, %v2856, %v2860
      %v2862 = vshrl.u32 %v2780, 16
      %v2864 = vrot.slane %v2862, 4
      %v2865 = vor.u32 %v2864, %v2860
      %v2866 = vrot.slane %v2865, 4
      %v2868 = vshll.u32 %v2781, 16
      %v2870 = vrot.slane %v2868, 5
      %v2871 = vsel %vm732, %v2866, %v2870
      %v2873 = vshrl.u32 %v2782, 16
      %v2875 = vrot.slane %v2873, 4
      %v2876 = vshll.u32 %v2782, 16
      %v2878 = vrot.slane %v2876, 5
      %v2879 = vor.u32 %v2875, %v2878
      %v2880 = vrot.slane %v2879, 4
      %v2882 = vshll.u32 %v2783, 16
      %v2884 = vrot.slane %v2882, 5
      %v2885 = vsel %vm732, %v2880, %v2884
      %v2886 = vshrl.u32 %v2783, 16
      %v2888 = vrot.slane %v2886, 4
      %v2889 = vor.u32 %v2888, %v2884
      %v2890 = vrot.slane %v2889, 4
      %v2892 = vshll.u32 %v2784, 16
      %v2894 = vrot.slane %v2892, 5
      %v2895 = vsel %vm732, %v2890, %v2894
      %v2897 = vshrl.u32 %v2785, 16
      %v2899 = vrot.slane %v2897, 4
      %v2900 = vshll.u32 %v2785, 16
      %v2902 = vrot.slane %v2900, 5
      %v2903 = vor.u32 %v2899, %v2902
      %v2904 = vrot.slane %v2903, 4
      %v2906 = vshll.u32 %v2786, 16
      %v2908 = vrot.slane %v2906, 5
      %v2909 = vsel %vm732, %v2904, %v2908
      %v2910 = vshrl.u32 %v2786, 16
      %v2912 = vrot.slane %v2910, 4
      %v2913 = vor.u32 %v2912, %v2908
      %v2914 = vrot.slane %v2913, 4
      %v2916 = vshll.u32 %v2787, 16
      %v2918 = vrot.slane %v2916, 5
      %v2919 = vsel %vm732, %v2914, %v2918
      %v2921 = vshrl.u32 %v2788, 16
      %v2923 = vrot.slane %v2921, 4
      %v2924 = vshll.u32 %v2788, 16
      %v2926 = vrot.slane %v2924, 5
      %v2927 = vor.u32 %v2923, %v2926
      %v2928 = vrot.slane %v2927, 4
      %v2930 = vshll.u32 %v2789, 16
      %v2932 = vrot.slane %v2930, 5
      %v2933 = vsel %vm732, %v2928, %v2932
      %v2934 = vshrl.u32 %v2789, 16
      %v2936 = vrot.slane %v2934, 4
      %v2937 = vor.u32 %v2936, %v2932
      %v2938 = vrot.slane %v2937, 4
      %v2940 = vshll.u32 %v2790, 16
      %v2942 = vrot.slane %v2940, 5
      %v2943 = vsel %vm732, %v2938, %v2942
      %v2945 = vshrl.u32 %v2791, 16
      %v2947 = vrot.slane %v2945, 4
      %v2948 = vshll.u32 %v2791, 16
      %v2950 = vrot.slane %v2948, 5
      %v2951 = vor.u32 %v2947, %v2950
      %v2952 = vrot.slane %v2951, 4
      %v2954 = vshll.u32 %v2792, 16
      %v2956 = vrot.slane %v2954, 5
      %v2957 = vsel %vm732, %v2952, %v2956
      %v2958 = vshrl.u32 %v2792, 16
      %v2960 = vrot.slane %v2958, 4
      %v2961 = vor.u32 %v2960, %v2956
      %v2962 = vrot.slane %v2961, 4
      %v2964 = vshll.u32 %v2793, 16
      %v2966 = vrot.slane %v2964, 5
      %v2967 = vsel %vm732, %v2962, %v2966
      %v2969 = vshrl.u32 %v2794, 16
      %v2971 = vrot.slane %v2969, 4
      %v2972 = vshll.u32 %v2794, 16
      %v2974 = vrot.slane %v2972, 5
      %v2975 = vor.u32 %v2971, %v2974
      %v2976 = vrot.slane %v2975, 4
      %v2978 = vshll.u32 %v2795, 16
      %v2980 = vrot.slane %v2978, 5
      %v2981 = vsel %vm732, %v2976, %v2980
      %v2982 = vshrl.u32 %v2795, 16
      %v2984 = vrot.slane %v2982, 4
      %v2985 = vor.u32 %v2984, %v2980
      %v2986 = vrot.slane %v2985, 4
      %v2988 = vshll.u32 %v2796, 16
      %v2990 = vrot.slane %v2988, 5
      %v2991 = vsel %vm732, %v2986, %v2990
      %v2993 = vshrl.u32 %v2797, 16
      %v2995 = vrot.slane %v2993, 4
      %v2996 = vshll.u32 %v2797, 16
      %v2998 = vrot.slane %v2996, 5
      %v2999 = vor.u32 %v2995, %v2998
      %v3000 = vrot.slane %v2999, 4
      %v3002 = vshll.u32 %v2798, 16
      %v3004 = vrot.slane %v3002, 5
      %v3005 = vsel %vm732, %v3000, %v3004
      %v3006 = vshrl.u32 %v2798, 16
      %v3008 = vrot.slane %v3006, 4
      %v3009 = vor.u32 %v3008, %v3004
      %v3010 = vrot.slane %v3009, 4
      %v3012 = vshll.u32 %v2799, 16
      %v3014 = vrot.slane %v3012, 5
      %v3015 = vsel %vm732, %v3010, %v3014
      %v3017 = vshrl.u32 %v2800, 16
      %v3019 = vrot.slane %v3017, 4
      %v3020 = vshll.u32 %v2800, 16
      %v3022 = vrot.slane %v3020, 5
      %v3023 = vor.u32 %v3019, %v3022
      %v3024 = vrot.slane %v3023, 4
      %v3026 = vshll.u32 %v2801, 16
      %v3028 = vrot.slane %v3026, 5
      %v3029 = vsel %vm732, %v3024, %v3028
      %v3030 = vshrl.u32 %v2801, 16
      %v3032 = vrot.slane %v3030, 4
      %v3033 = vor.u32 %v3032, %v3028
      %v3034 = vrot.slane %v3033, 4
      %v3036 = vshll.u32 %v2802, 16
      %v3038 = vrot.slane %v3036, 5
      %v3039 = vsel %vm732, %v3034, %v3038
      %v3041 = vshrl.u32 %v2803, 16
      %v3043 = vrot.slane %v3041, 4
      %v3044 = vshll.u32 %v2803, 16
      %v3046 = vrot.slane %v3044, 5
      %v3047 = vor.u32 %v3043, %v3046
      %v3048 = vrot.slane %v3047, 4
      %v3050 = vshll.u32 %v2804, 16
      %v3052 = vrot.slane %v3050, 5
      %v3053 = vsel %vm732, %v3048, %v3052
      %v3054 = vshrl.u32 %v2804, 16
      %v3056 = vrot.slane %v3054, 4
      %v3057 = vor.u32 %v3056, %v3052
      %v3058 = vrot.slane %v3057, 4
      %v3060 = vshll.u32 %v2805, 16
      %v3062 = vrot.slane %v3060, 5
      %v3063 = vsel %vm732, %v3058, %v3062
      %v3065 = vshrl.u32 %v2806, 16
      %v3067 = vrot.slane %v3065, 4
      %v3068 = vshll.u32 %v2806, 16
      %v3070 = vrot.slane %v3068, 5
      %v3071 = vor.u32 %v3067, %v3070
      %v3072 = vrot.slane %v3071, 4
      %v3074 = vshll.u32 %v2807, 16
      %v3076 = vrot.slane %v3074, 5
      %v3077 = vsel %vm732, %v3072, %v3076
      %v3078 = vshrl.u32 %v2807, 16
      %v3080 = vrot.slane %v3078, 4
      %v3081 = vor.u32 %v3080, %v3076
      %v3082 = vrot.slane %v3081, 4
      %v3084 = vshll.u32 %v2808, 16
      %v3086 = vrot.slane %v3084, 5
      %v3087 = vsel %vm732, %v3082, %v3086
      %v3089 = vshrl.u32 %v2809, 16
      %v3091 = vrot.slane %v3089, 4
      %v3092 = vshll.u32 %v2809, 16
      %v3094 = vrot.slane %v3092, 5
      %v3095 = vor.u32 %v3091, %v3094
      %v3096 = vrot.slane %v3095, 4
      %v3098 = vshll.u32 %v2810, 16
      %v3100 = vrot.slane %v3098, 5
      %v3101 = vsel %vm732, %v3096, %v3100
      %v3102 = vshrl.u32 %v2810, 16
      %v3104 = vrot.slane %v3102, 4
      %v3105 = vor.u32 %v3104, %v3100
      %v3106 = vrot.slane %v3105, 4
      %v3108 = vshll.u32 %v2811, 16
      %v3110 = vrot.slane %v3108, 5
      %v3111 = vsel %vm732, %v3106, %v3110
      %v3113 = vshrl.u32 %v2812, 16
      %v3115 = vrot.slane %v3113, 4
      %v3116 = vshll.u32 %v2812, 16
      %v3118 = vrot.slane %v3116, 5
      %v3119 = vor.u32 %v3115, %v3118
      %v3120 = vrot.slane %v3119, 4
      %v3122 = vshll.u32 %v2813, 16
      %v3124 = vrot.slane %v3122, 5
      %v3125 = vsel %vm732, %v3120, %v3124
      %v3126 = vshrl.u32 %v2813, 16
      %v3128 = vrot.slane %v3126, 4
      %v3129 = vor.u32 %v3128, %v3124
      %v3130 = vrot.slane %v3129, 4
      %v3132 = vshll.u32 %v2814, 16
      %v3134 = vrot.slane %v3132, 5
      %v3135 = vsel %vm732, %v3130, %v3134
      %v3137 = vshrl.u32 %v2815, 16
      %v3139 = vrot.slane %v3137, 4
      %v3140 = vshll.u32 %v2815, 16
      %v3142 = vrot.slane %v3140, 5
      %v3143 = vor.u32 %v3139, %v3142
      %v3144 = vrot.slane %v3143, 4
      %v3146 = vshll.u32 %v2816, 16
      %v3148 = vrot.slane %v3146, 5
      %v3149 = vsel %vm732, %v3144, %v3148
      %v3150 = vshrl.u32 %v2816, 16
      %v3152 = vrot.slane %v3150, 4
      %v3153 = vor.u32 %v3152, %v3148
      %v3154 = vrot.slane %v3153, 4
      %v3156 = vshll.u32 %v2817, 16
      %v3158 = vrot.slane %v3156, 5
      %v3159 = vsel %vm732, %v3154, %v3158
      %v3161 = vshrl.u32 %v2818, 16
      %v3163 = vrot.slane %v3161, 4
      %v3164 = vshll.u32 %v2818, 16
      %v3166 = vrot.slane %v3164, 5
      %v3167 = vor.u32 %v3163, %v3166
      %v3168 = vrot.slane %v3167, 4
      %v3170 = vshll.u32 %v2819, 16
      %v3172 = vrot.slane %v3170, 5
      %v3173 = vsel %vm732, %v3168, %v3172
      %v3174 = vshrl.u32 %v2819, 16
      %v3176 = vrot.slane %v3174, 4
      %v3177 = vor.u32 %v3176, %v3172
      %v3178 = vrot.slane %v3177, 4
      %v3180 = vshll.u32 %v2820, 16
      %v3182 = vrot.slane %v3180, 5
      %v3183 = vsel %vm732, %v3178, %v3182
      %v3185 = vshrl.u32 %v2821, 16
      %v3187 = vrot.slane %v3185, 4
      %v3188 = vshll.u32 %v2821, 16
      %v3190 = vrot.slane %v3188, 5
      %v3191 = vor.u32 %v3187, %v3190
      %v3192 = vrot.slane %v3191, 4
      %v3194 = vshll.u32 %v2822, 16
      %v3196 = vrot.slane %v3194, 5
      %v3197 = vsel %vm732, %v3192, %v3196
      %v3198 = vshrl.u32 %v2822, 16
      %v3200 = vrot.slane %v3198, 4
      %v3201 = vor.u32 %v3200, %v3196
      %v3202 = vrot.slane %v3201, 4
      %v3204 = vshll.u32 %v2823, 16
      %v3206 = vrot.slane %v3204, 5
      %v3207 = vsel %vm732, %v3202, %v3206
      %v3208 = vunpack.c.l.b16 %v2837
      %v3209 = vunpack.c.l.b16 %v2847
      %v3210 = vunpack.c.l.b16 %v2861
      %v3211 = vunpack.c.l.b16 %v2871
      %v3212 = vunpack.c.l.b16 %v2885
      %v3213 = vunpack.c.l.b16 %v2895
      %v3214 = vunpack.c.l.b16 %v2909
      %v3215 = vunpack.c.l.b16 %v2919
      %v3216 = vunpack.c.l.b16 %v2933
      %v3217 = vunpack.c.l.b16 %v2943
      %v3218 = vunpack.c.l.b16 %v2957
      %v3219 = vunpack.c.l.b16 %v2967
      %v3220 = vunpack.c.l.b16 %v2981
      %v3221 = vunpack.c.l.b16 %v2991
      %v3222 = vunpack.c.l.b16 %v3005
      %v3223 = vunpack.c.l.b16 %v3015
      %v3224 = vunpack.c.l.b16 %v3029
      %v3225 = vunpack.c.l.b16 %v3039
      %v3226 = vunpack.c.l.b16 %v3053
      %v3227 = vunpack.c.l.b16 %v3063
      %v3228 = vunpack.c.l.b16 %v3077
      %v3229 = vunpack.c.l.b16 %v3087
      %v3230 = vunpack.c.l.b16 %v3101
      %v3231 = vunpack.c.l.b16 %v3111
      %v3232 = vunpack.c.l.b16 %v3125
      %v3233 = vunpack.c.l.b16 %v3135
      %v3234 = vunpack.c.l.b16 %v3149
      %v3235 = vunpack.c.l.b16 %v3159
      %v3236 = vunpack.c.l.b16 %v3173
      %v3237 = vunpack.c.l.b16 %v3183
      %v3238 = vunpack.c.l.b16 %v3197
      %v3239 = vunpack.c.l.b16 %v3207
      %v3240 = vpack.c.b16 %v3209, %v3208
      %v3241 = vpack.c.b16 %v3211, %v3210
      %v3242 = vpack.c.b16 %v3213, %v3212
      %v3243 = vpack.c.b16 %v3215, %v3214
      %v3244 = vpack.c.b16 %v3217, %v3216
      %v3245 = vpack.c.b16 %v3219, %v3218
      %v3246 = vpack.c.b16 %v3221, %v3220
      %v3247 = vpack.c.b16 %v3223, %v3222
      %v3248 = vpack.c.b16 %v3225, %v3224
      %v3249 = vpack.c.b16 %v3227, %v3226
      %v3250 = vpack.c.b16 %v3229, %v3228
      %v3251 = vpack.c.b16 %v3231, %v3230
      %v3252 = vpack.c.b16 %v3233, %v3232
      %v3253 = vpack.c.b16 %v3235, %v3234
      %v3254 = vpack.c.b16 %v3237, %v3236
      %v3255 = vpack.c.b16 %v3239, %v3238
      %3256 = vrot.lane.b32.xlu0 %v3240, 28
      %v3257 = vpop.permute.xlu0 %3256
      %3258 = vrot.lane.b32.xlu0 %v3241, 28
      %v3259 = vpop.permute.xlu0 %3258
      %3260 = vrot.lane.b32.xlu0 %v3242, 28
      %v3261 = vpop.permute.xlu0 %3260
      %3262 = vrot.lane.b32.xlu0 %v3243, 28
      %v3263 = vpop.permute.xlu0 %3262
      %3264 = vrot.lane.b32.xlu0 %v3244, 28
      %v3265 = vpop.permute.xlu0 %3264
      %3266 = vrot.lane.b32.xlu0 %v3245, 28
      %v3267 = vpop.permute.xlu0 %3266
      %3268 = vrot.lane.b32.xlu0 %v3246, 28
      %v3269 = vpop.permute.xlu0 %3268
      %3270 = vrot.lane.b32.xlu0 %v3247, 28
      %v3271 = vpop.permute.xlu0 %3270
      %3272 = vrot.lane.b32.xlu0 %v3248, 28
      %v3273 = vpop.permute.xlu0 %3272
      %3274 = vrot.lane.b32.xlu0 %v3249, 28
      %v3275 = vpop.permute.xlu0 %3274
      %3276 = vrot.lane.b32.xlu0 %v3250, 28
      %v3277 = vpop.permute.xlu0 %3276
      %3278 = vrot.lane.b32.xlu0 %v3251, 28
      %v3279 = vpop.permute.xlu0 %3278
      %3280 = vrot.lane.b32.xlu0 %v3252, 28
      %v3281 = vpop.permute.xlu0 %3280
      %3282 = vrot.lane.b32.xlu0 %v3253, 28
      %v3283 = vpop.permute.xlu0 %3282
      %3284 = vrot.lane.b32.xlu0 %v3254, 28
      %v3285 = vpop.permute.xlu0 %3284
      %3286 = vrot.lane.b32.xlu0 %v3255, 28
      %v3287 = vpop.permute.xlu0 %3286
      %vm3304 = vcmask 261344
      %3305 = vst.msk [vmem:[#allocation3] sm:$0xff] %vm3304, %v3257
      %3306 = vst.msk [vmem:[#allocation3 + $0x8] sm:$0xff] %vm3304, %v3259
      %3307 = vst.msk [vmem:[#allocation3 + $0x10] sm:$0xff] %vm3304, %v3261
      %3308 = vst.msk [vmem:[#allocation3 + $0x18] sm:$0xff] %vm3304, %v3263
      %3309 = vst.msk [vmem:[#allocation3 + $0x20] sm:$0xff] %vm3304, %v3265
      %3310 = vst.msk [vmem:[#allocation3 + $0x28] sm:$0xff] %vm3304, %v3267
      %3311 = vst.msk [vmem:[#allocation3 + $0x30] sm:$0xff] %vm3304, %v3269
      %3312 = vst.msk [vmem:[#allocation3 + $0x38] sm:$0xff] %vm3304, %v3271
      %3313 = vst.msk [vmem:[#allocation3 + $0x40] sm:$0xff] %vm3304, %v3273
      %3314 = vst.msk [vmem:[#allocation3 + $0x48] sm:$0xff] %vm3304, %v3275
      %3315 = vst.msk [vmem:[#allocation3 + $0x50] sm:$0xff] %vm3304, %v3277
      %3316 = vst.msk [vmem:[#allocation3 + $0x58] sm:$0xff] %vm3304, %v3279
      %3317 = vst.msk [vmem:[#allocation3 + $0x60] sm:$0xff] %vm3304, %v3281
      %3318 = vst.msk [vmem:[#allocation3 + $0x68] sm:$0xff] %vm3304, %v3283
      %3319 = vst.msk [vmem:[#allocation3 + $0x70] sm:$0xff] %vm3304, %v3285
      %3320 = vst.msk [vmem:[#allocation3 + $0x78] sm:$0xff] %vm3304, %v3287
      %v3321 = vld [vmem:[%s2598] sm:$0xe]
      %v3322 = vld [vmem:[%s2598 + $0x4] sm:$0xf]
      %v3323 = vld [vmem:[%s2598 + $0x8] sm:$0x1]
      %v3324 = vld [vmem:[%s2598 + $0xc] sm:$0xe]
      %v3325 = vld [vmem:[%s2598 + $0x10] sm:$0xf]
      %v3326 = vld [vmem:[%s2598 + $0x14] sm:$0x1]
      %v3327 = vld [vmem:[%s2598 + $0x18] sm:$0xe]
      %v3328 = vld [vmem:[%s2598 + $0x1c] sm:$0xf]
      %v3329 = vld [vmem:[%s2598 + $0x20] sm:$0x1]
      %v3330 = vld [vmem:[%s2598 + $0x24] sm:$0xe]
      %v3331 = vld [vmem:[%s2598 + $0x28] sm:$0xf]
      %v3332 = vld [vmem:[%s2598 + $0x2c] sm:$0x1]
      %v3333 = vld [vmem:[%s2598 + $0x30] sm:$0xe]
      %v3334 = vld [vmem:[%s2598 + $0x34] sm:$0xf]
      %v3335 = vld [vmem:[%s2598 + $0x38] sm:$0x1]
      %v3336 = vld [vmem:[%s2598 + $0x3c] sm:$0xe]
      %v3337 = vld [vmem:[%s2598 + $0x40] sm:$0xf]
      %v3338 = vld [vmem:[%s2598 + $0x44] sm:$0x1]
      %v3339 = vld [vmem:[%s2598 + $0x48] sm:$0xe]
      %v3340 = vld [vmem:[%s2598 + $0x4c] sm:$0xf]
      %v3341 = vld [vmem:[%s2598 + $0x50] sm:$0x1]
      %v3342 = vld [vmem:[%s2598 + $0x54] sm:$0xe]
      %v3343 = vld [vmem:[%s2598 + $0x58] sm:$0xf]
      %v3344 = vld [vmem:[%s2598 + $0x5c] sm:$0x1]
      %v3345 = vld [vmem:[%s2598 + $0x60] sm:$0xe]
      %v3346 = vld [vmem:[%s2598 + $0x64] sm:$0xf]
      %v3347 = vld [vmem:[%s2598 + $0x68] sm:$0x1]
      %v3348 = vld [vmem:[%s2598 + $0x6c] sm:$0xe]
      %v3349 = vld [vmem:[%s2598 + $0x70] sm:$0xf]
      %v3350 = vld [vmem:[%s2598 + $0x74] sm:$0x1]
      %v3351 = vld [vmem:[%s2598 + $0x78] sm:$0xe]
      %v3352 = vld [vmem:[%s2598 + $0x7c] sm:$0xf]
      %v3353 = vld [vmem:[%s2598 + $0x80] sm:$0x1]
      %v3354 = vld [vmem:[%s2598 + $0x84] sm:$0xe]
      %v3355 = vld [vmem:[%s2598 + $0x88] sm:$0xf]
      %v3356 = vld [vmem:[%s2598 + $0x8c] sm:$0x1]
      %v3357 = vld [vmem:[%s2598 + $0x90] sm:$0xe]
      %v3358 = vld [vmem:[%s2598 + $0x94] sm:$0xf]
      %v3359 = vld [vmem:[%s2598 + $0x98] sm:$0x1]
      %v3360 = vld [vmem:[%s2598 + $0x9c] sm:$0xe]
      %v3361 = vld [vmem:[%s2598 + $0xa0] sm:$0xf]
      %v3362 = vld [vmem:[%s2598 + $0xa4] sm:$0x1]
      %v3363 = vld [vmem:[%s2598 + $0xa8] sm:$0xe]
      %v3364 = vld [vmem:[%s2598 + $0xac] sm:$0xf]
      %v3365 = vld [vmem:[%s2598 + $0xb0] sm:$0x1]
      %v3366 = vld [vmem:[%s2598 + $0xb4] sm:$0xe]
      %v3367 = vld [vmem:[%s2598 + $0xb8] sm:$0xf]
      %v3368 = vld [vmem:[%s2598 + $0xbc] sm:$0x1]
      %v3417 = vrot.slane %v3321, 5
      %v3418 = vrot.slane %v3417, 4
      %v3419 = vrot.slane %v3322, 5
      %v3420 = vsel %vm1328, %v3418, %v3419
      %v3421 = vrot.slane %v3419, 4
      %v3422 = vrot.slane %v3323, 5
      %v3423 = vsel %vm1328, %v3421, %v3422
      %v3424 = vrot.slane %v3324, 5
      %v3425 = vrot.slane %v3424, 4
      %v3426 = vrot.slane %v3325, 5
      %v3427 = vsel %vm1328, %v3425, %v3426
      %v3428 = vrot.slane %v3426, 4
      %v3429 = vrot.slane %v3326, 5
      %v3430 = vsel %vm1328, %v3428, %v3429
      %v3431 = vrot.slane %v3327, 5
      %v3432 = vrot.slane %v3431, 4
      %v3433 = vrot.slane %v3328, 5
      %v3434 = vsel %vm1328, %v3432, %v3433
      %v3435 = vrot.slane %v3433, 4
      %v3436 = vrot.slane %v3329, 5
      %v3437 = vsel %vm1328, %v3435, %v3436
      %v3438 = vrot.slane %v3330, 5
      %v3439 = vrot.slane %v3438, 4
      %v3440 = vrot.slane %v3331, 5
      %v3441 = vsel %vm1328, %v3439, %v3440
      %v3442 = vrot.slane %v3440, 4
      %v3443 = vrot.slane %v3332, 5
      %v3444 = vsel %vm1328, %v3442, %v3443
      %v3445 = vrot.slane %v3333, 5
      %v3446 = vrot.slane %v3445, 4
      %v3447 = vrot.slane %v3334, 5
      %v3448 = vsel %vm1328, %v3446, %v3447
      %v3449 = vrot.slane %v3447, 4
      %v3450 = vrot.slane %v3335, 5
      %v3451 = vsel %vm1328, %v3449, %v3450
      %v3452 = vrot.slane %v3336, 5
      %v3453 = vrot.slane %v3452, 4
      %v3454 = vrot.slane %v3337, 5
      %v3455 = vsel %vm1328, %v3453, %v3454
      %v3456 = vrot.slane %v3454, 4
      %v3457 = vrot.slane %v3338, 5
      %v3458 = vsel %vm1328, %v3456, %v3457
      %v3459 = vrot.slane %v3339, 5
      %v3460 = vrot.slane %v3459, 4
      %v3461 = vrot.slane %v3340, 5
      %v3462 = vsel %vm1328, %v3460, %v3461
      %v3463 = vrot.slane %v3461, 4
      %v3464 = vrot.slane %v3341, 5
      %v3465 = vsel %vm1328, %v3463, %v3464
      %v3466 = vrot.slane %v3342, 5
      %v3467 = vrot.slane %v3466, 4
      %v3468 = vrot.slane %v3343, 5
      %v3469 = vsel %vm1328, %v3467, %v3468
      %v3470 = vrot.slane %v3468, 4
      %v3471 = vrot.slane %v3344, 5
      %v3472 = vsel %vm1328, %v3470, %v3471
      %v3473 = vrot.slane %v3345, 5
      %v3474 = vrot.slane %v3473, 4
      %v3475 = vrot.slane %v3346, 5
      %v3476 = vsel %vm1328, %v3474, %v3475
      %v3477 = vrot.slane %v3475, 4
      %v3478 = vrot.slane %v3347, 5
      %v3479 = vsel %vm1328, %v3477, %v3478
      %v3480 = vrot.slane %v3348, 5
      %v3481 = vrot.slane %v3480, 4
      %v3482 = vrot.slane %v3349, 5
      %v3483 = vsel %vm1328, %v3481, %v3482
      %v3484 = vrot.slane %v3482, 4
      %v3485 = vrot.slane %v3350, 5
      %v3486 = vsel %vm1328, %v3484, %v3485
      %v3487 = vrot.slane %v3351, 5
      %v3488 = vrot.slane %v3487, 4
      %v3489 = vrot.slane %v3352, 5
      %v3490 = vsel %vm1328, %v3488, %v3489
      %v3491 = vrot.slane %v3489, 4
      %v3492 = vrot.slane %v3353, 5
      %v3493 = vsel %vm1328, %v3491, %v3492
      %v3494 = vrot.slane %v3354, 5
      %v3495 = vrot.slane %v3494, 4
      %v3496 = vrot.slane %v3355, 5
      %v3497 = vsel %vm1328, %v3495, %v3496
      %v3498 = vrot.slane %v3496, 4
      %v3499 = vrot.slane %v3356, 5
      %v3500 = vsel %vm1328, %v3498, %v3499
      %v3501 = vrot.slane %v3357, 5
      %v3502 = vrot.slane %v3501, 4
      %v3503 = vrot.slane %v3358, 5
      %v3504 = vsel %vm1328, %v3502, %v3503
      %v3505 = vrot.slane %v3503, 4
      %v3506 = vrot.slane %v3359, 5
      %v3507 = vsel %vm1328, %v3505, %v3506
      %v3508 = vrot.slane %v3360, 5
      %v3509 = vrot.slane %v3508, 4
      %v3510 = vrot.slane %v3361, 5
      %v3511 = vsel %vm1328, %v3509, %v3510
      %v3512 = vrot.slane %v3510, 4
      %v3513 = vrot.slane %v3362, 5
      %v3514 = vsel %vm1328, %v3512, %v3513
      %v3515 = vrot.slane %v3363, 5
      %v3516 = vrot.slane %v3515, 4
      %v3517 = vrot.slane %v3364, 5
      %v3518 = vsel %vm1328, %v3516, %v3517
      %v3519 = vrot.slane %v3517, 4
      %v3520 = vrot.slane %v3365, 5
      %v3521 = vsel %vm1328, %v3519, %v3520
      %v3522 = vrot.slane %v3366, 5
      %v3523 = vrot.slane %v3522, 4
      %v3524 = vrot.slane %v3367, 5
      %v3525 = vsel %vm1328, %v3523, %v3524
      %v3526 = vrot.slane %v3524, 4
      %v3527 = vrot.slane %v3368, 5
      %v3528 = vsel %vm1328, %v3526, %v3527
      %v3529 = vunpack.c.l.b16 %v3420
      %v3530 = vunpack.c.l.b16 %v3423
      %v3531 = vunpack.c.l.b16 %v3427
      %v3532 = vunpack.c.l.b16 %v3430
      %v3533 = vunpack.c.l.b16 %v3434
      %v3534 = vunpack.c.l.b16 %v3437
      %v3535 = vunpack.c.l.b16 %v3441
      %v3536 = vunpack.c.l.b16 %v3444
      %v3537 = vunpack.c.l.b16 %v3448
      %v3538 = vunpack.c.l.b16 %v3451
      %v3539 = vunpack.c.l.b16 %v3455
      %v3540 = vunpack.c.l.b16 %v3458
      %v3541 = vunpack.c.l.b16 %v3462
      %v3542 = vunpack.c.l.b16 %v3465
      %v3543 = vunpack.c.l.b16 %v3469
      %v3544 = vunpack.c.l.b16 %v3472
      %v3545 = vunpack.c.l.b16 %v3476
      %v3546 = vunpack.c.l.b16 %v3479
      %v3547 = vunpack.c.l.b16 %v3483
      %v3548 = vunpack.c.l.b16 %v3486
      %v3549 = vunpack.c.l.b16 %v3490
      %v3550 = vunpack.c.l.b16 %v3493
      %v3551 = vunpack.c.l.b16 %v3497
      %v3552 = vunpack.c.l.b16 %v3500
      %v3553 = vunpack.c.l.b16 %v3504
      %v3554 = vunpack.c.l.b16 %v3507
      %v3555 = vunpack.c.l.b16 %v3511
      %v3556 = vunpack.c.l.b16 %v3514
      %v3557 = vunpack.c.l.b16 %v3518
      %v3558 = vunpack.c.l.b16 %v3521
      %v3559 = vunpack.c.l.b16 %v3525
      %v3560 = vunpack.c.l.b16 %v3528
      %v3561 = vpack.c.b16 %v3530, %v3529
      %v3562 = vpack.c.b16 %v3532, %v3531
      %v3563 = vpack.c.b16 %v3534, %v3533
      %v3564 = vpack.c.b16 %v3536, %v3535
      %v3565 = vpack.c.b16 %v3538, %v3537
      %v3566 = vpack.c.b16 %v3540, %v3539
      %v3567 = vpack.c.b16 %v3542, %v3541
      %v3568 = vpack.c.b16 %v3544, %v3543
      %v3569 = vpack.c.b16 %v3546, %v3545
      %v3570 = vpack.c.b16 %v3548, %v3547
      %v3571 = vpack.c.b16 %v3550, %v3549
      %v3572 = vpack.c.b16 %v3552, %v3551
      %v3573 = vpack.c.b16 %v3554, %v3553
      %v3574 = vpack.c.b16 %v3556, %v3555
      %v3575 = vpack.c.b16 %v3558, %v3557
      %v3576 = vpack.c.b16 %v3560, %v3559
      %3577 = vrot.lane.b32.xlu0 %v3561, 32
      %v3578 = vpop.permute.xlu0 %3577
      %3579 = vrot.lane.b32.xlu0 %v3562, 32
      %v3580 = vpop.permute.xlu0 %3579
      %3581 = vrot.lane.b32.xlu0 %v3563, 32
      %v3582 = vpop.permute.xlu0 %3581
      %3583 = vrot.lane.b32.xlu0 %v3564, 32
      %v3584 = vpop.permute.xlu0 %3583
      %3585 = vrot.lane.b32.xlu0 %v3565, 32
      %v3586 = vpop.permute.xlu0 %3585
      %3587 = vrot.lane.b32.xlu0 %v3566, 32
      %v3588 = vpop.permute.xlu0 %3587
      %3589 = vrot.lane.b32.xlu0 %v3567, 32
      %v3590 = vpop.permute.xlu0 %3589
      %3591 = vrot.lane.b32.xlu0 %v3568, 32
      %v3592 = vpop.permute.xlu0 %3591
      %3593 = vrot.lane.b32.xlu0 %v3569, 32
      %v3594 = vpop.permute.xlu0 %3593
      %3595 = vrot.lane.b32.xlu0 %v3570, 32
      %v3596 = vpop.permute.xlu0 %3595
      %3597 = vrot.lane.b32.xlu0 %v3571, 32
      %v3598 = vpop.permute.xlu0 %3597
      %3599 = vrot.lane.b32.xlu0 %v3572, 32
      %v3600 = vpop.permute.xlu0 %3599
      %3601 = vrot.lane.b32.xlu0 %v3573, 32
      %v3602 = vpop.permute.xlu0 %3601
      %3603 = vrot.lane.b32.xlu0 %v3574, 32
      %v3604 = vpop.permute.xlu0 %3603
      %3605 = vrot.lane.b32.xlu0 %v3575, 32
      %v3606 = vpop.permute.xlu0 %3605
      %3607 = vrot.lane.b32.xlu0 %v3576, 32
      %v3608 = vpop.permute.xlu0 %3607
      %vm3625 = vcmask 294144
      %3626 = vst.msk [vmem:[#allocation3] sm:$0xff] %vm3625, %v3578
      %3627 = vst.msk [vmem:[#allocation3 + $0x8] sm:$0xff] %vm3625, %v3580
      %3628 = vst.msk [vmem:[#allocation3 + $0x10] sm:$0xff] %vm3625, %v3582
      %3629 = vst.msk [vmem:[#allocation3 + $0x18] sm:$0xff] %vm3625, %v3584
      %3630 = vst.msk [vmem:[#allocation3 + $0x20] sm:$0xff] %vm3625, %v3586
      %3631 = vst.msk [vmem:[#allocation3 + $0x28] sm:$0xff] %vm3625, %v3588
      %3632 = vst.msk [vmem:[#allocation3 + $0x30] sm:$0xff] %vm3625, %v3590
      %3633 = vst.msk [vmem:[#allocation3 + $0x38] sm:$0xff] %vm3625, %v3592
      %3634 = vst.msk [vmem:[#allocation3 + $0x40] sm:$0xff] %vm3625, %v3594
      %3635 = vst.msk [vmem:[#allocation3 + $0x48] sm:$0xff] %vm3625, %v3596
      %3636 = vst.msk [vmem:[#allocation3 + $0x50] sm:$0xff] %vm3625, %v3598
      %3637 = vst.msk [vmem:[#allocation3 + $0x58] sm:$0xff] %vm3625, %v3600
      %3638 = vst.msk [vmem:[#allocation3 + $0x60] sm:$0xff] %vm3625, %v3602
      %3639 = vst.msk [vmem:[#allocation3 + $0x68] sm:$0xff] %vm3625, %v3604
      %3640 = vst.msk [vmem:[#allocation3 + $0x70] sm:$0xff] %vm3625, %v3606
      %3641 = vst.msk [vmem:[#allocation3 + $0x78] sm:$0xff] %vm3625, %v3608
      %v3642 = vld [vmem:[#allocation3] sm:$0xff]
      %v3643 = vld [vmem:[#allocation3 + $0x8] sm:$0xff]
      %v3644 = vld [vmem:[#allocation3 + $0x10] sm:$0xff]
      %v3645 = vld [vmem:[#allocation3 + $0x18] sm:$0xff]
      %v3646 = vld [vmem:[#allocation3 + $0x20] sm:$0xff]
      %v3647 = vld [vmem:[#allocation3 + $0x28] sm:$0xff]
      %v3648 = vld [vmem:[#allocation3 + $0x30] sm:$0xff]
      %v3649 = vld [vmem:[#allocation3 + $0x38] sm:$0xff]
      %v3650 = vld [vmem:[#allocation3 + $0x40] sm:$0xff]
      %v3651 = vld [vmem:[#allocation3 + $0x48] sm:$0xff]
      %v3652 = vld [vmem:[#allocation3 + $0x50] sm:$0xff]
      %v3653 = vld [vmem:[#allocation3 + $0x58] sm:$0xff]
      %v3654 = vld [vmem:[#allocation3 + $0x60] sm:$0xff]
      %v3655 = vld [vmem:[#allocation3 + $0x68] sm:$0xff]
      %v3656 = vld [vmem:[#allocation3 + $0x70] sm:$0xff]
      %v3657 = vld [vmem:[#allocation3 + $0x78] sm:$0xff]
      %v3658 = vld [vmem:[%s3] sm:$0xf]
      %v3659 = vld [vmem:[%s3 + $0x4] sm:$0xf]
      %v3660 = vld [vmem:[%s3 + $0x8] sm:$0xf]
      %v3661 = vld [vmem:[%s3 + $0xc] sm:$0xf]
      %v3662 = vld [vmem:[%s3 + $0x10] sm:$0x3]
      %v3668 = vunpack.c.l.b16 %v3658
      %v3669 = vunpack.c.l.b16 %v3659
      %v3670 = vunpack.c.l.b16 %v3660
      %v3671 = vunpack.c.l.b16 %v3661
      %v3672 = vunpack.c.l.b16 %v3662
      %v3673 = vpack.c.b16 %v3669, %v3668
      %v3674 = vpack.c.b16 %v3671, %v3670
      %v3675 = vpack.c.b16 %v3672, %v3672
      %vm3678 = vcmask 293888
      %v3680 = vsel %vm3678, %v3642, 0
      %v3683 = vsel %vm3678, %v3643, 0
      %v3686 = vsel %vm3678, %v3644, 0
      %v3689 = vsel %vm3678, %v3645, 0
      %v3692 = vsel %vm3678, %v3646, 0
      %v3695 = vsel %vm3678, %v3647, 0
      %v3698 = vsel %vm3678, %v3648, 0
      %v3701 = vsel %vm3678, %v3649, 0
      %v3704 = vsel %vm3678, %v3650, 0
      %v3707 = vsel %vm3678, %v3651, 0
      %v3710 = vsel %vm3678, %v3652, 0
      %v3713 = vsel %vm3678, %v3653, 0
      %v3716 = vsel %vm3678, %v3654, 0
      %v3719 = vsel %vm3678, %v3655, 0
      %v3722 = vsel %vm3678, %v3656, 0
      %v3725 = vsel %vm3678, %v3657, 0
      %vm3727 = vcmask 1041408
      %v3729 = vsel %vm3727, %v3675, 0
      %3731 = vmatprep.subr.bf16.mxu0 0
      %3732 = vmatpush1.bf16.msra.mxu0 %v3673
      %3733 = vmatprep.subr.bf16.mxu0 0
      %3734 = vmatpush1.bf16.msra.mxu0 %v3674
      %3735 = vmatprep.subr.bf16.mxu0 0
      %3736 = vmatpush1.bf16.msra.mxu0 %v3729
      %3737 = vmatprep.subr.bf16.mxu0 0
      %3738 = vmatpush1.bf16.msra.mxu0 0
      %3739 = vmatprep.subr.bf16.mxu0 0
      %3740 = vmatpush1.bf16.msra.mxu0 0
      %3741 = vmatprep.subr.bf16.mxu0 0
      %3742 = vmatpush1.bf16.msra.mxu0 0
      %3743 = vmatprep.subr.bf16.mxu0 0
      %3744 = vmatpush1.bf16.msra.mxu0 0
      %3745 = vmatprep.subr.bf16.mxu0 0
      %3746 = vmatpush1.bf16.msra.mxu0 0
      %3747 = vmatprep.subr.bf16.mxu0 0
      %3748 = vmatpush1.bf16.msra.mxu0 0
      %3749 = vmatprep.subr.bf16.mxu0 0
      %3750 = vmatpush1.bf16.msra.mxu0 0
      %3751 = vmatprep.subr.bf16.mxu0 0
      %3752 = vmatpush1.bf16.msra.mxu0 0
      %3753 = vmatprep.subr.bf16.mxu0 0
      %3754 = vmatpush1.bf16.msra.mxu0 0
      %3755 = vmatprep.subr.bf16.mxu0 0
      %3756 = vmatpush1.bf16.msra.mxu0 0
      %3757 = vmatprep.subr.bf16.mxu0 0
      %3758 = vmatpush1.bf16.msra.mxu0 0
      %3759 = vmatprep.subr.bf16.mxu0 0
      %3760 = vmatpush1.bf16.msra.mxu0 0
      %3761 = vmatprep.subr.bf16.mxu0 0
      %3762 = vmatpush1.bf16.msra.mxu0 0
      %3763 = vmatprep.mubr.bf16.mxu0 0
      %3764 = vmatmul.mubr.bf16.gmra.mrb[0].mxu0 %v3680
      %v3765 = vpop.f32.mrb[0].mxu0
      %v3766 = vadd.f32 0.0, %v3765
      %v3767 = vpop.f32.mrb[0].mxu0
      %v3768 = vpop.f32.mrb[0].mxu0
      %v3769 = vadd.f32 0.0, %v3768
      %v3770 = vpop.f32.mrb[0].mxu0
      %3771 = vmatprep.mubr.bf16.mxu0 0
      %3772 = vmatmul.mubr.bf16.gmra.mrb[0].mxu0 %v3683
      %v3773 = vpop.f32.mrb[0].mxu0
      %v3774 = vadd.f32 0.0, %v3773
      %v3775 = vpop.f32.mrb[0].mxu0
      %v3776 = vpop.f32.mrb[0].mxu0
      %v3777 = vadd.f32 0.0, %v3776
      %v3778 = vpop.f32.mrb[0].mxu0
      %3779 = vmatprep.mubr.bf16.mxu0 0
      %3780 = vmatmul.mubr.bf16.gmra.mrb[0].mxu0 %v3686
      %v3781 = vpop.f32.mrb[0].mxu0
      %v3782 = vadd.f32 0.0, %v3781
      %v3783 = vpop.f32.mrb[0].mxu0
      %v3784 = vpop.f32.mrb[0].mxu0
      %v3785 = vadd.f32 0.0, %v3784
      %v3786 = vpop.f32.mrb[0].mxu0
      %3787 = vmatprep.mubr.bf16.mxu0 0
      %3788 = vmatmul.mubr.bf16.gmra.mrb[0].mxu0 %v3689
      %v3789 = vpop.f32.mrb[0].mxu0
      %v3790 = vadd.f32 0.0, %v3789
      %v3791 = vpop.f32.mrb[0].mxu0
      %v3792 = vpop.f32.mrb[0].mxu0
      %v3793 = vadd.f32 0.0, %v3792
      %v3794 = vpop.f32.mrb[0].mxu0
      %3795 = vmatprep.mubr.bf16.mxu0 0
      %3796 = vmatmul.mubr.bf16.gmra.mrb[0].mxu0 %v3692
      %v3797 = vpop.f32.mrb[0].mxu0
      %v3798 = vadd.f32 0.0, %v3797
      %v3799 = vpop.f32.mrb[0].mxu0
      %v3800 = vpop.f32.mrb[0].mxu0
      %v3801 = vadd.f32 0.0, %v3800
      %v3802 = vpop.f32.mrb[0].mxu0
      %3803 = vmatprep.mubr.bf16.mxu0 0
      %3804 = vmatmul.mubr.bf16.gmra.mrb[0].mxu0 %v3695
      %v3805 = vpop.f32.mrb[0].mxu0
      %v3806 = vadd.f32 0.0, %v3805
      %v3807 = vpop.f32.mrb[0].mxu0
      %v3808 = vpop.f32.mrb[0].mxu0
      %v3809 = vadd.f32 0.0, %v3808
      %v3810 = vpop.f32.mrb[0].mxu0
      %3811 = vmatprep.mubr.bf16.mxu0 0
      %3812 = vmatmul.mubr.bf16.gmra.mrb[0].mxu0 %v3698
      %v3813 = vpop.f32.mrb[0].mxu0
      %v3814 = vadd.f32 0.0, %v3813
      %v3815 = vpop.f32.mrb[0].mxu0
      %v3816 = vpop.f32.mrb[0].mxu0
      %v3817 = vadd.f32 0.0, %v3816
      %v3818 = vpop.f32.mrb[0].mxu0
      %3819 = vmatprep.mubr.bf16.mxu0 0
      %3820 = vmatmul.mubr.bf16.gmra.mrb[0].mxu0 %v3701
      %v3821 = vpop.f32.mrb[0].mxu0
      %v3822 = vadd.f32 0.0, %v3821
      %v3823 = vpop.f32.mrb[0].mxu0
      %v3824 = vpop.f32.mrb[0].mxu0
      %v3825 = vadd.f32 0.0, %v3824
      %v3826 = vpop.f32.mrb[0].mxu0
      %3827 = vmatprep.mubr.bf16.mxu0 0
      %3828 = vmatmul.mubr.bf16.gmra.mrb[0].mxu0 %v3704
      %v3829 = vpop.f32.mrb[0].mxu0
      %v3830 = vadd.f32 0.0, %v3829
      %v3831 = vpop.f32.mrb[0].mxu0
      %v3832 = vpop.f32.mrb[0].mxu0
      %v3833 = vadd.f32 0.0, %v3832
      %v3834 = vpop.f32.mrb[0].mxu0
      %3835 = vmatprep.mubr.bf16.mxu0 0
      %3836 = vmatmul.mubr.bf16.gmra.mrb[0].mxu0 %v3707
      %v3837 = vpop.f32.mrb[0].mxu0
      %v3838 = vadd.f32 0.0, %v3837
      %v3839 = vpop.f32.mrb[0].mxu0
      %v3840 = vpop.f32.mrb[0].mxu0
      %v3841 = vadd.f32 0.0, %v3840
      %v3842 = vpop.f32.mrb[0].mxu0
      %3843 = vmatprep.mubr.bf16.mxu0 0
      %3844 = vmatmul.mubr.bf16.gmra.mrb[0].mxu0 %v3710
      %v3845 = vpop.f32.mrb[0].mxu0
      %v3846 = vadd.f32 0.0, %v3845
      %v3847 = vpop.f32.mrb[0].mxu0
      %v3848 = vpop.f32.mrb[0].mxu0
      %v3849 = vadd.f32 0.0, %v3848
      %v3850 = vpop.f32.mrb[0].mxu0
      %3851 = vmatprep.mubr.bf16.mxu0 0
      %3852 = vmatmul.mubr.bf16.gmra.mrb[0].mxu0 %v3713
      %v3853 = vpop.f32.mrb[0].mxu0
      %v3854 = vadd.f32 0.0, %v3853
      %v3855 = vpop.f32.mrb[0].mxu0
      %v3856 = vpop.f32.mrb[0].mxu0
      %v3857 = vadd.f32 0.0, %v3856
      %v3858 = vpop.f32.mrb[0].mxu0
      %3859 = vmatprep.mubr.bf16.mxu0 0
      %3860 = vmatmul.mubr.bf16.gmra.mrb[0].mxu0 %v3716
      %v3861 = vpop.f32.mrb[0].mxu0
      %v3862 = vadd.f32 0.0, %v3861
      %v3863 = vpop.f32.mrb[0].mxu0
      %v3864 = vpop.f32.mrb[0].mxu0
      %v3865 = vadd.f32 0.0, %v3864
      %v3866 = vpop.f32.mrb[0].mxu0
      %3867 = vmatprep.mubr.bf16.mxu0 0
      %3868 = vmatmul.mubr.bf16.gmra.mrb[0].mxu0 %v3719
      %v3869 = vpop.f32.mrb[0].mxu0
      %v3870 = vadd.f32 0.0, %v3869
      %v3871 = vpop.f32.mrb[0].mxu0
      %v3872 = vpop.f32.mrb[0].mxu0
      %v3873 = vadd.f32 0.0, %v3872
      %v3874 = vpop.f32.mrb[0].mxu0
      %3875 = vmatprep.mubr.bf16.mxu0 0
      %3876 = vmatmul.mubr.bf16.gmra.mrb[0].mxu0 %v3722
      %v3877 = vpop.f32.mrb[0].mxu0
      %v3878 = vadd.f32 0.0, %v3877
      %v3879 = vpop.f32.mrb[0].mxu0
      %v3880 = vpop.f32.mrb[0].mxu0
      %v3881 = vadd.f32 0.0, %v3880
      %v3882 = vpop.f32.mrb[0].mxu0
      %3883 = vmatprep.mubr.bf16.mxu0 0
      %3884 = vmatmul.mubr.bf16.gmra.mrb[0].mxu0 %v3725
      %v3885 = vpop.f32.mrb[0].mxu0
      %v3886 = vadd.f32 0.0, %v3885
      %v3887 = vpop.f32.mrb[0].mxu0
      %v3888 = vpop.f32.mrb[0].mxu0
      %v3889 = vadd.f32 0.0, %v3888
      %v3890 = vpop.f32.mrb[0].mxu0
      %3891 = vdwg.mxu0
      %v3892 = vld [vmem:[%s4] sm:$0x1]
      %v3894 = vlaneseq
      %v3895 = vshrl.u32 %v3894, 7
      %v3896 = vsub.s32 0, %v3895
      %v3897 = vrot.slane %v3892, %v3896
      %v3899 = vmul.f32 %v3766, %v3897
      %v3900 = vmul.f32 %v3769, %v3897
      %v3901 = vmul.f32 %v3774, %v3897
      %v3902 = vmul.f32 %v3777, %v3897
      %v3903 = vmul.f32 %v3782, %v3897
      %v3904 = vmul.f32 %v3785, %v3897
      %v3905 = vmul.f32 %v3790, %v3897
      %v3906 = vmul.f32 %v3793, %v3897
      %v3907 = vmul.f32 %v3798, %v3897
      %v3908 = vmul.f32 %v3801, %v3897
      %v3909 = vmul.f32 %v3806, %v3897
      %v3910 = vmul.f32 %v3809, %v3897
      %v3911 = vmul.f32 %v3814, %v3897
      %v3912 = vmul.f32 %v3817, %v3897
      %v3913 = vmul.f32 %v3822, %v3897
      %v3914 = vmul.f32 %v3825, %v3897
      %v3915 = vmul.f32 %v3830, %v3897
      %v3916 = vmul.f32 %v3833, %v3897
      %v3917 = vmul.f32 %v3838, %v3897
      %v3918 = vmul.f32 %v3841, %v3897
      %v3919 = vmul.f32 %v3846, %v3897
      %v3920 = vmul.f32 %v3849, %v3897
      %v3921 = vmul.f32 %v3854, %v3897
      %v3922 = vmul.f32 %v3857, %v3897
      %v3923 = vmul.f32 %v3862, %v3897
      %v3924 = vmul.f32 %v3865, %v3897
      %v3925 = vmul.f32 %v3870, %v3897
      %v3926 = vmul.f32 %v3873, %v3897
      %v3927 = vmul.f32 %v3878, %v3897
      %v3928 = vmul.f32 %v3881, %v3897
      %v3929 = vmul.f32 %v3886, %v3897
      %v3930 = vmul.f32 %v3889, %v3897
      %v3931 = vld [vmem:[%s5] sm:$0x1]
      %v3933 = vlaneseq
      %v3934 = vshrl.u32 %v3933, 7
      %v3935 = vsub.s32 0, %v3934
      %v3936 = vrot.slane %v3931, %v3935
      %v3938 = vadd.f32 %v3899, %v3936
      %v3939 = vadd.f32 %v3900, %v3936
      %v3940 = vadd.f32 %v3901, %v3936
      %v3941 = vadd.f32 %v3902, %v3936
      %v3942 = vadd.f32 %v3903, %v3936
      %v3943 = vadd.f32 %v3904, %v3936
      %v3944 = vadd.f32 %v3905, %v3936
      %v3945 = vadd.f32 %v3906, %v3936
      %v3946 = vadd.f32 %v3907, %v3936
      %v3947 = vadd.f32 %v3908, %v3936
      %v3948 = vadd.f32 %v3909, %v3936
      %v3949 = vadd.f32 %v3910, %v3936
      %v3950 = vadd.f32 %v3911, %v3936
      %v3951 = vadd.f32 %v3912, %v3936
      %v3952 = vadd.f32 %v3913, %v3936
      %v3953 = vadd.f32 %v3914, %v3936
      %v3954 = vadd.f32 %v3915, %v3936
      %v3955 = vadd.f32 %v3916, %v3936
      %v3956 = vadd.f32 %v3917, %v3936
      %v3957 = vadd.f32 %v3918, %v3936
      %v3958 = vadd.f32 %v3919, %v3936
      %v3959 = vadd.f32 %v3920, %v3936
      %v3960 = vadd.f32 %v3921, %v3936
      %v3961 = vadd.f32 %v3922, %v3936
      %v3962 = vadd.f32 %v3923, %v3936
      %v3963 = vadd.f32 %v3924, %v3936
      %v3964 = vadd.f32 %v3925, %v3936
      %v3965 = vadd.f32 %v3926, %v3936
      %v3966 = vadd.f32 %v3927, %v3936
      %v3967 = vadd.f32 %v3928, %v3936
      %v3968 = vadd.f32 %v3929, %v3936
      %v3969 = vadd.f32 %v3930, %v3936
      %v3970 = vmax.f32 %v3938, 0.0
      %v3971 = vmax.f32 %v3939, 0.0
      %v3972 = vmax.f32 %v3940, 0.0
      %v3973 = vmax.f32 %v3941, 0.0
      %v3974 = vmax.f32 %v3942, 0.0
      %v3975 = vmax.f32 %v3943, 0.0
      %v3976 = vmax.f32 %v3944, 0.0
      %v3977 = vmax.f32 %v3945, 0.0
      %v3978 = vmax.f32 %v3946, 0.0
      %v3979 = vmax.f32 %v3947, 0.0
      %v3980 = vmax.f32 %v3948, 0.0
      %v3981 = vmax.f32 %v3949, 0.0
      %v3982 = vmax.f32 %v3950, 0.0
      %v3983 = vmax.f32 %v3951, 0.0
      %v3984 = vmax.f32 %v3952, 0.0
      %v3985 = vmax.f32 %v3953, 0.0
      %v3986 = vmax.f32 %v3954, 0.0
      %v3987 = vmax.f32 %v3955, 0.0
      %v3988 = vmax.f32 %v3956, 0.0
      %v3989 = vmax.f32 %v3957, 0.0
      %v3990 = vmax.f32 %v3958, 0.0
      %v3991 = vmax.f32 %v3959, 0.0
      %v3992 = vmax.f32 %v3960, 0.0
      %v3993 = vmax.f32 %v3961, 0.0
      %v3994 = vmax.f32 %v3962, 0.0
      %v3995 = vmax.f32 %v3963, 0.0
      %v3996 = vmax.f32 %v3964, 0.0
      %v3997 = vmax.f32 %v3965, 0.0
      %v3998 = vmax.f32 %v3966, 0.0
      %v3999 = vmax.f32 %v3967, 0.0
      %v4000 = vmax.f32 %v3968, 0.0
      %v4001 = vmax.f32 %v3969, 0.0
      %v4002 = vpack.c.bf16 %v3971, %v3970
      %v4003 = vpack.c.bf16 %v3973, %v3972
      %v4004 = vpack.c.bf16 %v3975, %v3974
      %v4005 = vpack.c.bf16 %v3977, %v3976
      %v4006 = vpack.c.bf16 %v3979, %v3978
      %v4007 = vpack.c.bf16 %v3981, %v3980
      %v4008 = vpack.c.bf16 %v3983, %v3982
      %v4009 = vpack.c.bf16 %v3985, %v3984
      %v4010 = vpack.c.bf16 %v3987, %v3986
      %v4011 = vpack.c.bf16 %v3989, %v3988
      %v4012 = vpack.c.bf16 %v3991, %v3990
      %v4013 = vpack.c.bf16 %v3993, %v3992
      %v4014 = vpack.c.bf16 %v3995, %v3994
      %v4015 = vpack.c.bf16 %v3997, %v3996
      %v4016 = vpack.c.bf16 %v3999, %v3998
      %v4017 = vpack.c.bf16 %v4001, %v4000
      %v4034 = vunpack.c.l.b16 %v4002
      %v4035 = vunpack.c.h.b16 %v4002
      %v4036 = vunpack.c.l.b16 %v4003
      %v4037 = vunpack.c.h.b16 %v4003
      %v4038 = vunpack.c.l.b16 %v4004
      %v4039 = vunpack.c.h.b16 %v4004
      %v4040 = vunpack.c.l.b16 %v4005
      %v4041 = vunpack.c.h.b16 %v4005
      %v4042 = vunpack.c.l.b16 %v4006
      %v4043 = vunpack.c.h.b16 %v4006
      %v4044 = vunpack.c.l.b16 %v4007
      %v4045 = vunpack.c.h.b16 %v4007
      %v4046 = vunpack.c.l.b16 %v4008
      %v4047 = vunpack.c.h.b16 %v4008
      %v4048 = vunpack.c.l.b16 %v4009
      %v4049 = vunpack.c.h.b16 %v4009
      %v4050 = vunpack.c.l.b16 %v4010
      %v4051 = vunpack.c.h.b16 %v4010
      %v4052 = vunpack.c.l.b16 %v4011
      %v4053 = vunpack.c.h.b16 %v4011
      %v4054 = vunpack.c.l.b16 %v4012
      %v4055 = vunpack.c.h.b16 %v4012
      %v4056 = vunpack.c.l.b16 %v4013
      %v4057 = vunpack.c.h.b16 %v4013
      %v4058 = vunpack.c.l.b16 %v4014
      %v4059 = vunpack.c.h.b16 %v4014
      %v4060 = vunpack.c.l.b16 %v4015
      %v4061 = vunpack.c.h.b16 %v4015
      %v4062 = vunpack.c.l.b16 %v4016
      %v4063 = vunpack.c.h.b16 %v4016
      %v4064 = vunpack.c.l.b16 %v4017
      %v4065 = vunpack.c.h.b16 %v4017
      %v4066 = vpack.c.b16 %v4034, %v4034
      %v4067 = vpack.c.b16 %v4035, %v4035
      %v4068 = vpack.c.b16 %v4036, %v4036
      %v4069 = vpack.c.b16 %v4037, %v4037
      %v4070 = vpack.c.b16 %v4038, %v4038
      %v4071 = vpack.c.b16 %v4039, %v4039
      %v4072 = vpack.c.b16 %v4040, %v4040
      %v4073 = vpack.c.b16 %v4041, %v4041
      %v4074 = vpack.c.b16 %v4042, %v4042
      %v4075 = vpack.c.b16 %v4043, %v4043
      %v4076 = vpack.c.b16 %v4044, %v4044
      %v4077 = vpack.c.b16 %v4045, %v4045
      %v4078 = vpack.c.b16 %v4046, %v4046
      %v4079 = vpack.c.b16 %v4047, %v4047
      %v4080 = vpack.c.b16 %v4048, %v4048
      %v4081 = vpack.c.b16 %v4049, %v4049
      %v4082 = vpack.c.b16 %v4050, %v4050
      %v4083 = vpack.c.b16 %v4051, %v4051
      %v4084 = vpack.c.b16 %v4052, %v4052
      %v4085 = vpack.c.b16 %v4053, %v4053
      %v4086 = vpack.c.b16 %v4054, %v4054
      %v4087 = vpack.c.b16 %v4055, %v4055
      %v4088 = vpack.c.b16 %v4056, %v4056
      %v4089 = vpack.c.b16 %v4057, %v4057
      %v4090 = vpack.c.b16 %v4058, %v4058
      %v4091 = vpack.c.b16 %v4059, %v4059
      %v4092 = vpack.c.b16 %v4060, %v4060
      %v4093 = vpack.c.b16 %v4061, %v4061
      %v4094 = vpack.c.b16 %v4062, %v4062
      %v4095 = vpack.c.b16 %v4063, %v4063
      %v4096 = vpack.c.b16 %v4064, %v4064
      %v4097 = vpack.c.b16 %v4065, %v4065
      %vm4130 = vcmask 60416
      %4131 = vst.msk [vmem:[%s422] sm:$0xf] %vm4130, %v4066
      %4132 = vst.msk [vmem:[%s422 + $0x4] sm:$0xf] %vm4130, %v4067
      %4133 = vst.msk [vmem:[%s422 + $0x8] sm:$0xf] %vm4130, %v4068
      %4134 = vst.msk [vmem:[%s422 + $0xc] sm:$0xf] %vm4130, %v4069
      %4135 = vst.msk [vmem:[%s422 + $0x10] sm:$0xf] %vm4130, %v4070
      %4136 = vst.msk [vmem:[%s422 + $0x14] sm:$0xf] %vm4130, %v4071
      %4137 = vst.msk [vmem:[%s422 + $0x18] sm:$0xf] %vm4130, %v4072
      %4138 = vst.msk [vmem:[%s422 + $0x1c] sm:$0xf] %vm4130, %v4073
      %4139 = vst.msk [vmem:[%s422 + $0x20] sm:$0xf] %vm4130, %v4074
      %4140 = vst.msk [vmem:[%s422 + $0x24] sm:$0xf] %vm4130, %v4075
      %4141 = vst.msk [vmem:[%s422 + $0x28] sm:$0xf] %vm4130, %v4076
      %4142 = vst.msk [vmem:[%s422 + $0x2c] sm:$0xf] %vm4130, %v4077
      %4143 = vst.msk [vmem:[%s422 + $0x30] sm:$0xf] %vm4130, %v4078
      %4144 = vst.msk [vmem:[%s422 + $0x34] sm:$0xf] %vm4130, %v4079
      %4145 = vst.msk [vmem:[%s422 + $0x38] sm:$0xf] %vm4130, %v4080
      %4146 = vst.msk [vmem:[%s422 + $0x3c] sm:$0xf] %vm4130, %v4081
      %4147 = vst.msk [vmem:[%s422 + $0x40] sm:$0xf] %vm4130, %v4082
      %4148 = vst.msk [vmem:[%s422 + $0x44] sm:$0xf] %vm4130, %v4083
      %4149 = vst.msk [vmem:[%s422 + $0x48] sm:$0xf] %vm4130, %v4084
      %4150 = vst.msk [vmem:[%s422 + $0x4c] sm:$0xf] %vm4130, %v4085
      %4151 = vst.msk [vmem:[%s422 + $0x50] sm:$0xf] %vm4130, %v4086
      %4152 = vst.msk [vmem:[%s422 + $0x54] sm:$0xf] %vm4130, %v4087
      %4153 = vst.msk [vmem:[%s422 + $0x58] sm:$0xf] %vm4130, %v4088
      %4154 = vst.msk [vmem:[%s422 + $0x5c] sm:$0xf] %vm4130, %v4089
      %4155 = vst.msk [vmem:[%s422 + $0x60] sm:$0xf] %vm4130, %v4090
      %4156 = vst.msk [vmem:[%s422 + $0x64] sm:$0xf] %vm4130, %v4091
      %4157 = vst.msk [vmem:[%s422 + $0x68] sm:$0xf] %vm4130, %v4092
      %4158 = vst.msk [vmem:[%s422 + $0x6c] sm:$0xf] %vm4130, %v4093
      %4159 = vst.msk [vmem:[%s422 + $0x70] sm:$0xf] %vm4130, %v4094
      %4160 = vst.msk [vmem:[%s422 + $0x74] sm:$0xf] %vm4130, %v4095
      %4161 = vst.msk [vmem:[%s422 + $0x78] sm:$0xf] %vm4130, %v4096
      %4162 = vst.msk [vmem:[%s422 + $0x7c] sm:$0xf] %vm4130, %v4097
      %s4163 = smul.u32 16, %s22
      %p4164 = scmp.lt.s32.totalorder %s21, 1
      %s4165 = scalar_select %p4164, %s21, 1
      %p4166 = scmp.lt.s32.totalorder %s4163, 15
      %s4167 = scalar_select %p4166, %s4163, 15
      %s4168 = smul.addr %s4167, 2
      %s4169 = smul.addr %s4165, 32
      %s4170 = sadd.s32 %s4168, %s4169
      %s4171 = smul.addr %s4170, 4
      %s4172 = scalar_lea.vmem %s6, %s4171
      // Predicated region
      $region45: #{tpu_custom_call.1} parent=43 // pred_check
        %p4173 = pneg %p206
      $region46: #{tpu_custom_call.1} parent=43 // pred_check_branch
        %4175 = sbr.rel (%p4173) target = $region48
      $region47: #{tpu_custom_call.1} parent=43 // pred_region
        %s4176 = smul.u32 16, %s22
      $region48: #{tpu_custom_call.1} parent=43 // pred_fallthru
        _
    $region44: #{tpu_custom_call.1} parent=5 // pred_fallthru
      _
    %p4177 = scmp.le.s32.totalorder 2, %s12
    // Predicated region
    $region49: #{tpu_custom_call.1} parent=5 // pred_check
      %p4178 = pneg %p4177
    $region50: #{tpu_custom_call.1} parent=5 // pred_check_branch
      %4180 = sbr.rel (%p4178) target = $region52
    $region51: #{tpu_custom_call.1} parent=5 // pred_region
      %s4181 = ssub.s32 %s12, 2
      // Predicated region
      $region53: #{tpu_custom_call.1} parent=51 // pred_check
        %p4182 = pneg %p212
      $region54: #{tpu_custom_call.1} parent=51 // pred_check_branch
        %4184 = sbr.rel (%p4182) target = $region56
      $region55: #{tpu_custom_call.1} parent=51 // pred_region
        %s4185 = smul.u32 16, %s24
        %p4186 = scmp.lt.s32.totalorder %s23, 1
        %s4187 = scalar_select %p4186, %s23, 1
        %p4188 = scmp.lt.s32.totalorder %s4185, 15
        %s4189 = scalar_select %p4188, %s4185, 15
        %s4190 = smul.addr %s4189, 2
        %s4191 = smul.addr %s4187, 32
        %s4192 = sadd.s32 %s4190, %s4191
        %s4193 = smul.addr %s4192, 4
        %s4194 = scalar_lea.vmem %s6, %s4193
      $region56: #{tpu_custom_call.1} parent=51 // pred_fallthru
        _
    $region52: #{tpu_custom_call.1} parent=5 // pred_fallthru
      _
  $region6: #{tpu_custom_call.1} parent=0 // loop_footer
    %s16 = sadd.s32 1, %s12
  $region7: #{tpu_custom_call.1} parent=0 // loop_footer_branch
    %11 = sbr.rel target = $region3
  $region8: #{tpu_custom_call.1} parent=0 // loop_exit
    _

</llo_original>
